<compile_context>
chip_gen: v7x
topology: tpu7x:2x2x1
jax: 0.10.0
libtpu: 0.0.40
codegen_flags: <defaults>
</compile_context>

<pallas_src>
import jax
import jax.numpy as jnp
from jax import lax
from jax.experimental import pallas as pl
from jax.experimental.pallas import tpu as pltpu

_LANES = 128
_SUBLANES = 8
_SMALL_N = 65536            # below this: fused jnp fast path (no kernel dispatch)
_TILE_BYTES = 1 << 20       # per-input block: 3 inputs x 2 bufs x 1 MiB = 6 MiB VMEM
_LN2 = 0.6931471805599453


def _loss_values_f32(mean, log_sigma, y):
    m = mean.astype(jnp.float32)
    ls = log_sigma.astype(jnp.float32)
    yy = y.astype(jnp.float32)
    d = yy - m
    # (y - m)^2 / (2 * sigma^2) + log_sigma == (y - m)^2 * exp(-2*ls - ln2) + ls
    return d * d * jnp.exp(-2.0 * ls - _LN2) + ls


def _sublane_multiple(dtype):
    # f32 -> 8, bf16 -> 16, int8/fp8 -> 32 (packed sublane layout).
    return max(_SUBLANES, 32 // jnp.dtype(dtype).itemsize)


def _num_tensorcores_per_chip():
    # v7x has 2 TensorCores per chip; v5e/v6e have 1.
    try:
        kind = jax.devices()[0].device_kind.lower()
    except Exception:
        return 1
    return 2 if ("v7" in kind or "tpu7" in kind.replace(" ", "")) else 1


def _make_kernel(total_rows, tile_rows, needs_mask):
    def kernel(mean_ref, log_sigma_ref, y_ref, out_ref):
        # out_ref: (1, 8, 128) block mapped to the same block index for every
        # inner grid step -> VMEM-resident lane-parallel accumulator.
        @pl.when(pl.program_id(1) == 0)
        def _():
            out_ref[...] = jnp.zeros_like(out_ref)

        loss = _loss_values_f32(mean_ref[...], log_sigma_ref[...], y_ref[...])

        if needs_mask:
            # Rows past `total_rows` (partial boundary block / overshoot steps
            # of a chunked ragged grid) contain garbage -> force them to 0.
            block_idx = pl.program_id(0) * pl.num_programs(1) + pl.program_id(1)
            row_start = block_idx * tile_rows
            row_ids = row_start + lax.broadcasted_iota(
                jnp.int32, (tile_rows, _LANES), 0)
            loss = jnp.where(row_ids < total_rows, loss, 0.0)

        # Fold (tile_rows, 128) into a vreg-shaped (8, 128) partial sum:
        # elementwise vreg adds only, no per-step cross-lane reduction.
        partial = loss.reshape(tile_rows // _SUBLANES, _SUBLANES, _LANES).sum(axis=0)
        out_ref[...] += partial.reshape(1, _SUBLANES, _LANES)

    return kernel


def custom_loss(mean, log_sigma, y):
    """Pallas TPU implementation of CustomLoss.forward(mean, log_sigma, y)."""
    assert mean.shape == log_sigma.shape == y.shape
    n = mean.size
    if n == 0:                       # torch .mean() of an empty tensor is NaN
        return jnp.array(jnp.nan, dtype=jnp.float32)
    if n < _SMALL_N:                 # tiny (batch, 1) heads: fused jnp is faster
        return jnp.mean(_loss_values_f32(mean, log_sigma, y))

    flats = [jnp.ravel(mean), jnp.ravel(log_sigma), jnp.ravel(y)]
    n_body = (n // _LANES) * _LANES

    tail_sum = jnp.float32(0.0)
    if n_body < n:
        # <128-element tail in jnp glue; the 128-aligned prefix goes through
        # the kernel.
        # TODO(synk): a manual ragged DMA (memory_space=pl.ANY) would avoid the
        # O(n) prefix-slice copy XLA may materialize when n is not 128-aligned.
        tail_sum = jnp.sum(_loss_values_f32(
            flats[0][n_body:], flats[1][n_body:], flats[2][n_body:]))
        flats = [f[:n_body] for f in flats]

    rows = n_body // _LANES          # >= 512 given _SMALL_N
    arrs = [f.reshape(rows, _LANES) for f in flats]   # contiguous reshape: no copy

    sub = max(_sublane_multiple(a.dtype) for a in arrs)
    itemsize = max(jnp.dtype(a.dtype).itemsize for a in arrs)
    budget_rows = max(sub, (_TILE_BYTES // (_LANES * itemsize)) // sub * sub)
    tile_rows = min(budget_rows, (rows // sub) * sub)
    num_row_blocks = pl.cdiv(rows, tile_rows)

    cores = _num_tensorcores_per_chip()
    num_chunks = cores if (cores > 1 and num_row_blocks >= 4) else 1
    steps_per_chunk = pl.cdiv(num_row_blocks, num_chunks)
    max_block = num_row_blocks - 1
    exact_cover = (num_chunks * steps_per_chunk == num_row_blocks)
    needs_mask = (rows % tile_rows != 0) or (not exact_cover)

    if exact_cover:
        def in_index_map(c, i):
            return (c * steps_per_chunk + i, 0)
    else:
        def in_index_map(c, i):
            # Clamp so overshoot steps never address a block fully outside the
            # array; their contribution is masked to 0 in-kernel.
            return (jnp.minimum(c * steps_per_chunk + i, max_block), 0)

    in_spec = pl.BlockSpec((tile_rows, _LANES), in_index_map)

    semantics = (
        pltpu.CORE_PARALLEL if num_chunks > 1 else pltpu.ARBITRARY,
        pltpu.ARBITRARY,
    )

    cost = pl.CostEstimate(
        flops=8 * n_body,
        transcendentals=n_body,
        bytes_accessed=3 * n_body * itemsize + num_chunks * _SUBLANES * _LANES * 4,
    )

    partials = pl.pallas_call(
        _make_kernel(rows, tile_rows, needs_mask),
        out_shape=jax.ShapeDtypeStruct((num_chunks, _SUBLANES, _LANES), jnp.float32),
        grid_spec=pltpu.PrefetchScalarGridSpec(
            num_scalar_prefetch=0,
            grid=(num_chunks, steps_per_chunk),
            in_specs=[in_spec, in_spec, in_spec],
            out_specs=pl.BlockSpec((1, _SUBLANES, _LANES), lambda c, i: (c, 0, 0)),
        ),
        compiler_params=pltpu.CompilerParams(
            dimension_semantics=semantics,
            vmem_limit_bytes=32 * 1024 * 1024,
        ),
        cost_estimate=cost,
    )(*arrs)

    total = jnp.sum(partials, dtype=jnp.float32) + tail_sum
    return total / jnp.float32(n)


if __name__ == "__main__":
    def _ref(mean, log_sigma, y):
        m = mean.astype(jnp.float32)
        ls = log_sigma.astype(jnp.float32)
        yy = y.astype(jnp.float32)
        sigma = jnp.exp(ls)
        return jnp.mean((yy - m) ** 2 / (2.0 * sigma ** 2) + ls)

    key = jax.random.PRNGKey(0)

    shapes = [
        ((32, 1), jnp.float32),       # MLP.py regression-head shape (fast path)
        ((2048, 128), jnp.float32),   # 128-aligned, zero-copy kernel path
        ((2048, 256), jnp.float32),   # multi-tile accumulation path
        ((1000, 130), jnp.float32),   # ragged rows + <128-element tail path
        ((512, 256), jnp.bfloat16),   # bf16 packed-layout path
    ]

    for shape, dtype in shapes:
        key, k1, k2, k3 = jax.random.split(key, 4)
        mean = jax.random.normal(k1, shape, dtype=jnp.float32).astype(dtype)
        log_sigma = (0.1 * jax.random.normal(k2, shape)).astype(dtype)
        y = jax.random.normal(k3, shape, dtype=jnp.float32).astype(dtype)

        out = jax.block_until_ready(custom_loss(mean, log_sigma, y))
        ref = _ref(mean, log_sigma, y)
        assert jnp.allclose(out, ref, rtol=1e-4, atol=1e-5), (shape, dtype, out, ref)

    print("KERNEL_OK")
</pallas_src>

<mosaic_0001>
module attributes {stable_mosaic.version = 11 : i64} {
  func.func @kernel(%arg0: i32, %arg1: i32, %arg2: memref<2048x128xf32, #tpu.memory_space<vmem>>, %arg3: memref<2048x128xf32, #tpu.memory_space<vmem>>, %arg4: memref<2048x128xf32, #tpu.memory_space<vmem>>, %arg5: memref<1x8x128xf32, #tpu.memory_space<vmem>>) attributes {dimension_semantics = [#tpu.dimension_semantics<arbitrary>, #tpu.dimension_semantics<arbitrary>], iteration_bounds = array<i64: 1, 1>, scalar_prefetch = 0 : i64, scratch_operands = 0 : i64, tpu.core_type = #tpu.core_type<tc>, window_params = [{transform_indices = @transform_0, window_bounds = array<i64: 2048, 128>}, {transform_indices = @transform_1, window_bounds = array<i64: 2048, 128>}, {transform_indices = @transform_2, window_bounds = array<i64: 2048, 128>}, {transform_indices = @transform_3, window_bounds = array<i64: 1, 8, 128>}]} {
    %c0_i32 = arith.constant 0 : i32
    %0 = arith.cmpi eq, %arg1, %c0_i32 : i32
    %1 = arith.extui %0 : i1 to i32
    %c0_i32_0 = arith.constant 0 : i32
    %2 = arith.cmpi ne, %1, %c0_i32_0 : i32
    scf.if %2 {
      %cst_14 = arith.constant 0.000000e+00 : f32
      %21 = vector.broadcast %cst_14 : f32 to vector<1x8x128xf32>
      %c0_15 = arith.constant 0 : index
      %c0_16 = arith.constant 0 : index
      %c0_17 = arith.constant 0 : index
      %22 = vector.load %arg5[%c0_15, %c0_16, %c0_17] : memref<1x8x128xf32, #tpu.memory_space<vmem>>, vector<1x8x128xf32>
      tpu.vector_store %arg5[%c0_15, %c0_16, %c0_17], %21 {strides = array<i32>} : memref<1x8x128xf32, #tpu.memory_space<vmem>>, vector<1x8x128xf32>,
    } else {
    }
    %c0 = arith.constant 0 : index
    %c0_1 = arith.constant 0 : index
    %3 = vector.load %arg2[%c0, %c0_1] : memref<2048x128xf32, #tpu.memory_space<vmem>>, vector<2048x128xf32>
    %c0_2 = arith.constant 0 : index
    %c0_3 = arith.constant 0 : index
    %4 = vector.load %arg3[%c0_2, %c0_3] : memref<2048x128xf32, #tpu.memory_space<vmem>>, vector<2048x128xf32>
    %c0_4 = arith.constant 0 : index
    %c0_5 = arith.constant 0 : index
    %5 = vector.load %arg4[%c0_4, %c0_5] : memref<2048x128xf32, #tpu.memory_space<vmem>>, vector<2048x128xf32>
    %6 = arith.subf %5, %3 : vector<2048x128xf32>
    %7 = arith.mulf %6, %6 : vector<2048x128xf32>
    %cst = arith.constant -2.000000e+00 : f32
    %8 = vector.broadcast %cst : f32 to vector<2048x128xf32>
    %9 = arith.mulf %8, %4 : vector<2048x128xf32>
    %cst_6 = arith.constant 0.693147182 : f32
    %10 = vector.broadcast %cst_6 : f32 to vector<2048x128xf32>
    %11 = arith.subf %9, %10 : vector<2048x128xf32>
    %12 = math.exp %11 : vector<2048x128xf32>
    %13 = arith.mulf %7, %12 : vector<2048x128xf32>
    %14 = arith.addf %13, %4 : vector<2048x128xf32>
    %15 = vector.shape_cast %14 : vector<2048x128xf32> to vector<256x8x128xf32>
    %cst_7 = arith.constant dense<0.000000e+00> : vector<8x128xf32>
    %16 = vector.multi_reduction <add>, %15, %cst_7 [0] : vector<256x8x128xf32> to vector<8x128xf32>
    %c0_8 = arith.constant 0 : index
    %c0_9 = arith.constant 0 : index
    %c0_10 = arith.constant 0 : index
    %17 = vector.load %arg5[%c0_8, %c0_9, %c0_10] : memref<1x8x128xf32, #tpu.memory_space<vmem>>, vector<1x8x128xf32>
    %18 = vector.shape_cast %16 : vector<8x128xf32> to vector<1x8x128xf32>
    %19 = arith.addf %17, %18 : vector<1x8x128xf32>
    %c0_11 = arith.constant 0 : index
    %c0_12 = arith.constant 0 : index
    %c0_13 = arith.constant 0 : index
    %20 = vector.load %arg5[%c0_11, %c0_12, %c0_13] : memref<1x8x128xf32, #tpu.memory_space<vmem>>, vector<1x8x128xf32>
    tpu.vector_store %arg5[%c0_11, %c0_12, %c0_13], %19 {strides = array<i32>} : memref<1x8x128xf32, #tpu.memory_space<vmem>>, vector<1x8x128xf32>,
    return
  }
  func.func @transform_0(%arg0: i32, %arg1: i32) -> (i32, i32) {
    %c1_i32 = arith.constant 1 : i32
    %0 = arith.muli %arg0, %c1_i32 : i32
    %1 = arith.addi %0, %arg1 : i32
    %c0_i32 = arith.constant 0 : i32
    %c0_i32_0 = arith.constant 0 : i32
    return %1, %c0_i32 : i32, i32
  }
  func.func @transform_1(%arg0: i32, %arg1: i32) -> (i32, i32) {
    %c1_i32 = arith.constant 1 : i32
    %0 = arith.muli %arg0, %c1_i32 : i32
    %1 = arith.addi %0, %arg1 : i32
    %c0_i32 = arith.constant 0 : i32
    %c0_i32_0 = arith.constant 0 : i32
    return %1, %c0_i32 : i32, i32
  }
  func.func @transform_2(%arg0: i32, %arg1: i32) -> (i32, i32) {
    %c1_i32 = arith.constant 1 : i32
    %0 = arith.muli %arg0, %c1_i32 : i32
    %1 = arith.addi %0, %arg1 : i32
    %c0_i32 = arith.constant 0 : i32
    %c0_i32_0 = arith.constant 0 : i32
    return %1, %c0_i32 : i32, i32
  }
  func.func @transform_3(%arg0: i32, %arg1: i32) -> (i32, i32, i32) {
    %c0_i32 = arith.constant 0 : i32
    %c0_i32_0 = arith.constant 0 : i32
    %c0_i32_1 = arith.constant 0 : i32
    return %arg0, %c0_i32, %c0_i32_0 : i32, i32, i32
  }
}

</mosaic_0001>

<llo_original>
// kernel: tpu_custom_call.1
$region0: #{tpu_custom_call.1}
  #allocation0 [shape = 'u32[]', space=smem, size = 0x4, offset = 0x4, fixed_abs, tag = 'smem constant byte address 0x4 - core index']
  #allocation1 [shape = 'u32[144,128]{1,0:T(1,128)}', space=vmem, size = 0x12000, scoped, tag = 'internal scratch']
  %s0 = inlined_call_operand.hbm [shape: f32[2048,128], index: 0, kind: input, shape index: {}]
  %s1 = inlined_call_operand.hbm [shape: f32[2048,128], index: 1, kind: input, shape index: {}]
  %s2 = inlined_call_operand.hbm [shape: f32[2048,128], index: 2, kind: input, shape index: {}]
  %s3 = inlined_call_operand.hbm [shape: f32[1,8,128], index: 3, kind: output, shape index: {}]
  %s4 = sld [smem:[#allocation0]]
  $region38: #{tpu_custom_call.1} parent=0
    _
  %s6 = ssub.s32 1, %s4
  %s7 = scalar_select 0, %s6, %s4
  $region1: #{tpu_custom_call.1} parent=0
    #allocation2 [shape = 'u8[1048576]{0}', space=vmem, size = 0x100000, scoped, tag = 'input window, operand 0, single buffered']
    #allocation3 [shape = 's32[1]{0}', space=sflag, size = 0x4, scoped, tag = 'scoped memory for tpu_custom_call.1']
    #allocation4 [shape = 's32[1]{0}', space=sflag, size = 0x4, scoped, tag = 'scoped memory for tpu_custom_call.1']
    #allocation5 [shape = 'u8[1048576]{0}', space=vmem, size = 0x100000, scoped, tag = 'input window, operand 1, single buffered']
    #allocation6 [shape = 's32[1]{0}', space=sflag, size = 0x4, scoped, tag = 'scoped memory for tpu_custom_call.1']
    #allocation7 [shape = 'u8[1048576]{0}', space=vmem, size = 0x100000, scoped, tag = 'input window, operand 2, single buffered']
    #allocation8 [shape = 'u8[4096]{0}', space=vmem, size = 0x1000, scoped, tag = 'output window, operand 0, single buffered']
    %8 = vsyncpa [#allocation3], 0
    %9 = vsyncpa [#allocation6], 0
    %10 = vsyncpa [#allocation4], 0
    // Predicated region
    $region2: #{tpu_custom_call.1} parent=1 // pred_check
      _
    $region3: #{tpu_custom_call.1} parent=1 // pred_check_branch
      %12 = sbr.rel (0) target = $region5
    $region4: #{tpu_custom_call.1} parent=1 // pred_region
      %s13 = sadd.s32 0, 0
      %s14 = smul.u32 256, %s13
      %s16 = ssub.s32 32768, 32768
      %17 = vsyncadd [#allocation3], %s16
      %s18 = smul.addr %s14, 128
      %s19 = scalar_lea.hbm %s0, %s18
      %s20 = sshll.u32 [#allocation2], 4
      %s21 = int_to_ptr.vmem [resolvable:$true] %s20
      %26 = dma.hbm_to_vmem [thread:$0]  %s19, 32768, %s21, [#allocation3], 128, 128, 8
    $region5: #{tpu_custom_call.1} parent=1 // pred_fallthru
      _
    // Predicated region
    $region6: #{tpu_custom_call.1} parent=1 // pred_check
      _
    $region7: #{tpu_custom_call.1} parent=1 // pred_check_branch
      %28 = sbr.rel (0) target = $region9
    $region8: #{tpu_custom_call.1} parent=1 // pred_region
      %s29 = sadd.s32 0, 0
      %s30 = smul.u32 256, %s29
      %s32 = ssub.s32 32768, 32768
      %33 = vsyncadd [#allocation6], %s32
      %s34 = smul.addr %s30, 128
      %s35 = scalar_lea.hbm %s1, %s34
      %s36 = sshll.u32 [#allocation5], 4
      %s37 = int_to_ptr.vmem [resolvable:$true] %s36
      %42 = dma.hbm_to_vmem [thread:$0]  %s35, 32768, %s37, [#allocation6], 128, 128, 8
    $region9: #{tpu_custom_call.1} parent=1 // pred_fallthru
      _
    // Predicated region
    $region10: #{tpu_custom_call.1} parent=1 // pred_check
      _
    $region11: #{tpu_custom_call.1} parent=1 // pred_check_branch
      %44 = sbr.rel (0) target = $region13
    $region12: #{tpu_custom_call.1} parent=1 // pred_region
      %s45 = sadd.s32 0, 0
      %s46 = smul.u32 256, %s45
      %s48 = ssub.s32 32768, 32768
      %49 = vsyncadd [#allocation6], %s48
      %s50 = smul.addr %s46, 128
      %s51 = scalar_lea.hbm %s2, %s50
      %s52 = sshll.u32 [#allocation7], 4
      %s53 = int_to_ptr.vmem [resolvable:$true] %s52
      %58 = dma.hbm_to_vmem [thread:$0]  %s51, 32768, %s53, [#allocation6], 128, 128, 8
    $region13: #{tpu_custom_call.1} parent=1 // pred_fallthru
      _
    // Predicated region
    $region14: #{tpu_custom_call.1} parent=1 // pred_check
      _
    $region15: #{tpu_custom_call.1} parent=1 // pred_check_branch
      %60 = sbr.rel (0) target = $region17
    $region16: #{tpu_custom_call.1} parent=1 // pred_region
      %61 = dma.done [#allocation3], 32768
    $region17: #{tpu_custom_call.1} parent=1 // pred_fallthru
      _
    // Predicated region
    $region18: #{tpu_custom_call.1} parent=1 // pred_check
      _
    $region19: #{tpu_custom_call.1} parent=1 // pred_check_branch
      %63 = sbr.rel (0) target = $region21
    $region20: #{tpu_custom_call.1} parent=1 // pred_region
      %64 = dma.done [#allocation6], 32768
    $region21: #{tpu_custom_call.1} parent=1 // pred_fallthru
      _
    // Predicated region
    $region22: #{tpu_custom_call.1} parent=1 // pred_check
      _
    $region23: #{tpu_custom_call.1} parent=1 // pred_check_branch
      %66 = sbr.rel (0) target = $region25
    $region24: #{tpu_custom_call.1} parent=1 // pred_region
      %67 = dma.done [#allocation6], 32768
    $region25: #{tpu_custom_call.1} parent=1 // pred_fallthru
      _
    %s68 = sadd.s32 0, 0
    %s69 = smul.u32 256, %s68
    %s70 = sadd.s32 0, 0
    %s71 = smul.u32 256, %s70
    %s72 = sadd.s32 0, 0
    %s73 = smul.u32 256, %s72
    %p74 = scmp.eq.s32.totalorder 0, 0
    // Predicated region
    $region26: #{tpu_custom_call.1} parent=1 // pred_check
      %p75 = pneg %p74
    $region27: #{tpu_custom_call.1} parent=1 // pred_check_branch
      %77 = sbr.rel (%p75) target = $region29
    $region28: #{tpu_custom_call.1} parent=1 // pred_region
      %78 = vst [vmem:[#allocation8] sm:$0xff] 0.0
    $region29: #{tpu_custom_call.1} parent=1 // pred_fallthru
      _
    %v79 = vld [vmem:[#allocation2] sm:$0xff]
    %v80 = vld [vmem:[#allocation2 + $0x8] sm:$0xff]
    %v81 = vld [vmem:[#allocation2 + $0x10] sm:$0xff]
    %v82 = vld [vmem:[#allocation2 + $0x18] sm:$0xff]
    %v83 = vld [vmem:[#allocation2 + $0x20] sm:$0xff]
    %v84 = vld [vmem:[#allocation2 + $0x28] sm:$0xff]
    %v85 = vld [vmem:[#allocation2 + $0x30] sm:$0xff]
    %v86 = vld [vmem:[#allocation2 + $0x38] sm:$0xff]
    %v87 = vld [vmem:[#allocation2 + $0x40] sm:$0xff]
    %v88 = vld [vmem:[#allocation2 + $0x48] sm:$0xff]
    %v89 = vld [vmem:[#allocation2 + $0x50] sm:$0xff]
    %v90 = vld [vmem:[#allocation2 + $0x58] sm:$0xff]
    %v91 = vld [vmem:[#allocation2 + $0x60] sm:$0xff]
    %v92 = vld [vmem:[#allocation2 + $0x68] sm:$0xff]
    %v93 = vld [vmem:[#allocation2 + $0x70] sm:$0xff]
    %v94 = vld [vmem:[#allocation2 + $0x78] sm:$0xff]
    %v95 = vld [vmem:[#allocation2 + $0x80] sm:$0xff]
    %v96 = vld [vmem:[#allocation2 + $0x88] sm:$0xff]
    %v97 = vld [vmem:[#allocation2 + $0x90] sm:$0xff]
    %v98 = vld [vmem:[#allocation2 + $0x98] sm:$0xff]
    %v99 = vld [vmem:[#allocation2 + $0xa0] sm:$0xff]
    %v100 = vld [vmem:[#allocation2 + $0xa8] sm:$0xff]
    %v101 = vld [vmem:[#allocation2 + $0xb0] sm:$0xff]
    %v102 = vld [vmem:[#allocation2 + $0xb8] sm:$0xff]
    %v103 = vld [vmem:[#allocation2 + $0xc0] sm:$0xff]
    %v104 = vld [vmem:[#allocation2 + $0xc8] sm:$0xff]
    %v105 = vld [vmem:[#allocation2 + $0xd0] sm:$0xff]
    %v106 = vld [vmem:[#allocation2 + $0xd8] sm:$0xff]
    %v107 = vld [vmem:[#allocation2 + $0xe0] sm:$0xff]
    %v108 = vld [vmem:[#allocation2 + $0xe8] sm:$0xff]
    %v109 = vld [vmem:[#allocation2 + $0xf0] sm:$0xff]
    %v110 = vld [vmem:[#allocation2 + $0xf8] sm:$0xff]
    %v111 = vld [vmem:[#allocation2 + $0x100] sm:$0xff]
    %v112 = vld [vmem:[#allocation2 + $0x108] sm:$0xff]
    %v113 = vld [vmem:[#allocation2 + $0x110] sm:$0xff]
    %v114 = vld [vmem:[#allocation2 + $0x118] sm:$0xff]
    %v115 = vld [vmem:[#allocation2 + $0x120] sm:$0xff]
    %v116 = vld [vmem:[#allocation2 + $0x128] sm:$0xff]
    %v117 = vld [vmem:[#allocation2 + $0x130] sm:$0xff]
    %v118 = vld [vmem:[#allocation2 + $0x138] sm:$0xff]
    %v119 = vld [vmem:[#allocation2 + $0x140] sm:$0xff]
    %v120 = vld [vmem:[#allocation2 + $0x148] sm:$0xff]
    %v121 = vld [vmem:[#allocation2 + $0x150] sm:$0xff]
    %v122 = vld [vmem:[#allocation2 + $0x158] sm:$0xff]
    %v123 = vld [vmem:[#allocation2 + $0x160] sm:$0xff]
    %v124 = vld [vmem:[#allocation2 + $0x168] sm:$0xff]
    %v125 = vld [vmem:[#allocation2 + $0x170] sm:$0xff]
    %v126 = vld [vmem:[#allocation2 + $0x178] sm:$0xff]
    %v127 = vld [vmem:[#allocation2 + $0x180] sm:$0xff]
    %v128 = vld [vmem:[#allocation2 + $0x188] sm:$0xff]
    %v129 = vld [vmem:[#allocation2 + $0x190] sm:$0xff]
    %v130 = vld [vmem:[#allocation2 + $0x198] sm:$0xff]
    %v131 = vld [vmem:[#allocation2 + $0x1a0] sm:$0xff]
    %v132 = vld [vmem:[#allocation2 + $0x1a8] sm:$0xff]
    %v133 = vld [vmem:[#allocation2 + $0x1b0] sm:$0xff]
    %v134 = vld [vmem:[#allocation2 + $0x1b8] sm:$0xff]
    %v135 = vld [vmem:[#allocation2 + $0x1c0] sm:$0xff]
    %v136 = vld [vmem:[#allocation2 + $0x1c8] sm:$0xff]
    %v137 = vld [vmem:[#allocation2 + $0x1d0] sm:$0xff]
    %v138 = vld [vmem:[#allocation2 + $0x1d8] sm:$0xff]
    %v139 = vld [vmem:[#allocation2 + $0x1e0] sm:$0xff]
    %v140 = vld [vmem:[#allocation2 + $0x1e8] sm:$0xff]
    %v141 = vld [vmem:[#allocation2 + $0x1f0] sm:$0xff]
    %v142 = vld [vmem:[#allocation2 + $0x1f8] sm:$0xff]
    %v143 = vld [vmem:[#allocation2 + $0x200] sm:$0xff]
    %v144 = vld [vmem:[#allocation2 + $0x208] sm:$0xff]
    %v145 = vld [vmem:[#allocation2 + $0x210] sm:$0xff]
    %v146 = vld [vmem:[#allocation2 + $0x218] sm:$0xff]
    %v147 = vld [vmem:[#allocation2 + $0x220] sm:$0xff]
    %v148 = vld [vmem:[#allocation2 + $0x228] sm:$0xff]
    %v149 = vld [vmem:[#allocation2 + $0x230] sm:$0xff]
    %v150 = vld [vmem:[#allocation2 + $0x238] sm:$0xff]
    %v151 = vld [vmem:[#allocation2 + $0x240] sm:$0xff]
    %v152 = vld [vmem:[#allocation2 + $0x248] sm:$0xff]
    %v153 = vld [vmem:[#allocation2 + $0x250] sm:$0xff]
    %v154 = vld [vmem:[#allocation2 + $0x258] sm:$0xff]
    %v155 = vld [vmem:[#allocation2 + $0x260] sm:$0xff]
    %v156 = vld [vmem:[#allocation2 + $0x268] sm:$0xff]
    %v157 = vld [vmem:[#allocation2 + $0x270] sm:$0xff]
    %v158 = vld [vmem:[#allocation2 + $0x278] sm:$0xff]
    %v159 = vld [vmem:[#allocation2 + $0x280] sm:$0xff]
    %v160 = vld [vmem:[#allocation2 + $0x288] sm:$0xff]
    %v161 = vld [vmem:[#allocation2 + $0x290] sm:$0xff]
    %v162 = vld [vmem:[#allocation2 + $0x298] sm:$0xff]
    %v163 = vld [vmem:[#allocation2 + $0x2a0] sm:$0xff]
    %v164 = vld [vmem:[#allocation2 + $0x2a8] sm:$0xff]
    %v165 = vld [vmem:[#allocation2 + $0x2b0] sm:$0xff]
    %v166 = vld [vmem:[#allocation2 + $0x2b8] sm:$0xff]
    %v167 = vld [vmem:[#allocation2 + $0x2c0] sm:$0xff]
    %v168 = vld [vmem:[#allocation2 + $0x2c8] sm:$0xff]
    %v169 = vld [vmem:[#allocation2 + $0x2d0] sm:$0xff]
    %v170 = vld [vmem:[#allocation2 + $0x2d8] sm:$0xff]
    %v171 = vld [vmem:[#allocation2 + $0x2e0] sm:$0xff]
    %v172 = vld [vmem:[#allocation2 + $0x2e8] sm:$0xff]
    %v173 = vld [vmem:[#allocation2 + $0x2f0] sm:$0xff]
    %v174 = vld [vmem:[#allocation2 + $0x2f8] sm:$0xff]
    %v175 = vld [vmem:[#allocation2 + $0x300] sm:$0xff]
    %v176 = vld [vmem:[#allocation2 + $0x308] sm:$0xff]
    %v177 = vld [vmem:[#allocation2 + $0x310] sm:$0xff]
    %v178 = vld [vmem:[#allocation2 + $0x318] sm:$0xff]
    %v179 = vld [vmem:[#allocation2 + $0x320] sm:$0xff]
    %v180 = vld [vmem:[#allocation2 + $0x328] sm:$0xff]
    %v181 = vld [vmem:[#allocation2 + $0x330] sm:$0xff]
    %v182 = vld [vmem:[#allocation2 + $0x338] sm:$0xff]
    %v183 = vld [vmem:[#allocation2 + $0x340] sm:$0xff]
    %v184 = vld [vmem:[#allocation2 + $0x348] sm:$0xff]
    %v185 = vld [vmem:[#allocation2 + $0x350] sm:$0xff]
    %v186 = vld [vmem:[#allocation2 + $0x358] sm:$0xff]
    %v187 = vld [vmem:[#allocation2 + $0x360] sm:$0xff]
    %v188 = vld [vmem:[#allocation2 + $0x368] sm:$0xff]
    %v189 = vld [vmem:[#allocation2 + $0x370] sm:$0xff]
    %v190 = vld [vmem:[#allocation2 + $0x378] sm:$0xff]
    %v191 = vld [vmem:[#allocation2 + $0x380] sm:$0xff]
    %v192 = vld [vmem:[#allocation2 + $0x388] sm:$0xff]
    %v193 = vld [vmem:[#allocation2 + $0x390] sm:$0xff]
    %v194 = vld [vmem:[#allocation2 + $0x398] sm:$0xff]
    %v195 = vld [vmem:[#allocation2 + $0x3a0] sm:$0xff]
    %v196 = vld [vmem:[#allocation2 + $0x3a8] sm:$0xff]
    %v197 = vld [vmem:[#allocation2 + $0x3b0] sm:$0xff]
    %v198 = vld [vmem:[#allocation2 + $0x3b8] sm:$0xff]
    %v199 = vld [vmem:[#allocation2 + $0x3c0] sm:$0xff]
    %v200 = vld [vmem:[#allocation2 + $0x3c8] sm:$0xff]
    %v201 = vld [vmem:[#allocation2 + $0x3d0] sm:$0xff]
    %v202 = vld [vmem:[#allocation2 + $0x3d8] sm:$0xff]
    %v203 = vld [vmem:[#allocation2 + $0x3e0] sm:$0xff]
    %v204 = vld [vmem:[#allocation2 + $0x3e8] sm:$0xff]
    %v205 = vld [vmem:[#allocation2 + $0x3f0] sm:$0xff]
    %v206 = vld [vmem:[#allocation2 + $0x3f8] sm:$0xff]
    %v207 = vld [vmem:[#allocation2 + $0x400] sm:$0xff]
    %v208 = vld [vmem:[#allocation2 + $0x408] sm:$0xff]
    %v209 = vld [vmem:[#allocation2 + $0x410] sm:$0xff]
    %v210 = vld [vmem:[#allocation2 + $0x418] sm:$0xff]
    %v211 = vld [vmem:[#allocation2 + $0x420] sm:$0xff]
    %v212 = vld [vmem:[#allocation2 + $0x428] sm:$0xff]
    %v213 = vld [vmem:[#allocation2 + $0x430] sm:$0xff]
    %v214 = vld [vmem:[#allocation2 + $0x438] sm:$0xff]
    %v215 = vld [vmem:[#allocation2 + $0x440] sm:$0xff]
    %v216 = vld [vmem:[#allocation2 + $0x448] sm:$0xff]
    %v217 = vld [vmem:[#allocation2 + $0x450] sm:$0xff]
    %v218 = vld [vmem:[#allocation2 + $0x458] sm:$0xff]
    %v219 = vld [vmem:[#allocation2 + $0x460] sm:$0xff]
    %v220 = vld [vmem:[#allocation2 + $0x468] sm:$0xff]
    %v221 = vld [vmem:[#allocation2 + $0x470] sm:$0xff]
    %v222 = vld [vmem:[#allocation2 + $0x478] sm:$0xff]
    %v223 = vld [vmem:[#allocation2 + $0x480] sm:$0xff]
    %v224 = vld [vmem:[#allocation2 + $0x488] sm:$0xff]
    %v225 = vld [vmem:[#allocation2 + $0x490] sm:$0xff]
    %v226 = vld [vmem:[#allocation2 + $0x498] sm:$0xff]
    %v227 = vld [vmem:[#allocation2 + $0x4a0] sm:$0xff]
    %v228 = vld [vmem:[#allocation2 + $0x4a8] sm:$0xff]
    %v229 = vld [vmem:[#allocation2 + $0x4b0] sm:$0xff]
    %v230 = vld [vmem:[#allocation2 + $0x4b8] sm:$0xff]
    %v231 = vld [vmem:[#allocation2 + $0x4c0] sm:$0xff]
    %v232 = vld [vmem:[#allocation2 + $0x4c8] sm:$0xff]
    %v233 = vld [vmem:[#allocation2 + $0x4d0] sm:$0xff]
    %v234 = vld [vmem:[#allocation2 + $0x4d8] sm:$0xff]
    %v235 = vld [vmem:[#allocation2 + $0x4e0] sm:$0xff]
    %v236 = vld [vmem:[#allocation2 + $0x4e8] sm:$0xff]
    %v237 = vld [vmem:[#allocation2 + $0x4f0] sm:$0xff]
    %v238 = vld [vmem:[#allocation2 + $0x4f8] sm:$0xff]
    %v239 = vld [vmem:[#allocation2 + $0x500] sm:$0xff]
    %v240 = vld [vmem:[#allocation2 + $0x508] sm:$0xff]
    %v241 = vld [vmem:[#allocation2 + $0x510] sm:$0xff]
    %v242 = vld [vmem:[#allocation2 + $0x518] sm:$0xff]
    %v243 = vld [vmem:[#allocation2 + $0x520] sm:$0xff]
    %v244 = vld [vmem:[#allocation2 + $0x528] sm:$0xff]
    %v245 = vld [vmem:[#allocation2 + $0x530] sm:$0xff]
    %v246 = vld [vmem:[#allocation2 + $0x538] sm:$0xff]
    %v247 = vld [vmem:[#allocation2 + $0x540] sm:$0xff]
    %v248 = vld [vmem:[#allocation2 + $0x548] sm:$0xff]
    %v249 = vld [vmem:[#allocation2 + $0x550] sm:$0xff]
    %v250 = vld [vmem:[#allocation2 + $0x558] sm:$0xff]
    %v251 = vld [vmem:[#allocation2 + $0x560] sm:$0xff]
    %v252 = vld [vmem:[#allocation2 + $0x568] sm:$0xff]
    %v253 = vld [vmem:[#allocation2 + $0x570] sm:$0xff]
    %v254 = vld [vmem:[#allocation2 + $0x578] sm:$0xff]
    %v255 = vld [vmem:[#allocation2 + $0x580] sm:$0xff]
    %v256 = vld [vmem:[#allocation2 + $0x588] sm:$0xff]
    %v257 = vld [vmem:[#allocation2 + $0x590] sm:$0xff]
    %v258 = vld [vmem:[#allocation2 + $0x598] sm:$0xff]
    %v259 = vld [vmem:[#allocation2 + $0x5a0] sm:$0xff]
    %v260 = vld [vmem:[#allocation2 + $0x5a8] sm:$0xff]
    %v261 = vld [vmem:[#allocation2 + $0x5b0] sm:$0xff]
    %v262 = vld [vmem:[#allocation2 + $0x5b8] sm:$0xff]
    %v263 = vld [vmem:[#allocation2 + $0x5c0] sm:$0xff]
    %v264 = vld [vmem:[#allocation2 + $0x5c8] sm:$0xff]
    %v265 = vld [vmem:[#allocation2 + $0x5d0] sm:$0xff]
    %v266 = vld [vmem:[#allocation2 + $0x5d8] sm:$0xff]
    %v267 = vld [vmem:[#allocation2 + $0x5e0] sm:$0xff]
    %v268 = vld [vmem:[#allocation2 + $0x5e8] sm:$0xff]
    %v269 = vld [vmem:[#allocation2 + $0x5f0] sm:$0xff]
    %v270 = vld [vmem:[#allocation2 + $0x5f8] sm:$0xff]
    %v271 = vld [vmem:[#allocation2 + $0x600] sm:$0xff]
    %v272 = vld [vmem:[#allocation2 + $0x608] sm:$0xff]
    %v273 = vld [vmem:[#allocation2 + $0x610] sm:$0xff]
    %v274 = vld [vmem:[#allocation2 + $0x618] sm:$0xff]
    %v275 = vld [vmem:[#allocation2 + $0x620] sm:$0xff]
    %v276 = vld [vmem:[#allocation2 + $0x628] sm:$0xff]
    %v277 = vld [vmem:[#allocation2 + $0x630] sm:$0xff]
    %v278 = vld [vmem:[#allocation2 + $0x638] sm:$0xff]
    %v279 = vld [vmem:[#allocation2 + $0x640] sm:$0xff]
    %v280 = vld [vmem:[#allocation2 + $0x648] sm:$0xff]
    %v281 = vld [vmem:[#allocation2 + $0x650] sm:$0xff]
    %v282 = vld [vmem:[#allocation2 + $0x658] sm:$0xff]
    %v283 = vld [vmem:[#allocation2 + $0x660] sm:$0xff]
    %v284 = vld [vmem:[#allocation2 + $0x668] sm:$0xff]
    %v285 = vld [vmem:[#allocation2 + $0x670] sm:$0xff]
    %v286 = vld [vmem:[#allocation2 + $0x678] sm:$0xff]
    %v287 = vld [vmem:[#allocation2 + $0x680] sm:$0xff]
    %v288 = vld [vmem:[#allocation2 + $0x688] sm:$0xff]
    %v289 = vld [vmem:[#allocation2 + $0x690] sm:$0xff]
    %v290 = vld [vmem:[#allocation2 + $0x698] sm:$0xff]
    %v291 = vld [vmem:[#allocation2 + $0x6a0] sm:$0xff]
    %v292 = vld [vmem:[#allocation2 + $0x6a8] sm:$0xff]
    %v293 = vld [vmem:[#allocation2 + $0x6b0] sm:$0xff]
    %v294 = vld [vmem:[#allocation2 + $0x6b8] sm:$0xff]
    %v295 = vld [vmem:[#allocation2 + $0x6c0] sm:$0xff]
    %v296 = vld [vmem:[#allocation2 + $0x6c8] sm:$0xff]
    %v297 = vld [vmem:[#allocation2 + $0x6d0] sm:$0xff]
    %v298 = vld [vmem:[#allocation2 + $0x6d8] sm:$0xff]
    %v299 = vld [vmem:[#allocation2 + $0x6e0] sm:$0xff]
    %v300 = vld [vmem:[#allocation2 + $0x6e8] sm:$0xff]
    %v301 = vld [vmem:[#allocation2 + $0x6f0] sm:$0xff]
    %v302 = vld [vmem:[#allocation2 + $0x6f8] sm:$0xff]
    %v303 = vld [vmem:[#allocation2 + $0x700] sm:$0xff]
    %v304 = vld [vmem:[#allocation2 + $0x708] sm:$0xff]
    %v305 = vld [vmem:[#allocation2 + $0x710] sm:$0xff]
    %v306 = vld [vmem:[#allocation2 + $0x718] sm:$0xff]
    %v307 = vld [vmem:[#allocation2 + $0x720] sm:$0xff]
    %v308 = vld [vmem:[#allocation2 + $0x728] sm:$0xff]
    %v309 = vld [vmem:[#allocation2 + $0x730] sm:$0xff]
    %v310 = vld [vmem:[#allocation2 + $0x738] sm:$0xff]
    %v311 = vld [vmem:[#allocation2 + $0x740] sm:$0xff]
    %v312 = vld [vmem:[#allocation2 + $0x748] sm:$0xff]
    %v313 = vld [vmem:[#allocation2 + $0x750] sm:$0xff]
    %v314 = vld [vmem:[#allocation2 + $0x758] sm:$0xff]
    %v315 = vld [vmem:[#allocation2 + $0x760] sm:$0xff]
    %v316 = vld [vmem:[#allocation2 + $0x768] sm:$0xff]
    %v317 = vld [vmem:[#allocation2 + $0x770] sm:$0xff]
    %v318 = vld [vmem:[#allocation2 + $0x778] sm:$0xff]
    %v319 = vld [vmem:[#allocation2 + $0x780] sm:$0xff]
    %v320 = vld [vmem:[#allocation2 + $0x788] sm:$0xff]
    %v321 = vld [vmem:[#allocation2 + $0x790] sm:$0xff]
    %v322 = vld [vmem:[#allocation2 + $0x798] sm:$0xff]
    %v323 = vld [vmem:[#allocation2 + $0x7a0] sm:$0xff]
    %v324 = vld [vmem:[#allocation2 + $0x7a8] sm:$0xff]
    %v325 = vld [vmem:[#allocation2 + $0x7b0] sm:$0xff]
    %v326 = vld [vmem:[#allocation2 + $0x7b8] sm:$0xff]
    %v327 = vld [vmem:[#allocation2 + $0x7c0] sm:$0xff]
    %v328 = vld [vmem:[#allocation2 + $0x7c8] sm:$0xff]
    %v329 = vld [vmem:[#allocation2 + $0x7d0] sm:$0xff]
    %v330 = vld [vmem:[#allocation2 + $0x7d8] sm:$0xff]
    %v331 = vld [vmem:[#allocation2 + $0x7e0] sm:$0xff]
    %v332 = vld [vmem:[#allocation2 + $0x7e8] sm:$0xff]
    %v333 = vld [vmem:[#allocation2 + $0x7f0] sm:$0xff]
    %v334 = vld [vmem:[#allocation2 + $0x7f8] sm:$0xff]
    %v335 = vld [vmem:[#allocation5] sm:$0xff]
    %v336 = vld [vmem:[#allocation5 + $0x8] sm:$0xff]
    %v337 = vld [vmem:[#allocation5 + $0x10] sm:$0xff]
    %v338 = vld [vmem:[#allocation5 + $0x18] sm:$0xff]
    %v339 = vld [vmem:[#allocation5 + $0x20] sm:$0xff]
    %v340 = vld [vmem:[#allocation5 + $0x28] sm:$0xff]
    %v341 = vld [vmem:[#allocation5 + $0x30] sm:$0xff]
    %v342 = vld [vmem:[#allocation5 + $0x38] sm:$0xff]
    %v343 = vld [vmem:[#allocation5 + $0x40] sm:$0xff]
    %v344 = vld [vmem:[#allocation5 + $0x48] sm:$0xff]
    %v345 = vld [vmem:[#allocation5 + $0x50] sm:$0xff]
    %v346 = vld [vmem:[#allocation5 + $0x58] sm:$0xff]
    %v347 = vld [vmem:[#allocation5 + $0x60] sm:$0xff]
    %v348 = vld [vmem:[#allocation5 + $0x68] sm:$0xff]
    %v349 = vld [vmem:[#allocation5 + $0x70] sm:$0xff]
    %v350 = vld [vmem:[#allocation5 + $0x78] sm:$0xff]
    %v351 = vld [vmem:[#allocation5 + $0x80] sm:$0xff]
    %v352 = vld [vmem:[#allocation5 + $0x88] sm:$0xff]
    %v353 = vld [vmem:[#allocation5 + $0x90] sm:$0xff]
    %v354 = vld [vmem:[#allocation5 + $0x98] sm:$0xff]
    %v355 = vld [vmem:[#allocation5 + $0xa0] sm:$0xff]
    %v356 = vld [vmem:[#allocation5 + $0xa8] sm:$0xff]
    %v357 = vld [vmem:[#allocation5 + $0xb0] sm:$0xff]
    %v358 = vld [vmem:[#allocation5 + $0xb8] sm:$0xff]
    %v359 = vld [vmem:[#allocation5 + $0xc0] sm:$0xff]
    %v360 = vld [vmem:[#allocation5 + $0xc8] sm:$0xff]
    %v361 = vld [vmem:[#allocation5 + $0xd0] sm:$0xff]
    %v362 = vld [vmem:[#allocation5 + $0xd8] sm:$0xff]
    %v363 = vld [vmem:[#allocation5 + $0xe0] sm:$0xff]
    %v364 = vld [vmem:[#allocation5 + $0xe8] sm:$0xff]
    %v365 = vld [vmem:[#allocation5 + $0xf0] sm:$0xff]
    %v366 = vld [vmem:[#allocation5 + $0xf8] sm:$0xff]
    %v367 = vld [vmem:[#allocation5 + $0x100] sm:$0xff]
    %v368 = vld [vmem:[#allocation5 + $0x108] sm:$0xff]
    %v369 = vld [vmem:[#allocation5 + $0x110] sm:$0xff]
    %v370 = vld [vmem:[#allocation5 + $0x118] sm:$0xff]
    %v371 = vld [vmem:[#allocation5 + $0x120] sm:$0xff]
    %v372 = vld [vmem:[#allocation5 + $0x128] sm:$0xff]
    %v373 = vld [vmem:[#allocation5 + $0x130] sm:$0xff]
    %v374 = vld [vmem:[#allocation5 + $0x138] sm:$0xff]
    %v375 = vld [vmem:[#allocation5 + $0x140] sm:$0xff]
    %v376 = vld [vmem:[#allocation5 + $0x148] sm:$0xff]
    %v377 = vld [vmem:[#allocation5 + $0x150] sm:$0xff]
    %v378 = vld [vmem:[#allocation5 + $0x158] sm:$0xff]
    %v379 = vld [vmem:[#allocation5 + $0x160] sm:$0xff]
    %v380 = vld [vmem:[#allocation5 + $0x168] sm:$0xff]
    %v381 = vld [vmem:[#allocation5 + $0x170] sm:$0xff]
    %v382 = vld [vmem:[#allocation5 + $0x178] sm:$0xff]
    %v383 = vld [vmem:[#allocation5 + $0x180] sm:$0xff]
    %v384 = vld [vmem:[#allocation5 + $0x188] sm:$0xff]
    %v385 = vld [vmem:[#allocation5 + $0x190] sm:$0xff]
    %v386 = vld [vmem:[#allocation5 + $0x198] sm:$0xff]
    %v387 = vld [vmem:[#allocation5 + $0x1a0] sm:$0xff]
    %v388 = vld [vmem:[#allocation5 + $0x1a8] sm:$0xff]
    %v389 = vld [vmem:[#allocation5 + $0x1b0] sm:$0xff]
    %v390 = vld [vmem:[#allocation5 + $0x1b8] sm:$0xff]
    %v391 = vld [vmem:[#allocation5 + $0x1c0] sm:$0xff]
    %v392 = vld [vmem:[#allocation5 + $0x1c8] sm:$0xff]
    %v393 = vld [vmem:[#allocation5 + $0x1d0] sm:$0xff]
    %v394 = vld [vmem:[#allocation5 + $0x1d8] sm:$0xff]
    %v395 = vld [vmem:[#allocation5 + $0x1e0] sm:$0xff]
    %v396 = vld [vmem:[#allocation5 + $0x1e8] sm:$0xff]
    %v397 = vld [vmem:[#allocation5 + $0x1f0] sm:$0xff]
    %v398 = vld [vmem:[#allocation5 + $0x1f8] sm:$0xff]
    %v399 = vld [vmem:[#allocation5 + $0x200] sm:$0xff]
    %v400 = vld [vmem:[#allocation5 + $0x208] sm:$0xff]
    %v401 = vld [vmem:[#allocation5 + $0x210] sm:$0xff]
    %v402 = vld [vmem:[#allocation5 + $0x218] sm:$0xff]
    %v403 = vld [vmem:[#allocation5 + $0x220] sm:$0xff]
    %v404 = vld [vmem:[#allocation5 + $0x228] sm:$0xff]
    %v405 = vld [vmem:[#allocation5 + $0x230] sm:$0xff]
    %v406 = vld [vmem:[#allocation5 + $0x238] sm:$0xff]
    %v407 = vld [vmem:[#allocation5 + $0x240] sm:$0xff]
    %v408 = vld [vmem:[#allocation5 + $0x248] sm:$0xff]
    %v409 = vld [vmem:[#allocation5 + $0x250] sm:$0xff]
    %v410 = vld [vmem:[#allocation5 + $0x258] sm:$0xff]
    %v411 = vld [vmem:[#allocation5 + $0x260] sm:$0xff]
    %v412 = vld [vmem:[#allocation5 + $0x268] sm:$0xff]
    %v413 = vld [vmem:[#allocation5 + $0x270] sm:$0xff]
    %v414 = vld [vmem:[#allocation5 + $0x278] sm:$0xff]
    %v415 = vld [vmem:[#allocation5 + $0x280] sm:$0xff]
    %v416 = vld [vmem:[#allocation5 + $0x288] sm:$0xff]
    %v417 = vld [vmem:[#allocation5 + $0x290] sm:$0xff]
    %v418 = vld [vmem:[#allocation5 + $0x298] sm:$0xff]
    %v419 = vld [vmem:[#allocation5 + $0x2a0] sm:$0xff]
    %v420 = vld [vmem:[#allocation5 + $0x2a8] sm:$0xff]
    %v421 = vld [vmem:[#allocation5 + $0x2b0] sm:$0xff]
    %v422 = vld [vmem:[#allocation5 + $0x2b8] sm:$0xff]
    %v423 = vld [vmem:[#allocation5 + $0x2c0] sm:$0xff]
    %v424 = vld [vmem:[#allocation5 + $0x2c8] sm:$0xff]
    %v425 = vld [vmem:[#allocation5 + $0x2d0] sm:$0xff]
    %v426 = vld [vmem:[#allocation5 + $0x2d8] sm:$0xff]
    %v427 = vld [vmem:[#allocation5 + $0x2e0] sm:$0xff]
    %v428 = vld [vmem:[#allocation5 + $0x2e8] sm:$0xff]
    %v429 = vld [vmem:[#allocation5 + $0x2f0] sm:$0xff]
    %v430 = vld [vmem:[#allocation5 + $0x2f8] sm:$0xff]
    %v431 = vld [vmem:[#allocation5 + $0x300] sm:$0xff]
    %v432 = vld [vmem:[#allocation5 + $0x308] sm:$0xff]
    %v433 = vld [vmem:[#allocation5 + $0x310] sm:$0xff]
    %v434 = vld [vmem:[#allocation5 + $0x318] sm:$0xff]
    %v435 = vld [vmem:[#allocation5 + $0x320] sm:$0xff]
    %v436 = vld [vmem:[#allocation5 + $0x328] sm:$0xff]
    %v437 = vld [vmem:[#allocation5 + $0x330] sm:$0xff]
    %v438 = vld [vmem:[#allocation5 + $0x338] sm:$0xff]
    %v439 = vld [vmem:[#allocation5 + $0x340] sm:$0xff]
    %v440 = vld [vmem:[#allocation5 + $0x348] sm:$0xff]
    %v441 = vld [vmem:[#allocation5 + $0x350] sm:$0xff]
    %v442 = vld [vmem:[#allocation5 + $0x358] sm:$0xff]
    %v443 = vld [vmem:[#allocation5 + $0x360] sm:$0xff]
    %v444 = vld [vmem:[#allocation5 + $0x368] sm:$0xff]
    %v445 = vld [vmem:[#allocation5 + $0x370] sm:$0xff]
    %v446 = vld [vmem:[#allocation5 + $0x378] sm:$0xff]
    %v447 = vld [vmem:[#allocation5 + $0x380] sm:$0xff]
    %v448 = vld [vmem:[#allocation5 + $0x388] sm:$0xff]
    %v449 = vld [vmem:[#allocation5 + $0x390] sm:$0xff]
    %v450 = vld [vmem:[#allocation5 + $0x398] sm:$0xff]
    %v451 = vld [vmem:[#allocation5 + $0x3a0] sm:$0xff]
    %v452 = vld [vmem:[#allocation5 + $0x3a8] sm:$0xff]
    %v453 = vld [vmem:[#allocation5 + $0x3b0] sm:$0xff]
    %v454 = vld [vmem:[#allocation5 + $0x3b8] sm:$0xff]
    %v455 = vld [vmem:[#allocation5 + $0x3c0] sm:$0xff]
    %v456 = vld [vmem:[#allocation5 + $0x3c8] sm:$0xff]
    %v457 = vld [vmem:[#allocation5 + $0x3d0] sm:$0xff]
    %v458 = vld [vmem:[#allocation5 + $0x3d8] sm:$0xff]
    %v459 = vld [vmem:[#allocation5 + $0x3e0] sm:$0xff]
    %v460 = vld [vmem:[#allocation5 + $0x3e8] sm:$0xff]
    %v461 = vld [vmem:[#allocation5 + $0x3f0] sm:$0xff]
    %v462 = vld [vmem:[#allocation5 + $0x3f8] sm:$0xff]
    %v463 = vld [vmem:[#allocation5 + $0x400] sm:$0xff]
    %v464 = vld [vmem:[#allocation5 + $0x408] sm:$0xff]
    %v465 = vld [vmem:[#allocation5 + $0x410] sm:$0xff]
    %v466 = vld [vmem:[#allocation5 + $0x418] sm:$0xff]
    %v467 = vld [vmem:[#allocation5 + $0x420] sm:$0xff]
    %v468 = vld [vmem:[#allocation5 + $0x428] sm:$0xff]
    %v469 = vld [vmem:[#allocation5 + $0x430] sm:$0xff]
    %v470 = vld [vmem:[#allocation5 + $0x438] sm:$0xff]
    %v471 = vld [vmem:[#allocation5 + $0x440] sm:$0xff]
    %v472 = vld [vmem:[#allocation5 + $0x448] sm:$0xff]
    %v473 = vld [vmem:[#allocation5 + $0x450] sm:$0xff]
    %v474 = vld [vmem:[#allocation5 + $0x458] sm:$0xff]
    %v475 = vld [vmem:[#allocation5 + $0x460] sm:$0xff]
    %v476 = vld [vmem:[#allocation5 + $0x468] sm:$0xff]
    %v477 = vld [vmem:[#allocation5 + $0x470] sm:$0xff]
    %v478 = vld [vmem:[#allocation5 + $0x478] sm:$0xff]
    %v479 = vld [vmem:[#allocation5 + $0x480] sm:$0xff]
    %v480 = vld [vmem:[#allocation5 + $0x488] sm:$0xff]
    %v481 = vld [vmem:[#allocation5 + $0x490] sm:$0xff]
    %v482 = vld [vmem:[#allocation5 + $0x498] sm:$0xff]
    %v483 = vld [vmem:[#allocation5 + $0x4a0] sm:$0xff]
    %v484 = vld [vmem:[#allocation5 + $0x4a8] sm:$0xff]
    %v485 = vld [vmem:[#allocation5 + $0x4b0] sm:$0xff]
    %v486 = vld [vmem:[#allocation5 + $0x4b8] sm:$0xff]
    %v487 = vld [vmem:[#allocation5 + $0x4c0] sm:$0xff]
    %v488 = vld [vmem:[#allocation5 + $0x4c8] sm:$0xff]
    %v489 = vld [vmem:[#allocation5 + $0x4d0] sm:$0xff]
    %v490 = vld [vmem:[#allocation5 + $0x4d8] sm:$0xff]
    %v491 = vld [vmem:[#allocation5 + $0x4e0] sm:$0xff]
    %v492 = vld [vmem:[#allocation5 + $0x4e8] sm:$0xff]
    %v493 = vld [vmem:[#allocation5 + $0x4f0] sm:$0xff]
    %v494 = vld [vmem:[#allocation5 + $0x4f8] sm:$0xff]
    %v495 = vld [vmem:[#allocation5 + $0x500] sm:$0xff]
    %v496 = vld [vmem:[#allocation5 + $0x508] sm:$0xff]
    %v497 = vld [vmem:[#allocation5 + $0x510] sm:$0xff]
    %v498 = vld [vmem:[#allocation5 + $0x518] sm:$0xff]
    %v499 = vld [vmem:[#allocation5 + $0x520] sm:$0xff]
    %v500 = vld [vmem:[#allocation5 + $0x528] sm:$0xff]
    %v501 = vld [vmem:[#allocation5 + $0x530] sm:$0xff]
    %v502 = vld [vmem:[#allocation5 + $0x538] sm:$0xff]
    %v503 = vld [vmem:[#allocation5 + $0x540] sm:$0xff]
    %v504 = vld [vmem:[#allocation5 + $0x548] sm:$0xff]
    %v505 = vld [vmem:[#allocation5 + $0x550] sm:$0xff]
    %v506 = vld [vmem:[#allocation5 + $0x558] sm:$0xff]
    %v507 = vld [vmem:[#allocation5 + $0x560] sm:$0xff]
    %v508 = vld [vmem:[#allocation5 + $0x568] sm:$0xff]
    %v509 = vld [vmem:[#allocation5 + $0x570] sm:$0xff]
    %v510 = vld [vmem:[#allocation5 + $0x578] sm:$0xff]
    %v511 = vld [vmem:[#allocation5 + $0x580] sm:$0xff]
    %v512 = vld [vmem:[#allocation5 + $0x588] sm:$0xff]
    %v513 = vld [vmem:[#allocation5 + $0x590] sm:$0xff]
    %v514 = vld [vmem:[#allocation5 + $0x598] sm:$0xff]
    %v515 = vld [vmem:[#allocation5 + $0x5a0] sm:$0xff]
    %v516 = vld [vmem:[#allocation5 + $0x5a8] sm:$0xff]
    %v517 = vld [vmem:[#allocation5 + $0x5b0] sm:$0xff]
    %v518 = vld [vmem:[#allocation5 + $0x5b8] sm:$0xff]
    %v519 = vld [vmem:[#allocation5 + $0x5c0] sm:$0xff]
    %v520 = vld [vmem:[#allocation5 + $0x5c8] sm:$0xff]
    %v521 = vld [vmem:[#allocation5 + $0x5d0] sm:$0xff]
    %v522 = vld [vmem:[#allocation5 + $0x5d8] sm:$0xff]
    %v523 = vld [vmem:[#allocation5 + $0x5e0] sm:$0xff]
    %v524 = vld [vmem:[#allocation5 + $0x5e8] sm:$0xff]
    %v525 = vld [vmem:[#allocation5 + $0x5f0] sm:$0xff]
    %v526 = vld [vmem:[#allocation5 + $0x5f8] sm:$0xff]
    %v527 = vld [vmem:[#allocation5 + $0x600] sm:$0xff]
    %v528 = vld [vmem:[#allocation5 + $0x608] sm:$0xff]
    %v529 = vld [vmem:[#allocation5 + $0x610] sm:$0xff]
    %v530 = vld [vmem:[#allocation5 + $0x618] sm:$0xff]
    %v531 = vld [vmem:[#allocation5 + $0x620] sm:$0xff]
    %v532 = vld [vmem:[#allocation5 + $0x628] sm:$0xff]
    %v533 = vld [vmem:[#allocation5 + $0x630] sm:$0xff]
    %v534 = vld [vmem:[#allocation5 + $0x638] sm:$0xff]
    %v535 = vld [vmem:[#allocation5 + $0x640] sm:$0xff]
    %v536 = vld [vmem:[#allocation5 + $0x648] sm:$0xff]
    %v537 = vld [vmem:[#allocation5 + $0x650] sm:$0xff]
    %v538 = vld [vmem:[#allocation5 + $0x658] sm:$0xff]
    %v539 = vld [vmem:[#allocation5 + $0x660] sm:$0xff]
    %v540 = vld [vmem:[#allocation5 + $0x668] sm:$0xff]
    %v541 = vld [vmem:[#allocation5 + $0x670] sm:$0xff]
    %v542 = vld [vmem:[#allocation5 + $0x678] sm:$0xff]
    %v543 = vld [vmem:[#allocation5 + $0x680] sm:$0xff]
    %v544 = vld [vmem:[#allocation5 + $0x688] sm:$0xff]
    %v545 = vld [vmem:[#allocation5 + $0x690] sm:$0xff]
    %v546 = vld [vmem:[#allocation5 + $0x698] sm:$0xff]
    %v547 = vld [vmem:[#allocation5 + $0x6a0] sm:$0xff]
    %v548 = vld [vmem:[#allocation5 + $0x6a8] sm:$0xff]
    %v549 = vld [vmem:[#allocation5 + $0x6b0] sm:$0xff]
    %v550 = vld [vmem:[#allocation5 + $0x6b8] sm:$0xff]
    %v551 = vld [vmem:[#allocation5 + $0x6c0] sm:$0xff]
    %v552 = vld [vmem:[#allocation5 + $0x6c8] sm:$0xff]
    %v553 = vld [vmem:[#allocation5 + $0x6d0] sm:$0xff]
    %v554 = vld [vmem:[#allocation5 + $0x6d8] sm:$0xff]
    %v555 = vld [vmem:[#allocation5 + $0x6e0] sm:$0xff]
    %v556 = vld [vmem:[#allocation5 + $0x6e8] sm:$0xff]
    %v557 = vld [vmem:[#allocation5 + $0x6f0] sm:$0xff]
    %v558 = vld [vmem:[#allocation5 + $0x6f8] sm:$0xff]
    %v559 = vld [vmem:[#allocation5 + $0x700] sm:$0xff]
    %v560 = vld [vmem:[#allocation5 + $0x708] sm:$0xff]
    %v561 = vld [vmem:[#allocation5 + $0x710] sm:$0xff]
    %v562 = vld [vmem:[#allocation5 + $0x718] sm:$0xff]
    %v563 = vld [vmem:[#allocation5 + $0x720] sm:$0xff]
    %v564 = vld [vmem:[#allocation5 + $0x728] sm:$0xff]
    %v565 = vld [vmem:[#allocation5 + $0x730] sm:$0xff]
    %v566 = vld [vmem:[#allocation5 + $0x738] sm:$0xff]
    %v567 = vld [vmem:[#allocation5 + $0x740] sm:$0xff]
    %v568 = vld [vmem:[#allocation5 + $0x748] sm:$0xff]
    %v569 = vld [vmem:[#allocation5 + $0x750] sm:$0xff]
    %v570 = vld [vmem:[#allocation5 + $0x758] sm:$0xff]
    %v571 = vld [vmem:[#allocation5 + $0x760] sm:$0xff]
    %v572 = vld [vmem:[#allocation5 + $0x768] sm:$0xff]
    %v573 = vld [vmem:[#allocation5 + $0x770] sm:$0xff]
    %v574 = vld [vmem:[#allocation5 + $0x778] sm:$0xff]
    %v575 = vld [vmem:[#allocation5 + $0x780] sm:$0xff]
    %v576 = vld [vmem:[#allocation5 + $0x788] sm:$0xff]
    %v577 = vld [vmem:[#allocation5 + $0x790] sm:$0xff]
    %v578 = vld [vmem:[#allocation5 + $0x798] sm:$0xff]
    %v579 = vld [vmem:[#allocation5 + $0x7a0] sm:$0xff]
    %v580 = vld [vmem:[#allocation5 + $0x7a8] sm:$0xff]
    %v581 = vld [vmem:[#allocation5 + $0x7b0] sm:$0xff]
    %v582 = vld [vmem:[#allocation5 + $0x7b8] sm:$0xff]
    %v583 = vld [vmem:[#allocation5 + $0x7c0] sm:$0xff]
    %v584 = vld [vmem:[#allocation5 + $0x7c8] sm:$0xff]
    %v585 = vld [vmem:[#allocation5 + $0x7d0] sm:$0xff]
    %v586 = vld [vmem:[#allocation5 + $0x7d8] sm:$0xff]
    %v587 = vld [vmem:[#allocation5 + $0x7e0] sm:$0xff]
    %v588 = vld [vmem:[#allocation5 + $0x7e8] sm:$0xff]
    %v589 = vld [vmem:[#allocation5 + $0x7f0] sm:$0xff]
    %v590 = vld [vmem:[#allocation5 + $0x7f8] sm:$0xff]
    %v591 = vld [vmem:[#allocation7] sm:$0xff]
    %v592 = vld [vmem:[#allocation7 + $0x8] sm:$0xff]
    %v593 = vld [vmem:[#allocation7 + $0x10] sm:$0xff]
    %v594 = vld [vmem:[#allocation7 + $0x18] sm:$0xff]
    %v595 = vld [vmem:[#allocation7 + $0x20] sm:$0xff]
    %v596 = vld [vmem:[#allocation7 + $0x28] sm:$0xff]
    %v597 = vld [vmem:[#allocation7 + $0x30] sm:$0xff]
    %v598 = vld [vmem:[#allocation7 + $0x38] sm:$0xff]
    %v599 = vld [vmem:[#allocation7 + $0x40] sm:$0xff]
    %v600 = vld [vmem:[#allocation7 + $0x48] sm:$0xff]
    %v601 = vld [vmem:[#allocation7 + $0x50] sm:$0xff]
    %v602 = vld [vmem:[#allocation7 + $0x58] sm:$0xff]
    %v603 = vld [vmem:[#allocation7 + $0x60] sm:$0xff]
    %v604 = vld [vmem:[#allocation7 + $0x68] sm:$0xff]
    %v605 = vld [vmem:[#allocation7 + $0x70] sm:$0xff]
    %v606 = vld [vmem:[#allocation7 + $0x78] sm:$0xff]
    %v607 = vld [vmem:[#allocation7 + $0x80] sm:$0xff]
    %v608 = vld [vmem:[#allocation7 + $0x88] sm:$0xff]
    %v609 = vld [vmem:[#allocation7 + $0x90] sm:$0xff]
    %v610 = vld [vmem:[#allocation7 + $0x98] sm:$0xff]
    %v611 = vld [vmem:[#allocation7 + $0xa0] sm:$0xff]
    %v612 = vld [vmem:[#allocation7 + $0xa8] sm:$0xff]
    %v613 = vld [vmem:[#allocation7 + $0xb0] sm:$0xff]
    %v614 = vld [vmem:[#allocation7 + $0xb8] sm:$0xff]
    %v615 = vld [vmem:[#allocation7 + $0xc0] sm:$0xff]
    %v616 = vld [vmem:[#allocation7 + $0xc8] sm:$0xff]
    %v617 = vld [vmem:[#allocation7 + $0xd0] sm:$0xff]
    %v618 = vld [vmem:[#allocation7 + $0xd8] sm:$0xff]
    %v619 = vld [vmem:[#allocation7 + $0xe0] sm:$0xff]
    %v620 = vld [vmem:[#allocation7 + $0xe8] sm:$0xff]
    %v621 = vld [vmem:[#allocation7 + $0xf0] sm:$0xff]
    %v622 = vld [vmem:[#allocation7 + $0xf8] sm:$0xff]
    %v623 = vld [vmem:[#allocation7 + $0x100] sm:$0xff]
    %v624 = vld [vmem:[#allocation7 + $0x108] sm:$0xff]
    %v625 = vld [vmem:[#allocation7 + $0x110] sm:$0xff]
    %v626 = vld [vmem:[#allocation7 + $0x118] sm:$0xff]
    %v627 = vld [vmem:[#allocation7 + $0x120] sm:$0xff]
    %v628 = vld [vmem:[#allocation7 + $0x128] sm:$0xff]
    %v629 = vld [vmem:[#allocation7 + $0x130] sm:$0xff]
    %v630 = vld [vmem:[#allocation7 + $0x138] sm:$0xff]
    %v631 = vld [vmem:[#allocation7 + $0x140] sm:$0xff]
    %v632 = vld [vmem:[#allocation7 + $0x148] sm:$0xff]
    %v633 = vld [vmem:[#allocation7 + $0x150] sm:$0xff]
    %v634 = vld [vmem:[#allocation7 + $0x158] sm:$0xff]
    %v635 = vld [vmem:[#allocation7 + $0x160] sm:$0xff]
    %v636 = vld [vmem:[#allocation7 + $0x168] sm:$0xff]
    %v637 = vld [vmem:[#allocation7 + $0x170] sm:$0xff]
    %v638 = vld [vmem:[#allocation7 + $0x178] sm:$0xff]
    %v639 = vld [vmem:[#allocation7 + $0x180] sm:$0xff]
    %v640 = vld [vmem:[#allocation7 + $0x188] sm:$0xff]
    %v641 = vld [vmem:[#allocation7 + $0x190] sm:$0xff]
    %v642 = vld [vmem:[#allocation7 + $0x198] sm:$0xff]
    %v643 = vld [vmem:[#allocation7 + $0x1a0] sm:$0xff]
    %v644 = vld [vmem:[#allocation7 + $0x1a8] sm:$0xff]
    %v645 = vld [vmem:[#allocation7 + $0x1b0] sm:$0xff]
    %v646 = vld [vmem:[#allocation7 + $0x1b8] sm:$0xff]
    %v647 = vld [vmem:[#allocation7 + $0x1c0] sm:$0xff]
    %v648 = vld [vmem:[#allocation7 + $0x1c8] sm:$0xff]
    %v649 = vld [vmem:[#allocation7 + $0x1d0] sm:$0xff]
    %v650 = vld [vmem:[#allocation7 + $0x1d8] sm:$0xff]
    %v651 = vld [vmem:[#allocation7 + $0x1e0] sm:$0xff]
    %v652 = vld [vmem:[#allocation7 + $0x1e8] sm:$0xff]
    %v653 = vld [vmem:[#allocation7 + $0x1f0] sm:$0xff]
    %v654 = vld [vmem:[#allocation7 + $0x1f8] sm:$0xff]
    %v655 = vld [vmem:[#allocation7 + $0x200] sm:$0xff]
    %v656 = vld [vmem:[#allocation7 + $0x208] sm:$0xff]
    %v657 = vld [vmem:[#allocation7 + $0x210] sm:$0xff]
    %v658 = vld [vmem:[#allocation7 + $0x218] sm:$0xff]
    %v659 = vld [vmem:[#allocation7 + $0x220] sm:$0xff]
    %v660 = vld [vmem:[#allocation7 + $0x228] sm:$0xff]
    %v661 = vld [vmem:[#allocation7 + $0x230] sm:$0xff]
    %v662 = vld [vmem:[#allocation7 + $0x238] sm:$0xff]
    %v663 = vld [vmem:[#allocation7 + $0x240] sm:$0xff]
    %v664 = vld [vmem:[#allocation7 + $0x248] sm:$0xff]
    %v665 = vld [vmem:[#allocation7 + $0x250] sm:$0xff]
    %v666 = vld [vmem:[#allocation7 + $0x258] sm:$0xff]
    %v667 = vld [vmem:[#allocation7 + $0x260] sm:$0xff]
    %v668 = vld [vmem:[#allocation7 + $0x268] sm:$0xff]
    %v669 = vld [vmem:[#allocation7 + $0x270] sm:$0xff]
    %v670 = vld [vmem:[#allocation7 + $0x278] sm:$0xff]
    %v671 = vld [vmem:[#allocation7 + $0x280] sm:$0xff]
    %v672 = vld [vmem:[#allocation7 + $0x288] sm:$0xff]
    %v673 = vld [vmem:[#allocation7 + $0x290] sm:$0xff]
    %v674 = vld [vmem:[#allocation7 + $0x298] sm:$0xff]
    %v675 = vld [vmem:[#allocation7 + $0x2a0] sm:$0xff]
    %v676 = vld [vmem:[#allocation7 + $0x2a8] sm:$0xff]
    %v677 = vld [vmem:[#allocation7 + $0x2b0] sm:$0xff]
    %v678 = vld [vmem:[#allocation7 + $0x2b8] sm:$0xff]
    %v679 = vld [vmem:[#allocation7 + $0x2c0] sm:$0xff]
    %v680 = vld [vmem:[#allocation7 + $0x2c8] sm:$0xff]
    %v681 = vld [vmem:[#allocation7 + $0x2d0] sm:$0xff]
    %v682 = vld [vmem:[#allocation7 + $0x2d8] sm:$0xff]
    %v683 = vld [vmem:[#allocation7 + $0x2e0] sm:$0xff]
    %v684 = vld [vmem:[#allocation7 + $0x2e8] sm:$0xff]
    %v685 = vld [vmem:[#allocation7 + $0x2f0] sm:$0xff]
    %v686 = vld [vmem:[#allocation7 + $0x2f8] sm:$0xff]
    %v687 = vld [vmem:[#allocation7 + $0x300] sm:$0xff]
    %v688 = vld [vmem:[#allocation7 + $0x308] sm:$0xff]
    %v689 = vld [vmem:[#allocation7 + $0x310] sm:$0xff]
    %v690 = vld [vmem:[#allocation7 + $0x318] sm:$0xff]
    %v691 = vld [vmem:[#allocation7 + $0x320] sm:$0xff]
    %v692 = vld [vmem:[#allocation7 + $0x328] sm:$0xff]
    %v693 = vld [vmem:[#allocation7 + $0x330] sm:$0xff]
    %v694 = vld [vmem:[#allocation7 + $0x338] sm:$0xff]
    %v695 = vld [vmem:[#allocation7 + $0x340] sm:$0xff]
    %v696 = vld [vmem:[#allocation7 + $0x348] sm:$0xff]
    %v697 = vld [vmem:[#allocation7 + $0x350] sm:$0xff]
    %v698 = vld [vmem:[#allocation7 + $0x358] sm:$0xff]
    %v699 = vld [vmem:[#allocation7 + $0x360] sm:$0xff]
    %v700 = vld [vmem:[#allocation7 + $0x368] sm:$0xff]
    %v701 = vld [vmem:[#allocation7 + $0x370] sm:$0xff]
    %v702 = vld [vmem:[#allocation7 + $0x378] sm:$0xff]
    %v703 = vld [vmem:[#allocation7 + $0x380] sm:$0xff]
    %v704 = vld [vmem:[#allocation7 + $0x388] sm:$0xff]
    %v705 = vld [vmem:[#allocation7 + $0x390] sm:$0xff]
    %v706 = vld [vmem:[#allocation7 + $0x398] sm:$0xff]
    %v707 = vld [vmem:[#allocation7 + $0x3a0] sm:$0xff]
    %v708 = vld [vmem:[#allocation7 + $0x3a8] sm:$0xff]
    %v709 = vld [vmem:[#allocation7 + $0x3b0] sm:$0xff]
    %v710 = vld [vmem:[#allocation7 + $0x3b8] sm:$0xff]
    %v711 = vld [vmem:[#allocation7 + $0x3c0] sm:$0xff]
    %v712 = vld [vmem:[#allocation7 + $0x3c8] sm:$0xff]
    %v713 = vld [vmem:[#allocation7 + $0x3d0] sm:$0xff]
    %v714 = vld [vmem:[#allocation7 + $0x3d8] sm:$0xff]
    %v715 = vld [vmem:[#allocation7 + $0x3e0] sm:$0xff]
    %v716 = vld [vmem:[#allocation7 + $0x3e8] sm:$0xff]
    %v717 = vld [vmem:[#allocation7 + $0x3f0] sm:$0xff]
    %v718 = vld [vmem:[#allocation7 + $0x3f8] sm:$0xff]
    %v719 = vld [vmem:[#allocation7 + $0x400] sm:$0xff]
    %v720 = vld [vmem:[#allocation7 + $0x408] sm:$0xff]
    %v721 = vld [vmem:[#allocation7 + $0x410] sm:$0xff]
    %v722 = vld [vmem:[#allocation7 + $0x418] sm:$0xff]
    %v723 = vld [vmem:[#allocation7 + $0x420] sm:$0xff]
    %v724 = vld [vmem:[#allocation7 + $0x428] sm:$0xff]
    %v725 = vld [vmem:[#allocation7 + $0x430] sm:$0xff]
    %v726 = vld [vmem:[#allocation7 + $0x438] sm:$0xff]
    %v727 = vld [vmem:[#allocation7 + $0x440] sm:$0xff]
    %v728 = vld [vmem:[#allocation7 + $0x448] sm:$0xff]
    %v729 = vld [vmem:[#allocation7 + $0x450] sm:$0xff]
    %v730 = vld [vmem:[#allocation7 + $0x458] sm:$0xff]
    %v731 = vld [vmem:[#allocation7 + $0x460] sm:$0xff]
    %v732 = vld [vmem:[#allocation7 + $0x468] sm:$0xff]
    %v733 = vld [vmem:[#allocation7 + $0x470] sm:$0xff]
    %v734 = vld [vmem:[#allocation7 + $0x478] sm:$0xff]
    %v735 = vld [vmem:[#allocation7 + $0x480] sm:$0xff]
    %v736 = vld [vmem:[#allocation7 + $0x488] sm:$0xff]
    %v737 = vld [vmem:[#allocation7 + $0x490] sm:$0xff]
    %v738 = vld [vmem:[#allocation7 + $0x498] sm:$0xff]
    %v739 = vld [vmem:[#allocation7 + $0x4a0] sm:$0xff]
    %v740 = vld [vmem:[#allocation7 + $0x4a8] sm:$0xff]
    %v741 = vld [vmem:[#allocation7 + $0x4b0] sm:$0xff]
    %v742 = vld [vmem:[#allocation7 + $0x4b8] sm:$0xff]
    %v743 = vld [vmem:[#allocation7 + $0x4c0] sm:$0xff]
    %v744 = vld [vmem:[#allocation7 + $0x4c8] sm:$0xff]
    %v745 = vld [vmem:[#allocation7 + $0x4d0] sm:$0xff]
    %v746 = vld [vmem:[#allocation7 + $0x4d8] sm:$0xff]
    %v747 = vld [vmem:[#allocation7 + $0x4e0] sm:$0xff]
    %v748 = vld [vmem:[#allocation7 + $0x4e8] sm:$0xff]
    %v749 = vld [vmem:[#allocation7 + $0x4f0] sm:$0xff]
    %v750 = vld [vmem:[#allocation7 + $0x4f8] sm:$0xff]
    %v751 = vld [vmem:[#allocation7 + $0x500] sm:$0xff]
    %v752 = vld [vmem:[#allocation7 + $0x508] sm:$0xff]
    %v753 = vld [vmem:[#allocation7 + $0x510] sm:$0xff]
    %v754 = vld [vmem:[#allocation7 + $0x518] sm:$0xff]
    %v755 = vld [vmem:[#allocation7 + $0x520] sm:$0xff]
    %v756 = vld [vmem:[#allocation7 + $0x528] sm:$0xff]
    %v757 = vld [vmem:[#allocation7 + $0x530] sm:$0xff]
    %v758 = vld [vmem:[#allocation7 + $0x538] sm:$0xff]
    %v759 = vld [vmem:[#allocation7 + $0x540] sm:$0xff]
    %v760 = vld [vmem:[#allocation7 + $0x548] sm:$0xff]
    %v761 = vld [vmem:[#allocation7 + $0x550] sm:$0xff]
    %v762 = vld [vmem:[#allocation7 + $0x558] sm:$0xff]
    %v763 = vld [vmem:[#allocation7 + $0x560] sm:$0xff]
    %v764 = vld [vmem:[#allocation7 + $0x568] sm:$0xff]
    %v765 = vld [vmem:[#allocation7 + $0x570] sm:$0xff]
    %v766 = vld [vmem:[#allocation7 + $0x578] sm:$0xff]
    %v767 = vld [vmem:[#allocation7 + $0x580] sm:$0xff]
    %v768 = vld [vmem:[#allocation7 + $0x588] sm:$0xff]
    %v769 = vld [vmem:[#allocation7 + $0x590] sm:$0xff]
    %v770 = vld [vmem:[#allocation7 + $0x598] sm:$0xff]
    %v771 = vld [vmem:[#allocation7 + $0x5a0] sm:$0xff]
    %v772 = vld [vmem:[#allocation7 + $0x5a8] sm:$0xff]
    %v773 = vld [vmem:[#allocation7 + $0x5b0] sm:$0xff]
    %v774 = vld [vmem:[#allocation7 + $0x5b8] sm:$0xff]
    %v775 = vld [vmem:[#allocation7 + $0x5c0] sm:$0xff]
    %v776 = vld [vmem:[#allocation7 + $0x5c8] sm:$0xff]
    %v777 = vld [vmem:[#allocation7 + $0x5d0] sm:$0xff]
    %v778 = vld [vmem:[#allocation7 + $0x5d8] sm:$0xff]
    %v779 = vld [vmem:[#allocation7 + $0x5e0] sm:$0xff]
    %v780 = vld [vmem:[#allocation7 + $0x5e8] sm:$0xff]
    %v781 = vld [vmem:[#allocation7 + $0x5f0] sm:$0xff]
    %v782 = vld [vmem:[#allocation7 + $0x5f8] sm:$0xff]
    %v783 = vld [vmem:[#allocation7 + $0x600] sm:$0xff]
    %v784 = vld [vmem:[#allocation7 + $0x608] sm:$0xff]
    %v785 = vld [vmem:[#allocation7 + $0x610] sm:$0xff]
    %v786 = vld [vmem:[#allocation7 + $0x618] sm:$0xff]
    %v787 = vld [vmem:[#allocation7 + $0x620] sm:$0xff]
    %v788 = vld [vmem:[#allocation7 + $0x628] sm:$0xff]
    %v789 = vld [vmem:[#allocation7 + $0x630] sm:$0xff]
    %v790 = vld [vmem:[#allocation7 + $0x638] sm:$0xff]
    %v791 = vld [vmem:[#allocation7 + $0x640] sm:$0xff]
    %v792 = vld [vmem:[#allocation7 + $0x648] sm:$0xff]
    %v793 = vld [vmem:[#allocation7 + $0x650] sm:$0xff]
    %v794 = vld [vmem:[#allocation7 + $0x658] sm:$0xff]
    %v795 = vld [vmem:[#allocation7 + $0x660] sm:$0xff]
    %v796 = vld [vmem:[#allocation7 + $0x668] sm:$0xff]
    %v797 = vld [vmem:[#allocation7 + $0x670] sm:$0xff]
    %v798 = vld [vmem:[#allocation7 + $0x678] sm:$0xff]
    %v799 = vld [vmem:[#allocation7 + $0x680] sm:$0xff]
    %v800 = vld [vmem:[#allocation7 + $0x688] sm:$0xff]
    %v801 = vld [vmem:[#allocation7 + $0x690] sm:$0xff]
    %v802 = vld [vmem:[#allocation7 + $0x698] sm:$0xff]
    %v803 = vld [vmem:[#allocation7 + $0x6a0] sm:$0xff]
    %v804 = vld [vmem:[#allocation7 + $0x6a8] sm:$0xff]
    %v805 = vld [vmem:[#allocation7 + $0x6b0] sm:$0xff]
    %v806 = vld [vmem:[#allocation7 + $0x6b8] sm:$0xff]
    %v807 = vld [vmem:[#allocation7 + $0x6c0] sm:$0xff]
    %v808 = vld [vmem:[#allocation7 + $0x6c8] sm:$0xff]
    %v809 = vld [vmem:[#allocation7 + $0x6d0] sm:$0xff]
    %v810 = vld [vmem:[#allocation7 + $0x6d8] sm:$0xff]
    %v811 = vld [vmem:[#allocation7 + $0x6e0] sm:$0xff]
    %v812 = vld [vmem:[#allocation7 + $0x6e8] sm:$0xff]
    %v813 = vld [vmem:[#allocation7 + $0x6f0] sm:$0xff]
    %v814 = vld [vmem:[#allocation7 + $0x6f8] sm:$0xff]
    %v815 = vld [vmem:[#allocation7 + $0x700] sm:$0xff]
    %v816 = vld [vmem:[#allocation7 + $0x708] sm:$0xff]
    %v817 = vld [vmem:[#allocation7 + $0x710] sm:$0xff]
    %v818 = vld [vmem:[#allocation7 + $0x718] sm:$0xff]
    %v819 = vld [vmem:[#allocation7 + $0x720] sm:$0xff]
    %v820 = vld [vmem:[#allocation7 + $0x728] sm:$0xff]
    %v821 = vld [vmem:[#allocation7 + $0x730] sm:$0xff]
    %v822 = vld [vmem:[#allocation7 + $0x738] sm:$0xff]
    %v823 = vld [vmem:[#allocation7 + $0x740] sm:$0xff]
    %v824 = vld [vmem:[#allocation7 + $0x748] sm:$0xff]
    %v825 = vld [vmem:[#allocation7 + $0x750] sm:$0xff]
    %v826 = vld [vmem:[#allocation7 + $0x758] sm:$0xff]
    %v827 = vld [vmem:[#allocation7 + $0x760] sm:$0xff]
    %v828 = vld [vmem:[#allocation7 + $0x768] sm:$0xff]
    %v829 = vld [vmem:[#allocation7 + $0x770] sm:$0xff]
    %v830 = vld [vmem:[#allocation7 + $0x778] sm:$0xff]
    %v831 = vld [vmem:[#allocation7 + $0x780] sm:$0xff]
    %v832 = vld [vmem:[#allocation7 + $0x788] sm:$0xff]
    %v833 = vld [vmem:[#allocation7 + $0x790] sm:$0xff]
    %v834 = vld [vmem:[#allocation7 + $0x798] sm:$0xff]
    %v835 = vld [vmem:[#allocation7 + $0x7a0] sm:$0xff]
    %v836 = vld [vmem:[#allocation7 + $0x7a8] sm:$0xff]
    %v837 = vld [vmem:[#allocation7 + $0x7b0] sm:$0xff]
    %v838 = vld [vmem:[#allocation7 + $0x7b8] sm:$0xff]
    %v839 = vld [vmem:[#allocation7 + $0x7c0] sm:$0xff]
    %v840 = vld [vmem:[#allocation7 + $0x7c8] sm:$0xff]
    %v841 = vld [vmem:[#allocation7 + $0x7d0] sm:$0xff]
    %v842 = vld [vmem:[#allocation7 + $0x7d8] sm:$0xff]
    %v843 = vld [vmem:[#allocation7 + $0x7e0] sm:$0xff]
    %v844 = vld [vmem:[#allocation7 + $0x7e8] sm:$0xff]
    %v845 = vld [vmem:[#allocation7 + $0x7f0] sm:$0xff]
    %v846 = vld [vmem:[#allocation7 + $0x7f8] sm:$0xff]
    %v847 = vsub.f32 %v591, %v79
    %v848 = vsub.f32 %v592, %v80
    %v849 = vsub.f32 %v593, %v81
    %v850 = vsub.f32 %v594, %v82
    %v851 = vsub.f32 %v595, %v83
    %v852 = vsub.f32 %v596, %v84
    %v853 = vsub.f32 %v597, %v85
    %v854 = vsub.f32 %v598, %v86
    %v855 = vsub.f32 %v599, %v87
    %v856 = vsub.f32 %v600, %v88
    %v857 = vsub.f32 %v601, %v89
    %v858 = vsub.f32 %v602, %v90
    %v859 = vsub.f32 %v603, %v91
    %v860 = vsub.f32 %v604, %v92
    %v861 = vsub.f32 %v605, %v93
    %v862 = vsub.f32 %v606, %v94
    %v863 = vsub.f32 %v607, %v95
    %v864 = vsub.f32 %v608, %v96
    %v865 = vsub.f32 %v609, %v97
    %v866 = vsub.f32 %v610, %v98
    %v867 = vsub.f32 %v611, %v99
    %v868 = vsub.f32 %v612, %v100
    %v869 = vsub.f32 %v613, %v101
    %v870 = vsub.f32 %v614, %v102
    %v871 = vsub.f32 %v615, %v103
    %v872 = vsub.f32 %v616, %v104
    %v873 = vsub.f32 %v617, %v105
    %v874 = vsub.f32 %v618, %v106
    %v875 = vsub.f32 %v619, %v107
    %v876 = vsub.f32 %v620, %v108
    %v877 = vsub.f32 %v621, %v109
    %v878 = vsub.f32 %v622, %v110
    %v879 = vsub.f32 %v623, %v111
    %v880 = vsub.f32 %v624, %v112
    %v881 = vsub.f32 %v625, %v113
    %v882 = vsub.f32 %v626, %v114
    %v883 = vsub.f32 %v627, %v115
    %v884 = vsub.f32 %v628, %v116
    %v885 = vsub.f32 %v629, %v117
    %v886 = vsub.f32 %v630, %v118
    %v887 = vsub.f32 %v631, %v119
    %v888 = vsub.f32 %v632, %v120
    %v889 = vsub.f32 %v633, %v121
    %v890 = vsub.f32 %v634, %v122
    %v891 = vsub.f32 %v635, %v123
    %v892 = vsub.f32 %v636, %v124
    %v893 = vsub.f32 %v637, %v125
    %v894 = vsub.f32 %v638, %v126
    %v895 = vsub.f32 %v639, %v127
    %v896 = vsub.f32 %v640, %v128
    %v897 = vsub.f32 %v641, %v129
    %v898 = vsub.f32 %v642, %v130
    %v899 = vsub.f32 %v643, %v131
    %v900 = vsub.f32 %v644, %v132
    %v901 = vsub.f32 %v645, %v133
    %v902 = vsub.f32 %v646, %v134
    %v903 = vsub.f32 %v647, %v135
    %v904 = vsub.f32 %v648, %v136
    %v905 = vsub.f32 %v649, %v137
    %v906 = vsub.f32 %v650, %v138
    %v907 = vsub.f32 %v651, %v139
    %v908 = vsub.f32 %v652, %v140
    %v909 = vsub.f32 %v653, %v141
    %v910 = vsub.f32 %v654, %v142
    %v911 = vsub.f32 %v655, %v143
    %v912 = vsub.f32 %v656, %v144
    %v913 = vsub.f32 %v657, %v145
    %v914 = vsub.f32 %v658, %v146
    %v915 = vsub.f32 %v659, %v147
    %v916 = vsub.f32 %v660, %v148
    %v917 = vsub.f32 %v661, %v149
    %v918 = vsub.f32 %v662, %v150
    %v919 = vsub.f32 %v663, %v151
    %v920 = vsub.f32 %v664, %v152
    %v921 = vsub.f32 %v665, %v153
    %v922 = vsub.f32 %v666, %v154
    %v923 = vsub.f32 %v667, %v155
    %v924 = vsub.f32 %v668, %v156
    %v925 = vsub.f32 %v669, %v157
    %v926 = vsub.f32 %v670, %v158
    %v927 = vsub.f32 %v671, %v159
    %v928 = vsub.f32 %v672, %v160
    %v929 = vsub.f32 %v673, %v161
    %v930 = vsub.f32 %v674, %v162
    %v931 = vsub.f32 %v675, %v163
    %v932 = vsub.f32 %v676, %v164
    %v933 = vsub.f32 %v677, %v165
    %v934 = vsub.f32 %v678, %v166
    %v935 = vsub.f32 %v679, %v167
    %v936 = vsub.f32 %v680, %v168
    %v937 = vsub.f32 %v681, %v169
    %v938 = vsub.f32 %v682, %v170
    %v939 = vsub.f32 %v683, %v171
    %v940 = vsub.f32 %v684, %v172
    %v941 = vsub.f32 %v685, %v173
    %v942 = vsub.f32 %v686, %v174
    %v943 = vsub.f32 %v687, %v175
    %v944 = vsub.f32 %v688, %v176
    %v945 = vsub.f32 %v689, %v177
    %v946 = vsub.f32 %v690, %v178
    %v947 = vsub.f32 %v691, %v179
    %v948 = vsub.f32 %v692, %v180
    %v949 = vsub.f32 %v693, %v181
    %v950 = vsub.f32 %v694, %v182
    %v951 = vsub.f32 %v695, %v183
    %v952 = vsub.f32 %v696, %v184
    %v953 = vsub.f32 %v697, %v185
    %v954 = vsub.f32 %v698, %v186
    %v955 = vsub.f32 %v699, %v187
    %v956 = vsub.f32 %v700, %v188
    %v957 = vsub.f32 %v701, %v189
    %v958 = vsub.f32 %v702, %v190
    %v959 = vsub.f32 %v703, %v191
    %v960 = vsub.f32 %v704, %v192
    %v961 = vsub.f32 %v705, %v193
    %v962 = vsub.f32 %v706, %v194
    %v963 = vsub.f32 %v707, %v195
    %v964 = vsub.f32 %v708, %v196
    %v965 = vsub.f32 %v709, %v197
    %v966 = vsub.f32 %v710, %v198
    %v967 = vsub.f32 %v711, %v199
    %v968 = vsub.f32 %v712, %v200
    %v969 = vsub.f32 %v713, %v201
    %v970 = vsub.f32 %v714, %v202
    %v971 = vsub.f32 %v715, %v203
    %v972 = vsub.f32 %v716, %v204
    %v973 = vsub.f32 %v717, %v205
    %v974 = vsub.f32 %v718, %v206
    %v975 = vsub.f32 %v719, %v207
    %v976 = vsub.f32 %v720, %v208
    %v977 = vsub.f32 %v721, %v209
    %v978 = vsub.f32 %v722, %v210
    %v979 = vsub.f32 %v723, %v211
    %v980 = vsub.f32 %v724, %v212
    %v981 = vsub.f32 %v725, %v213
    %v982 = vsub.f32 %v726, %v214
    %v983 = vsub.f32 %v727, %v215
    %v984 = vsub.f32 %v728, %v216
    %v985 = vsub.f32 %v729, %v217
    %v986 = vsub.f32 %v730, %v218
    %v987 = vsub.f32 %v731, %v219
    %v988 = vsub.f32 %v732, %v220
    %v989 = vsub.f32 %v733, %v221
    %v990 = vsub.f32 %v734, %v222
    %v991 = vsub.f32 %v735, %v223
    %v992 = vsub.f32 %v736, %v224
    %v993 = vsub.f32 %v737, %v225
    %v994 = vsub.f32 %v738, %v226
    %v995 = vsub.f32 %v739, %v227
    %v996 = vsub.f32 %v740, %v228
    %v997 = vsub.f32 %v741, %v229
    %v998 = vsub.f32 %v742, %v230
    %v999 = vsub.f32 %v743, %v231
    %v1000 = vsub.f32 %v744, %v232
    %v1001 = vsub.f32 %v745, %v233
    %v1002 = vsub.f32 %v746, %v234
    %v1003 = vsub.f32 %v747, %v235
    %v1004 = vsub.f32 %v748, %v236
    %v1005 = vsub.f32 %v749, %v237
    %v1006 = vsub.f32 %v750, %v238
    %v1007 = vsub.f32 %v751, %v239
    %v1008 = vsub.f32 %v752, %v240
    %v1009 = vsub.f32 %v753, %v241
    %v1010 = vsub.f32 %v754, %v242
    %v1011 = vsub.f32 %v755, %v243
    %v1012 = vsub.f32 %v756, %v244
    %v1013 = vsub.f32 %v757, %v245
    %v1014 = vsub.f32 %v758, %v246
    %v1015 = vsub.f32 %v759, %v247
    %v1016 = vsub.f32 %v760, %v248
    %v1017 = vsub.f32 %v761, %v249
    %v1018 = vsub.f32 %v762, %v250
    %v1019 = vsub.f32 %v763, %v251
    %v1020 = vsub.f32 %v764, %v252
    %v1021 = vsub.f32 %v765, %v253
    %v1022 = vsub.f32 %v766, %v254
    %v1023 = vsub.f32 %v767, %v255
    %v1024 = vsub.f32 %v768, %v256
    %v1025 = vsub.f32 %v769, %v257
    %v1026 = vsub.f32 %v770, %v258
    %v1027 = vsub.f32 %v771, %v259
    %v1028 = vsub.f32 %v772, %v260
    %v1029 = vsub.f32 %v773, %v261
    %v1030 = vsub.f32 %v774, %v262
    %v1031 = vsub.f32 %v775, %v263
    %v1032 = vsub.f32 %v776, %v264
    %v1033 = vsub.f32 %v777, %v265
    %v1034 = vsub.f32 %v778, %v266
    %v1035 = vsub.f32 %v779, %v267
    %v1036 = vsub.f32 %v780, %v268
    %v1037 = vsub.f32 %v781, %v269
    %v1038 = vsub.f32 %v782, %v270
    %v1039 = vsub.f32 %v783, %v271
    %v1040 = vsub.f32 %v784, %v272
    %v1041 = vsub.f32 %v785, %v273
    %v1042 = vsub.f32 %v786, %v274
    %v1043 = vsub.f32 %v787, %v275
    %v1044 = vsub.f32 %v788, %v276
    %v1045 = vsub.f32 %v789, %v277
    %v1046 = vsub.f32 %v790, %v278
    %v1047 = vsub.f32 %v791, %v279
    %v1048 = vsub.f32 %v792, %v280
    %v1049 = vsub.f32 %v793, %v281
    %v1050 = vsub.f32 %v794, %v282
    %v1051 = vsub.f32 %v795, %v283
    %v1052 = vsub.f32 %v796, %v284
    %v1053 = vsub.f32 %v797, %v285
    %v1054 = vsub.f32 %v798, %v286
    %v1055 = vsub.f32 %v799, %v287
    %v1056 = vsub.f32 %v800, %v288
    %v1057 = vsub.f32 %v801, %v289
    %v1058 = vsub.f32 %v802, %v290
    %v1059 = vsub.f32 %v803, %v291
    %v1060 = vsub.f32 %v804, %v292
    %v1061 = vsub.f32 %v805, %v293
    %v1062 = vsub.f32 %v806, %v294
    %v1063 = vsub.f32 %v807, %v295
    %v1064 = vsub.f32 %v808, %v296
    %v1065 = vsub.f32 %v809, %v297
    %v1066 = vsub.f32 %v810, %v298
    %v1067 = vsub.f32 %v811, %v299
    %v1068 = vsub.f32 %v812, %v300
    %v1069 = vsub.f32 %v813, %v301
    %v1070 = vsub.f32 %v814, %v302
    %v1071 = vsub.f32 %v815, %v303
    %v1072 = vsub.f32 %v816, %v304
    %v1073 = vsub.f32 %v817, %v305
    %v1074 = vsub.f32 %v818, %v306
    %v1075 = vsub.f32 %v819, %v307
    %v1076 = vsub.f32 %v820, %v308
    %v1077 = vsub.f32 %v821, %v309
    %v1078 = vsub.f32 %v822, %v310
    %v1079 = vsub.f32 %v823, %v311
    %v1080 = vsub.f32 %v824, %v312
    %v1081 = vsub.f32 %v825, %v313
    %v1082 = vsub.f32 %v826, %v314
    %v1083 = vsub.f32 %v827, %v315
    %v1084 = vsub.f32 %v828, %v316
    %v1085 = vsub.f32 %v829, %v317
    %v1086 = vsub.f32 %v830, %v318
    %v1087 = vsub.f32 %v831, %v319
    %v1088 = vsub.f32 %v832, %v320
    %v1089 = vsub.f32 %v833, %v321
    %v1090 = vsub.f32 %v834, %v322
    %v1091 = vsub.f32 %v835, %v323
    %v1092 = vsub.f32 %v836, %v324
    %v1093 = vsub.f32 %v837, %v325
    %v1094 = vsub.f32 %v838, %v326
    %v1095 = vsub.f32 %v839, %v327
    %v1096 = vsub.f32 %v840, %v328
    %v1097 = vsub.f32 %v841, %v329
    %v1098 = vsub.f32 %v842, %v330
    %v1099 = vsub.f32 %v843, %v331
    %v1100 = vsub.f32 %v844, %v332
    %v1101 = vsub.f32 %v845, %v333
    %v1102 = vsub.f32 %v846, %v334
    %v1103 = vmul.f32 %v847, %v847
    %v1104 = vmul.f32 %v848, %v848
    %v1105 = vmul.f32 %v849, %v849
    %v1106 = vmul.f32 %v850, %v850
    %v1107 = vmul.f32 %v851, %v851
    %v1108 = vmul.f32 %v852, %v852
    %v1109 = vmul.f32 %v853, %v853
    %v1110 = vmul.f32 %v854, %v854
    %v1111 = vmul.f32 %v855, %v855
    %v1112 = vmul.f32 %v856, %v856
    %v1113 = vmul.f32 %v857, %v857
    %v1114 = vmul.f32 %v858, %v858
    %v1115 = vmul.f32 %v859, %v859
    %v1116 = vmul.f32 %v860, %v860
    %v1117 = vmul.f32 %v861, %v861
    %v1118 = vmul.f32 %v862, %v862
    %v1119 = vmul.f32 %v863, %v863
    %v1120 = vmul.f32 %v864, %v864
    %v1121 = vmul.f32 %v865, %v865
    %v1122 = vmul.f32 %v866, %v866
    %v1123 = vmul.f32 %v867, %v867
    %v1124 = vmul.f32 %v868, %v868
    %v1125 = vmul.f32 %v869, %v869
    %v1126 = vmul.f32 %v870, %v870
    %v1127 = vmul.f32 %v871, %v871
    %v1128 = vmul.f32 %v872, %v872
    %v1129 = vmul.f32 %v873, %v873
    %v1130 = vmul.f32 %v874, %v874
    %v1131 = vmul.f32 %v875, %v875
    %v1132 = vmul.f32 %v876, %v876
    %v1133 = vmul.f32 %v877, %v877
    %v1134 = vmul.f32 %v878, %v878
    %v1135 = vmul.f32 %v879, %v879
    %v1136 = vmul.f32 %v880, %v880
    %v1137 = vmul.f32 %v881, %v881
    %v1138 = vmul.f32 %v882, %v882
    %v1139 = vmul.f32 %v883, %v883
    %v1140 = vmul.f32 %v884, %v884
    %v1141 = vmul.f32 %v885, %v885
    %v1142 = vmul.f32 %v886, %v886
    %v1143 = vmul.f32 %v887, %v887
    %v1144 = vmul.f32 %v888, %v888
    %v1145 = vmul.f32 %v889, %v889
    %v1146 = vmul.f32 %v890, %v890
    %v1147 = vmul.f32 %v891, %v891
    %v1148 = vmul.f32 %v892, %v892
    %v1149 = vmul.f32 %v893, %v893
    %v1150 = vmul.f32 %v894, %v894
    %v1151 = vmul.f32 %v895, %v895
    %v1152 = vmul.f32 %v896, %v896
    %v1153 = vmul.f32 %v897, %v897
    %v1154 = vmul.f32 %v898, %v898
    %v1155 = vmul.f32 %v899, %v899
    %v1156 = vmul.f32 %v900, %v900
    %v1157 = vmul.f32 %v901, %v901
    %v1158 = vmul.f32 %v902, %v902
    %v1159 = vmul.f32 %v903, %v903
    %v1160 = vmul.f32 %v904, %v904
    %v1161 = vmul.f32 %v905, %v905
    %v1162 = vmul.f32 %v906, %v906
    %v1163 = vmul.f32 %v907, %v907
    %v1164 = vmul.f32 %v908, %v908
    %v1165 = vmul.f32 %v909, %v909
    %v1166 = vmul.f32 %v910, %v910
    %v1167 = vmul.f32 %v911, %v911
    %v1168 = vmul.f32 %v912, %v912
    %v1169 = vmul.f32 %v913, %v913
    %v1170 = vmul.f32 %v914, %v914
    %v1171 = vmul.f32 %v915, %v915
    %v1172 = vmul.f32 %v916, %v916
    %v1173 = vmul.f32 %v917, %v917
    %v1174 = vmul.f32 %v918, %v918
    %v1175 = vmul.f32 %v919, %v919
    %v1176 = vmul.f32 %v920, %v920
    %v1177 = vmul.f32 %v921, %v921
    %v1178 = vmul.f32 %v922, %v922
    %v1179 = vmul.f32 %v923, %v923
    %v1180 = vmul.f32 %v924, %v924
    %v1181 = vmul.f32 %v925, %v925
    %v1182 = vmul.f32 %v926, %v926
    %v1183 = vmul.f32 %v927, %v927
    %v1184 = vmul.f32 %v928, %v928
    %v1185 = vmul.f32 %v929, %v929
    %v1186 = vmul.f32 %v930, %v930
    %v1187 = vmul.f32 %v931, %v931
    %v1188 = vmul.f32 %v932, %v932
    %v1189 = vmul.f32 %v933, %v933
    %v1190 = vmul.f32 %v934, %v934
    %v1191 = vmul.f32 %v935, %v935
    %v1192 = vmul.f32 %v936, %v936
    %v1193 = vmul.f32 %v937, %v937
    %v1194 = vmul.f32 %v938, %v938
    %v1195 = vmul.f32 %v939, %v939
    %v1196 = vmul.f32 %v940, %v940
    %v1197 = vmul.f32 %v941, %v941
    %v1198 = vmul.f32 %v942, %v942
    %v1199 = vmul.f32 %v943, %v943
    %v1200 = vmul.f32 %v944, %v944
    %v1201 = vmul.f32 %v945, %v945
    %v1202 = vmul.f32 %v946, %v946
    %v1203 = vmul.f32 %v947, %v947
    %v1204 = vmul.f32 %v948, %v948
    %v1205 = vmul.f32 %v949, %v949
    %v1206 = vmul.f32 %v950, %v950
    %v1207 = vmul.f32 %v951, %v951
    %v1208 = vmul.f32 %v952, %v952
    %v1209 = vmul.f32 %v953, %v953
    %v1210 = vmul.f32 %v954, %v954
    %v1211 = vmul.f32 %v955, %v955
    %v1212 = vmul.f32 %v956, %v956
    %v1213 = vmul.f32 %v957, %v957
    %v1214 = vmul.f32 %v958, %v958
    %v1215 = vmul.f32 %v959, %v959
    %v1216 = vmul.f32 %v960, %v960
    %v1217 = vmul.f32 %v961, %v961
    %v1218 = vmul.f32 %v962, %v962
    %v1219 = vmul.f32 %v963, %v963
    %v1220 = vmul.f32 %v964, %v964
    %v1221 = vmul.f32 %v965, %v965
    %v1222 = vmul.f32 %v966, %v966
    %v1223 = vmul.f32 %v967, %v967
    %v1224 = vmul.f32 %v968, %v968
    %v1225 = vmul.f32 %v969, %v969
    %v1226 = vmul.f32 %v970, %v970
    %v1227 = vmul.f32 %v971, %v971
    %v1228 = vmul.f32 %v972, %v972
    %v1229 = vmul.f32 %v973, %v973
    %v1230 = vmul.f32 %v974, %v974
    %v1231 = vmul.f32 %v975, %v975
    %v1232 = vmul.f32 %v976, %v976
    %v1233 = vmul.f32 %v977, %v977
    %v1234 = vmul.f32 %v978, %v978
    %v1235 = vmul.f32 %v979, %v979
    %v1236 = vmul.f32 %v980, %v980
    %v1237 = vmul.f32 %v981, %v981
    %v1238 = vmul.f32 %v982, %v982
    %v1239 = vmul.f32 %v983, %v983
    %v1240 = vmul.f32 %v984, %v984
    %v1241 = vmul.f32 %v985, %v985
    %v1242 = vmul.f32 %v986, %v986
    %v1243 = vmul.f32 %v987, %v987
    %v1244 = vmul.f32 %v988, %v988
    %v1245 = vmul.f32 %v989, %v989
    %v1246 = vmul.f32 %v990, %v990
    %v1247 = vmul.f32 %v991, %v991
    %v1248 = vmul.f32 %v992, %v992
    %v1249 = vmul.f32 %v993, %v993
    %v1250 = vmul.f32 %v994, %v994
    %v1251 = vmul.f32 %v995, %v995
    %v1252 = vmul.f32 %v996, %v996
    %v1253 = vmul.f32 %v997, %v997
    %v1254 = vmul.f32 %v998, %v998
    %v1255 = vmul.f32 %v999, %v999
    %v1256 = vmul.f32 %v1000, %v1000
    %v1257 = vmul.f32 %v1001, %v1001
    %v1258 = vmul.f32 %v1002, %v1002
    %v1259 = vmul.f32 %v1003, %v1003
    %v1260 = vmul.f32 %v1004, %v1004
    %v1261 = vmul.f32 %v1005, %v1005
    %v1262 = vmul.f32 %v1006, %v1006
    %v1263 = vmul.f32 %v1007, %v1007
    %v1264 = vmul.f32 %v1008, %v1008
    %v1265 = vmul.f32 %v1009, %v1009
    %v1266 = vmul.f32 %v1010, %v1010
    %v1267 = vmul.f32 %v1011, %v1011
    %v1268 = vmul.f32 %v1012, %v1012
    %v1269 = vmul.f32 %v1013, %v1013
    %v1270 = vmul.f32 %v1014, %v1014
    %v1271 = vmul.f32 %v1015, %v1015
    %v1272 = vmul.f32 %v1016, %v1016
    %v1273 = vmul.f32 %v1017, %v1017
    %v1274 = vmul.f32 %v1018, %v1018
    %v1275 = vmul.f32 %v1019, %v1019
    %v1276 = vmul.f32 %v1020, %v1020
    %v1277 = vmul.f32 %v1021, %v1021
    %v1278 = vmul.f32 %v1022, %v1022
    %v1279 = vmul.f32 %v1023, %v1023
    %v1280 = vmul.f32 %v1024, %v1024
    %v1281 = vmul.f32 %v1025, %v1025
    %v1282 = vmul.f32 %v1026, %v1026
    %v1283 = vmul.f32 %v1027, %v1027
    %v1284 = vmul.f32 %v1028, %v1028
    %v1285 = vmul.f32 %v1029, %v1029
    %v1286 = vmul.f32 %v1030, %v1030
    %v1287 = vmul.f32 %v1031, %v1031
    %v1288 = vmul.f32 %v1032, %v1032
    %v1289 = vmul.f32 %v1033, %v1033
    %v1290 = vmul.f32 %v1034, %v1034
    %v1291 = vmul.f32 %v1035, %v1035
    %v1292 = vmul.f32 %v1036, %v1036
    %v1293 = vmul.f32 %v1037, %v1037
    %v1294 = vmul.f32 %v1038, %v1038
    %v1295 = vmul.f32 %v1039, %v1039
    %v1296 = vmul.f32 %v1040, %v1040
    %v1297 = vmul.f32 %v1041, %v1041
    %v1298 = vmul.f32 %v1042, %v1042
    %v1299 = vmul.f32 %v1043, %v1043
    %v1300 = vmul.f32 %v1044, %v1044
    %v1301 = vmul.f32 %v1045, %v1045
    %v1302 = vmul.f32 %v1046, %v1046
    %v1303 = vmul.f32 %v1047, %v1047
    %v1304 = vmul.f32 %v1048, %v1048
    %v1305 = vmul.f32 %v1049, %v1049
    %v1306 = vmul.f32 %v1050, %v1050
    %v1307 = vmul.f32 %v1051, %v1051
    %v1308 = vmul.f32 %v1052, %v1052
    %v1309 = vmul.f32 %v1053, %v1053
    %v1310 = vmul.f32 %v1054, %v1054
    %v1311 = vmul.f32 %v1055, %v1055
    %v1312 = vmul.f32 %v1056, %v1056
    %v1313 = vmul.f32 %v1057, %v1057
    %v1314 = vmul.f32 %v1058, %v1058
    %v1315 = vmul.f32 %v1059, %v1059
    %v1316 = vmul.f32 %v1060, %v1060
    %v1317 = vmul.f32 %v1061, %v1061
    %v1318 = vmul.f32 %v1062, %v1062
    %v1319 = vmul.f32 %v1063, %v1063
    %v1320 = vmul.f32 %v1064, %v1064
    %v1321 = vmul.f32 %v1065, %v1065
    %v1322 = vmul.f32 %v1066, %v1066
    %v1323 = vmul.f32 %v1067, %v1067
    %v1324 = vmul.f32 %v1068, %v1068
    %v1325 = vmul.f32 %v1069, %v1069
    %v1326 = vmul.f32 %v1070, %v1070
    %v1327 = vmul.f32 %v1071, %v1071
    %v1328 = vmul.f32 %v1072, %v1072
    %v1329 = vmul.f32 %v1073, %v1073
    %v1330 = vmul.f32 %v1074, %v1074
    %v1331 = vmul.f32 %v1075, %v1075
    %v1332 = vmul.f32 %v1076, %v1076
    %v1333 = vmul.f32 %v1077, %v1077
    %v1334 = vmul.f32 %v1078, %v1078
    %v1335 = vmul.f32 %v1079, %v1079
    %v1336 = vmul.f32 %v1080, %v1080
    %v1337 = vmul.f32 %v1081, %v1081
    %v1338 = vmul.f32 %v1082, %v1082
    %v1339 = vmul.f32 %v1083, %v1083
    %v1340 = vmul.f32 %v1084, %v1084
    %v1341 = vmul.f32 %v1085, %v1085
    %v1342 = vmul.f32 %v1086, %v1086
    %v1343 = vmul.f32 %v1087, %v1087
    %v1344 = vmul.f32 %v1088, %v1088
    %v1345 = vmul.f32 %v1089, %v1089
    %v1346 = vmul.f32 %v1090, %v1090
    %v1347 = vmul.f32 %v1091, %v1091
    %v1348 = vmul.f32 %v1092, %v1092
    %v1349 = vmul.f32 %v1093, %v1093
    %v1350 = vmul.f32 %v1094, %v1094
    %v1351 = vmul.f32 %v1095, %v1095
    %v1352 = vmul.f32 %v1096, %v1096
    %v1353 = vmul.f32 %v1097, %v1097
    %v1354 = vmul.f32 %v1098, %v1098
    %v1355 = vmul.f32 %v1099, %v1099
    %v1356 = vmul.f32 %v1100, %v1100
    %v1357 = vmul.f32 %v1101, %v1101
    %v1358 = vmul.f32 %v1102, %v1102
    %v1359 = vmul.f32 %v335, -2.0
    %v1360 = vmul.f32 %v336, -2.0
    %v1361 = vmul.f32 %v337, -2.0
    %v1362 = vmul.f32 %v338, -2.0
    %v1363 = vmul.f32 %v339, -2.0
    %v1364 = vmul.f32 %v340, -2.0
    %v1365 = vmul.f32 %v341, -2.0
    %v1366 = vmul.f32 %v342, -2.0
    %v1367 = vmul.f32 %v343, -2.0
    %v1368 = vmul.f32 %v344, -2.0
    %v1369 = vmul.f32 %v345, -2.0
    %v1370 = vmul.f32 %v346, -2.0
    %v1371 = vmul.f32 %v347, -2.0
    %v1372 = vmul.f32 %v348, -2.0
    %v1373 = vmul.f32 %v349, -2.0
    %v1374 = vmul.f32 %v350, -2.0
    %v1375 = vmul.f32 %v351, -2.0
    %v1376 = vmul.f32 %v352, -2.0
    %v1377 = vmul.f32 %v353, -2.0
    %v1378 = vmul.f32 %v354, -2.0
    %v1379 = vmul.f32 %v355, -2.0
    %v1380 = vmul.f32 %v356, -2.0
    %v1381 = vmul.f32 %v357, -2.0
    %v1382 = vmul.f32 %v358, -2.0
    %v1383 = vmul.f32 %v359, -2.0
    %v1384 = vmul.f32 %v360, -2.0
    %v1385 = vmul.f32 %v361, -2.0
    %v1386 = vmul.f32 %v362, -2.0
    %v1387 = vmul.f32 %v363, -2.0
    %v1388 = vmul.f32 %v364, -2.0
    %v1389 = vmul.f32 %v365, -2.0
    %v1390 = vmul.f32 %v366, -2.0
    %v1391 = vmul.f32 %v367, -2.0
    %v1392 = vmul.f32 %v368, -2.0
    %v1393 = vmul.f32 %v369, -2.0
    %v1394 = vmul.f32 %v370, -2.0
    %v1395 = vmul.f32 %v371, -2.0
    %v1396 = vmul.f32 %v372, -2.0
    %v1397 = vmul.f32 %v373, -2.0
    %v1398 = vmul.f32 %v374, -2.0
    %v1399 = vmul.f32 %v375, -2.0
    %v1400 = vmul.f32 %v376, -2.0
    %v1401 = vmul.f32 %v377, -2.0
    %v1402 = vmul.f32 %v378, -2.0
    %v1403 = vmul.f32 %v379, -2.0
    %v1404 = vmul.f32 %v380, -2.0
    %v1405 = vmul.f32 %v381, -2.0
    %v1406 = vmul.f32 %v382, -2.0
    %v1407 = vmul.f32 %v383, -2.0
    %v1408 = vmul.f32 %v384, -2.0
    %v1409 = vmul.f32 %v385, -2.0
    %v1410 = vmul.f32 %v386, -2.0
    %v1411 = vmul.f32 %v387, -2.0
    %v1412 = vmul.f32 %v388, -2.0
    %v1413 = vmul.f32 %v389, -2.0
    %v1414 = vmul.f32 %v390, -2.0
    %v1415 = vmul.f32 %v391, -2.0
    %v1416 = vmul.f32 %v392, -2.0
    %v1417 = vmul.f32 %v393, -2.0
    %v1418 = vmul.f32 %v394, -2.0
    %v1419 = vmul.f32 %v395, -2.0
    %v1420 = vmul.f32 %v396, -2.0
    %v1421 = vmul.f32 %v397, -2.0
    %v1422 = vmul.f32 %v398, -2.0
    %v1423 = vmul.f32 %v399, -2.0
    %v1424 = vmul.f32 %v400, -2.0
    %v1425 = vmul.f32 %v401, -2.0
    %v1426 = vmul.f32 %v402, -2.0
    %v1427 = vmul.f32 %v403, -2.0
    %v1428 = vmul.f32 %v404, -2.0
    %v1429 = vmul.f32 %v405, -2.0
    %v1430 = vmul.f32 %v406, -2.0
    %v1431 = vmul.f32 %v407, -2.0
    %v1432 = vmul.f32 %v408, -2.0
    %v1433 = vmul.f32 %v409, -2.0
    %v1434 = vmul.f32 %v410, -2.0
    %v1435 = vmul.f32 %v411, -2.0
    %v1436 = vmul.f32 %v412, -2.0
    %v1437 = vmul.f32 %v413, -2.0
    %v1438 = vmul.f32 %v414, -2.0
    %v1439 = vmul.f32 %v415, -2.0
    %v1440 = vmul.f32 %v416, -2.0
    %v1441 = vmul.f32 %v417, -2.0
    %v1442 = vmul.f32 %v418, -2.0
    %v1443 = vmul.f32 %v419, -2.0
    %v1444 = vmul.f32 %v420, -2.0
    %v1445 = vmul.f32 %v421, -2.0
    %v1446 = vmul.f32 %v422, -2.0
    %v1447 = vmul.f32 %v423, -2.0
    %v1448 = vmul.f32 %v424, -2.0
    %v1449 = vmul.f32 %v425, -2.0
    %v1450 = vmul.f32 %v426, -2.0
    %v1451 = vmul.f32 %v427, -2.0
    %v1452 = vmul.f32 %v428, -2.0
    %v1453 = vmul.f32 %v429, -2.0
    %v1454 = vmul.f32 %v430, -2.0
    %v1455 = vmul.f32 %v431, -2.0
    %v1456 = vmul.f32 %v432, -2.0
    %v1457 = vmul.f32 %v433, -2.0
    %v1458 = vmul.f32 %v434, -2.0
    %v1459 = vmul.f32 %v435, -2.0
    %v1460 = vmul.f32 %v436, -2.0
    %v1461 = vmul.f32 %v437, -2.0
    %v1462 = vmul.f32 %v438, -2.0
    %v1463 = vmul.f32 %v439, -2.0
    %v1464 = vmul.f32 %v440, -2.0
    %v1465 = vmul.f32 %v441, -2.0
    %v1466 = vmul.f32 %v442, -2.0
    %v1467 = vmul.f32 %v443, -2.0
    %v1468 = vmul.f32 %v444, -2.0
    %v1469 = vmul.f32 %v445, -2.0
    %v1470 = vmul.f32 %v446, -2.0
    %v1471 = vmul.f32 %v447, -2.0
    %v1472 = vmul.f32 %v448, -2.0
    %v1473 = vmul.f32 %v449, -2.0
    %v1474 = vmul.f32 %v450, -2.0
    %v1475 = vmul.f32 %v451, -2.0
    %v1476 = vmul.f32 %v452, -2.0
    %v1477 = vmul.f32 %v453, -2.0
    %v1478 = vmul.f32 %v454, -2.0
    %v1479 = vmul.f32 %v455, -2.0
    %v1480 = vmul.f32 %v456, -2.0
    %v1481 = vmul.f32 %v457, -2.0
    %v1482 = vmul.f32 %v458, -2.0
    %v1483 = vmul.f32 %v459, -2.0
    %v1484 = vmul.f32 %v460, -2.0
    %v1485 = vmul.f32 %v461, -2.0
    %v1486 = vmul.f32 %v462, -2.0
    %v1487 = vmul.f32 %v463, -2.0
    %v1488 = vmul.f32 %v464, -2.0
    %v1489 = vmul.f32 %v465, -2.0
    %v1490 = vmul.f32 %v466, -2.0
    %v1491 = vmul.f32 %v467, -2.0
    %v1492 = vmul.f32 %v468, -2.0
    %v1493 = vmul.f32 %v469, -2.0
    %v1494 = vmul.f32 %v470, -2.0
    %v1495 = vmul.f32 %v471, -2.0
    %v1496 = vmul.f32 %v472, -2.0
    %v1497 = vmul.f32 %v473, -2.0
    %v1498 = vmul.f32 %v474, -2.0
    %v1499 = vmul.f32 %v475, -2.0
    %v1500 = vmul.f32 %v476, -2.0
    %v1501 = vmul.f32 %v477, -2.0
    %v1502 = vmul.f32 %v478, -2.0
    %v1503 = vmul.f32 %v479, -2.0
    %v1504 = vmul.f32 %v480, -2.0
    %v1505 = vmul.f32 %v481, -2.0
    %v1506 = vmul.f32 %v482, -2.0
    %v1507 = vmul.f32 %v483, -2.0
    %v1508 = vmul.f32 %v484, -2.0
    %v1509 = vmul.f32 %v485, -2.0
    %v1510 = vmul.f32 %v486, -2.0
    %v1511 = vmul.f32 %v487, -2.0
    %v1512 = vmul.f32 %v488, -2.0
    %v1513 = vmul.f32 %v489, -2.0
    %v1514 = vmul.f32 %v490, -2.0
    %v1515 = vmul.f32 %v491, -2.0
    %v1516 = vmul.f32 %v492, -2.0
    %v1517 = vmul.f32 %v493, -2.0
    %v1518 = vmul.f32 %v494, -2.0
    %v1519 = vmul.f32 %v495, -2.0
    %v1520 = vmul.f32 %v496, -2.0
    %v1521 = vmul.f32 %v497, -2.0
    %v1522 = vmul.f32 %v498, -2.0
    %v1523 = vmul.f32 %v499, -2.0
    %v1524 = vmul.f32 %v500, -2.0
    %v1525 = vmul.f32 %v501, -2.0
    %v1526 = vmul.f32 %v502, -2.0
    %v1527 = vmul.f32 %v503, -2.0
    %v1528 = vmul.f32 %v504, -2.0
    %v1529 = vmul.f32 %v505, -2.0
    %v1530 = vmul.f32 %v506, -2.0
    %v1531 = vmul.f32 %v507, -2.0
    %v1532 = vmul.f32 %v508, -2.0
    %v1533 = vmul.f32 %v509, -2.0
    %v1534 = vmul.f32 %v510, -2.0
    %v1535 = vmul.f32 %v511, -2.0
    %v1536 = vmul.f32 %v512, -2.0
    %v1537 = vmul.f32 %v513, -2.0
    %v1538 = vmul.f32 %v514, -2.0
    %v1539 = vmul.f32 %v515, -2.0
    %v1540 = vmul.f32 %v516, -2.0
    %v1541 = vmul.f32 %v517, -2.0
    %v1542 = vmul.f32 %v518, -2.0
    %v1543 = vmul.f32 %v519, -2.0
    %v1544 = vmul.f32 %v520, -2.0
    %v1545 = vmul.f32 %v521, -2.0
    %v1546 = vmul.f32 %v522, -2.0
    %v1547 = vmul.f32 %v523, -2.0
    %v1548 = vmul.f32 %v524, -2.0
    %v1549 = vmul.f32 %v525, -2.0
    %v1550 = vmul.f32 %v526, -2.0
    %v1551 = vmul.f32 %v527, -2.0
    %v1552 = vmul.f32 %v528, -2.0
    %v1553 = vmul.f32 %v529, -2.0
    %v1554 = vmul.f32 %v530, -2.0
    %v1555 = vmul.f32 %v531, -2.0
    %v1556 = vmul.f32 %v532, -2.0
    %v1557 = vmul.f32 %v533, -2.0
    %v1558 = vmul.f32 %v534, -2.0
    %v1559 = vmul.f32 %v535, -2.0
    %v1560 = vmul.f32 %v536, -2.0
    %v1561 = vmul.f32 %v537, -2.0
    %v1562 = vmul.f32 %v538, -2.0
    %v1563 = vmul.f32 %v539, -2.0
    %v1564 = vmul.f32 %v540, -2.0
    %v1565 = vmul.f32 %v541, -2.0
    %v1566 = vmul.f32 %v542, -2.0
    %v1567 = vmul.f32 %v543, -2.0
    %v1568 = vmul.f32 %v544, -2.0
    %v1569 = vmul.f32 %v545, -2.0
    %v1570 = vmul.f32 %v546, -2.0
    %v1571 = vmul.f32 %v547, -2.0
    %v1572 = vmul.f32 %v548, -2.0
    %v1573 = vmul.f32 %v549, -2.0
    %v1574 = vmul.f32 %v550, -2.0
    %v1575 = vmul.f32 %v551, -2.0
    %v1576 = vmul.f32 %v552, -2.0
    %v1577 = vmul.f32 %v553, -2.0
    %v1578 = vmul.f32 %v554, -2.0
    %v1579 = vmul.f32 %v555, -2.0
    %v1580 = vmul.f32 %v556, -2.0
    %v1581 = vmul.f32 %v557, -2.0
    %v1582 = vmul.f32 %v558, -2.0
    %v1583 = vmul.f32 %v559, -2.0
    %v1584 = vmul.f32 %v560, -2.0
    %v1585 = vmul.f32 %v561, -2.0
    %v1586 = vmul.f32 %v562, -2.0
    %v1587 = vmul.f32 %v563, -2.0
    %v1588 = vmul.f32 %v564, -2.0
    %v1589 = vmul.f32 %v565, -2.0
    %v1590 = vmul.f32 %v566, -2.0
    %v1591 = vmul.f32 %v567, -2.0
    %v1592 = vmul.f32 %v568, -2.0
    %v1593 = vmul.f32 %v569, -2.0
    %v1594 = vmul.f32 %v570, -2.0
    %v1595 = vmul.f32 %v571, -2.0
    %v1596 = vmul.f32 %v572, -2.0
    %v1597 = vmul.f32 %v573, -2.0
    %v1598 = vmul.f32 %v574, -2.0
    %v1599 = vmul.f32 %v575, -2.0
    %v1600 = vmul.f32 %v576, -2.0
    %v1601 = vmul.f32 %v577, -2.0
    %v1602 = vmul.f32 %v578, -2.0
    %v1603 = vmul.f32 %v579, -2.0
    %v1604 = vmul.f32 %v580, -2.0
    %v1605 = vmul.f32 %v581, -2.0
    %v1606 = vmul.f32 %v582, -2.0
    %v1607 = vmul.f32 %v583, -2.0
    %v1608 = vmul.f32 %v584, -2.0
    %v1609 = vmul.f32 %v585, -2.0
    %v1610 = vmul.f32 %v586, -2.0
    %v1611 = vmul.f32 %v587, -2.0
    %v1612 = vmul.f32 %v588, -2.0
    %v1613 = vmul.f32 %v589, -2.0
    %v1614 = vmul.f32 %v590, -2.0
    %v1615 = vsub.f32 %v1359, 0.6931472
    %v1616 = vsub.f32 %v1360, 0.6931472
    %v1617 = vsub.f32 %v1361, 0.6931472
    %v1618 = vsub.f32 %v1362, 0.6931472
    %v1619 = vsub.f32 %v1363, 0.6931472
    %v1620 = vsub.f32 %v1364, 0.6931472
    %v1621 = vsub.f32 %v1365, 0.6931472
    %v1622 = vsub.f32 %v1366, 0.6931472
    %v1623 = vsub.f32 %v1367, 0.6931472
    %v1624 = vsub.f32 %v1368, 0.6931472
    %v1625 = vsub.f32 %v1369, 0.6931472
    %v1626 = vsub.f32 %v1370, 0.6931472
    %v1627 = vsub.f32 %v1371, 0.6931472
    %v1628 = vsub.f32 %v1372, 0.6931472
    %v1629 = vsub.f32 %v1373, 0.6931472
    %v1630 = vsub.f32 %v1374, 0.6931472
    %v1631 = vsub.f32 %v1375, 0.6931472
    %v1632 = vsub.f32 %v1376, 0.6931472
    %v1633 = vsub.f32 %v1377, 0.6931472
    %v1634 = vsub.f32 %v1378, 0.6931472
    %v1635 = vsub.f32 %v1379, 0.6931472
    %v1636 = vsub.f32 %v1380, 0.6931472
    %v1637 = vsub.f32 %v1381, 0.6931472
    %v1638 = vsub.f32 %v1382, 0.6931472
    %v1639 = vsub.f32 %v1383, 0.6931472
    %v1640 = vsub.f32 %v1384, 0.6931472
    %v1641 = vsub.f32 %v1385, 0.6931472
    %v1642 = vsub.f32 %v1386, 0.6931472
    %v1643 = vsub.f32 %v1387, 0.6931472
    %v1644 = vsub.f32 %v1388, 0.6931472
    %v1645 = vsub.f32 %v1389, 0.6931472
    %v1646 = vsub.f32 %v1390, 0.6931472
    %v1647 = vsub.f32 %v1391, 0.6931472
    %v1648 = vsub.f32 %v1392, 0.6931472
    %v1649 = vsub.f32 %v1393, 0.6931472
    %v1650 = vsub.f32 %v1394, 0.6931472
    %v1651 = vsub.f32 %v1395, 0.6931472
    %v1652 = vsub.f32 %v1396, 0.6931472
    %v1653 = vsub.f32 %v1397, 0.6931472
    %v1654 = vsub.f32 %v1398, 0.6931472
    %v1655 = vsub.f32 %v1399, 0.6931472
    %v1656 = vsub.f32 %v1400, 0.6931472
    %v1657 = vsub.f32 %v1401, 0.6931472
    %v1658 = vsub.f32 %v1402, 0.6931472
    %v1659 = vsub.f32 %v1403, 0.6931472
    %v1660 = vsub.f32 %v1404, 0.6931472
    %v1661 = vsub.f32 %v1405, 0.6931472
    %v1662 = vsub.f32 %v1406, 0.6931472
    %v1663 = vsub.f32 %v1407, 0.6931472
    %v1664 = vsub.f32 %v1408, 0.6931472
    %v1665 = vsub.f32 %v1409, 0.6931472
    %v1666 = vsub.f32 %v1410, 0.6931472
    %v1667 = vsub.f32 %v1411, 0.6931472
    %v1668 = vsub.f32 %v1412, 0.6931472
    %v1669 = vsub.f32 %v1413, 0.6931472
    %v1670 = vsub.f32 %v1414, 0.6931472
    %v1671 = vsub.f32 %v1415, 0.6931472
    %v1672 = vsub.f32 %v1416, 0.6931472
    %v1673 = vsub.f32 %v1417, 0.6931472
    %v1674 = vsub.f32 %v1418, 0.6931472
    %v1675 = vsub.f32 %v1419, 0.6931472
    %v1676 = vsub.f32 %v1420, 0.6931472
    %v1677 = vsub.f32 %v1421, 0.6931472
    %v1678 = vsub.f32 %v1422, 0.6931472
    %v1679 = vsub.f32 %v1423, 0.6931472
    %v1680 = vsub.f32 %v1424, 0.6931472
    %v1681 = vsub.f32 %v1425, 0.6931472
    %v1682 = vsub.f32 %v1426, 0.6931472
    %v1683 = vsub.f32 %v1427, 0.6931472
    %v1684 = vsub.f32 %v1428, 0.6931472
    %v1685 = vsub.f32 %v1429, 0.6931472
    %v1686 = vsub.f32 %v1430, 0.6931472
    %v1687 = vsub.f32 %v1431, 0.6931472
    %v1688 = vsub.f32 %v1432, 0.6931472
    %v1689 = vsub.f32 %v1433, 0.6931472
    %v1690 = vsub.f32 %v1434, 0.6931472
    %v1691 = vsub.f32 %v1435, 0.6931472
    %v1692 = vsub.f32 %v1436, 0.6931472
    %v1693 = vsub.f32 %v1437, 0.6931472
    %v1694 = vsub.f32 %v1438, 0.6931472
    %v1695 = vsub.f32 %v1439, 0.6931472
    %v1696 = vsub.f32 %v1440, 0.6931472
    %v1697 = vsub.f32 %v1441, 0.6931472
    %v1698 = vsub.f32 %v1442, 0.6931472
    %v1699 = vsub.f32 %v1443, 0.6931472
    %v1700 = vsub.f32 %v1444, 0.6931472
    %v1701 = vsub.f32 %v1445, 0.6931472
    %v1702 = vsub.f32 %v1446, 0.6931472
    %v1703 = vsub.f32 %v1447, 0.6931472
    %v1704 = vsub.f32 %v1448, 0.6931472
    %v1705 = vsub.f32 %v1449, 0.6931472
    %v1706 = vsub.f32 %v1450, 0.6931472
    %v1707 = vsub.f32 %v1451, 0.6931472
    %v1708 = vsub.f32 %v1452, 0.6931472
    %v1709 = vsub.f32 %v1453, 0.6931472
    %v1710 = vsub.f32 %v1454, 0.6931472
    %v1711 = vsub.f32 %v1455, 0.6931472
    %v1712 = vsub.f32 %v1456, 0.6931472
    %v1713 = vsub.f32 %v1457, 0.6931472
    %v1714 = vsub.f32 %v1458, 0.6931472
    %v1715 = vsub.f32 %v1459, 0.6931472
    %v1716 = vsub.f32 %v1460, 0.6931472
    %v1717 = vsub.f32 %v1461, 0.6931472
    %v1718 = vsub.f32 %v1462, 0.6931472
    %v1719 = vsub.f32 %v1463, 0.6931472
    %v1720 = vsub.f32 %v1464, 0.6931472
    %v1721 = vsub.f32 %v1465, 0.6931472
    %v1722 = vsub.f32 %v1466, 0.6931472
    %v1723 = vsub.f32 %v1467, 0.6931472
    %v1724 = vsub.f32 %v1468, 0.6931472
    %v1725 = vsub.f32 %v1469, 0.6931472
    %v1726 = vsub.f32 %v1470, 0.6931472
    %v1727 = vsub.f32 %v1471, 0.6931472
    %v1728 = vsub.f32 %v1472, 0.6931472
    %v1729 = vsub.f32 %v1473, 0.6931472
    %v1730 = vsub.f32 %v1474, 0.6931472
    %v1731 = vsub.f32 %v1475, 0.6931472
    %v1732 = vsub.f32 %v1476, 0.6931472
    %v1733 = vsub.f32 %v1477, 0.6931472
    %v1734 = vsub.f32 %v1478, 0.6931472
    %v1735 = vsub.f32 %v1479, 0.6931472
    %v1736 = vsub.f32 %v1480, 0.6931472
    %v1737 = vsub.f32 %v1481, 0.6931472
    %v1738 = vsub.f32 %v1482, 0.6931472
    %v1739 = vsub.f32 %v1483, 0.6931472
    %v1740 = vsub.f32 %v1484, 0.6931472
    %v1741 = vsub.f32 %v1485, 0.6931472
    %v1742 = vsub.f32 %v1486, 0.6931472
    %v1743 = vsub.f32 %v1487, 0.6931472
    %v1744 = vsub.f32 %v1488, 0.6931472
    %v1745 = vsub.f32 %v1489, 0.6931472
    %v1746 = vsub.f32 %v1490, 0.6931472
    %v1747 = vsub.f32 %v1491, 0.6931472
    %v1748 = vsub.f32 %v1492, 0.6931472
    %v1749 = vsub.f32 %v1493, 0.6931472
    %v1750 = vsub.f32 %v1494, 0.6931472
    %v1751 = vsub.f32 %v1495, 0.6931472
    %v1752 = vsub.f32 %v1496, 0.6931472
    %v1753 = vsub.f32 %v1497, 0.6931472
    %v1754 = vsub.f32 %v1498, 0.6931472
    %v1755 = vsub.f32 %v1499, 0.6931472
    %v1756 = vsub.f32 %v1500, 0.6931472
    %v1757 = vsub.f32 %v1501, 0.6931472
    %v1758 = vsub.f32 %v1502, 0.6931472
    %v1759 = vsub.f32 %v1503, 0.6931472
    %v1760 = vsub.f32 %v1504, 0.6931472
    %v1761 = vsub.f32 %v1505, 0.6931472
    %v1762 = vsub.f32 %v1506, 0.6931472
    %v1763 = vsub.f32 %v1507, 0.6931472
    %v1764 = vsub.f32 %v1508, 0.6931472
    %v1765 = vsub.f32 %v1509, 0.6931472
    %v1766 = vsub.f32 %v1510, 0.6931472
    %v1767 = vsub.f32 %v1511, 0.6931472
    %v1768 = vsub.f32 %v1512, 0.6931472
    %v1769 = vsub.f32 %v1513, 0.6931472
    %v1770 = vsub.f32 %v1514, 0.6931472
    %v1771 = vsub.f32 %v1515, 0.6931472
    %v1772 = vsub.f32 %v1516, 0.6931472
    %v1773 = vsub.f32 %v1517, 0.6931472
    %v1774 = vsub.f32 %v1518, 0.6931472
    %v1775 = vsub.f32 %v1519, 0.6931472
    %v1776 = vsub.f32 %v1520, 0.6931472
    %v1777 = vsub.f32 %v1521, 0.6931472
    %v1778 = vsub.f32 %v1522, 0.6931472
    %v1779 = vsub.f32 %v1523, 0.6931472
    %v1780 = vsub.f32 %v1524, 0.6931472
    %v1781 = vsub.f32 %v1525, 0.6931472
    %v1782 = vsub.f32 %v1526, 0.6931472
    %v1783 = vsub.f32 %v1527, 0.6931472
    %v1784 = vsub.f32 %v1528, 0.6931472
    %v1785 = vsub.f32 %v1529, 0.6931472
    %v1786 = vsub.f32 %v1530, 0.6931472
    %v1787 = vsub.f32 %v1531, 0.6931472
    %v1788 = vsub.f32 %v1532, 0.6931472
    %v1789 = vsub.f32 %v1533, 0.6931472
    %v1790 = vsub.f32 %v1534, 0.6931472
    %v1791 = vsub.f32 %v1535, 0.6931472
    %v1792 = vsub.f32 %v1536, 0.6931472
    %v1793 = vsub.f32 %v1537, 0.6931472
    %v1794 = vsub.f32 %v1538, 0.6931472
    %v1795 = vsub.f32 %v1539, 0.6931472
    %v1796 = vsub.f32 %v1540, 0.6931472
    %v1797 = vsub.f32 %v1541, 0.6931472
    %v1798 = vsub.f32 %v1542, 0.6931472
    %v1799 = vsub.f32 %v1543, 0.6931472
    %v1800 = vsub.f32 %v1544, 0.6931472
    %v1801 = vsub.f32 %v1545, 0.6931472
    %v1802 = vsub.f32 %v1546, 0.6931472
    %v1803 = vsub.f32 %v1547, 0.6931472
    %v1804 = vsub.f32 %v1548, 0.6931472
    %v1805 = vsub.f32 %v1549, 0.6931472
    %v1806 = vsub.f32 %v1550, 0.6931472
    %v1807 = vsub.f32 %v1551, 0.6931472
    %v1808 = vsub.f32 %v1552, 0.6931472
    %v1809 = vsub.f32 %v1553, 0.6931472
    %v1810 = vsub.f32 %v1554, 0.6931472
    %v1811 = vsub.f32 %v1555, 0.6931472
    %v1812 = vsub.f32 %v1556, 0.6931472
    %v1813 = vsub.f32 %v1557, 0.6931472
    %v1814 = vsub.f32 %v1558, 0.6931472
    %v1815 = vsub.f32 %v1559, 0.6931472
    %v1816 = vsub.f32 %v1560, 0.6931472
    %v1817 = vsub.f32 %v1561, 0.6931472
    %v1818 = vsub.f32 %v1562, 0.6931472
    %v1819 = vsub.f32 %v1563, 0.6931472
    %v1820 = vsub.f32 %v1564, 0.6931472
    %v1821 = vsub.f32 %v1565, 0.6931472
    %v1822 = vsub.f32 %v1566, 0.6931472
    %v1823 = vsub.f32 %v1567, 0.6931472
    %v1824 = vsub.f32 %v1568, 0.6931472
    %v1825 = vsub.f32 %v1569, 0.6931472
    %v1826 = vsub.f32 %v1570, 0.6931472
    %v1827 = vsub.f32 %v1571, 0.6931472
    %v1828 = vsub.f32 %v1572, 0.6931472
    %v1829 = vsub.f32 %v1573, 0.6931472
    %v1830 = vsub.f32 %v1574, 0.6931472
    %v1831 = vsub.f32 %v1575, 0.6931472
    %v1832 = vsub.f32 %v1576, 0.6931472
    %v1833 = vsub.f32 %v1577, 0.6931472
    %v1834 = vsub.f32 %v1578, 0.6931472
    %v1835 = vsub.f32 %v1579, 0.6931472
    %v1836 = vsub.f32 %v1580, 0.6931472
    %v1837 = vsub.f32 %v1581, 0.6931472
    %v1838 = vsub.f32 %v1582, 0.6931472
    %v1839 = vsub.f32 %v1583, 0.6931472
    %v1840 = vsub.f32 %v1584, 0.6931472
    %v1841 = vsub.f32 %v1585, 0.6931472
    %v1842 = vsub.f32 %v1586, 0.6931472
    %v1843 = vsub.f32 %v1587, 0.6931472
    %v1844 = vsub.f32 %v1588, 0.6931472
    %v1845 = vsub.f32 %v1589, 0.6931472
    %v1846 = vsub.f32 %v1590, 0.6931472
    %v1847 = vsub.f32 %v1591, 0.6931472
    %v1848 = vsub.f32 %v1592, 0.6931472
    %v1849 = vsub.f32 %v1593, 0.6931472
    %v1850 = vsub.f32 %v1594, 0.6931472
    %v1851 = vsub.f32 %v1595, 0.6931472
    %v1852 = vsub.f32 %v1596, 0.6931472
    %v1853 = vsub.f32 %v1597, 0.6931472
    %v1854 = vsub.f32 %v1598, 0.6931472
    %v1855 = vsub.f32 %v1599, 0.6931472
    %v1856 = vsub.f32 %v1600, 0.6931472
    %v1857 = vsub.f32 %v1601, 0.6931472
    %v1858 = vsub.f32 %v1602, 0.6931472
    %v1859 = vsub.f32 %v1603, 0.6931472
    %v1860 = vsub.f32 %v1604, 0.6931472
    %v1861 = vsub.f32 %v1605, 0.6931472
    %v1862 = vsub.f32 %v1606, 0.6931472
    %v1863 = vsub.f32 %v1607, 0.6931472
    %v1864 = vsub.f32 %v1608, 0.6931472
    %v1865 = vsub.f32 %v1609, 0.6931472
    %v1866 = vsub.f32 %v1610, 0.6931472
    %v1867 = vsub.f32 %v1611, 0.6931472
    %v1868 = vsub.f32 %v1612, 0.6931472
    %v1869 = vsub.f32 %v1613, 0.6931472
    %v1870 = vsub.f32 %v1614, 0.6931472
    %v1871 = vmul.f32 %v1615, 1.442695
    %v1872 = vpow.pop %v1871
    %v1873 = vmul.f32 %v1616, 1.442695
    %v1874 = vpow.pop %v1873
    %v1875 = vmul.f32 %v1617, 1.442695
    %v1876 = vpow.pop %v1875
    %v1877 = vmul.f32 %v1618, 1.442695
    %v1878 = vpow.pop %v1877
    %v1879 = vmul.f32 %v1619, 1.442695
    %v1880 = vpow.pop %v1879
    %v1881 = vmul.f32 %v1620, 1.442695
    %v1882 = vpow.pop %v1881
    %v1883 = vmul.f32 %v1621, 1.442695
    %v1884 = vpow.pop %v1883
    %v1885 = vmul.f32 %v1622, 1.442695
    %v1886 = vpow.pop %v1885
    %v1887 = vmul.f32 %v1623, 1.442695
    %v1888 = vpow.pop %v1887
    %v1889 = vmul.f32 %v1624, 1.442695
    %v1890 = vpow.pop %v1889
    %v1891 = vmul.f32 %v1625, 1.442695
    %v1892 = vpow.pop %v1891
    %v1893 = vmul.f32 %v1626, 1.442695
    %v1894 = vpow.pop %v1893
    %v1895 = vmul.f32 %v1627, 1.442695
    %v1896 = vpow.pop %v1895
    %v1897 = vmul.f32 %v1628, 1.442695
    %v1898 = vpow.pop %v1897
    %v1899 = vmul.f32 %v1629, 1.442695
    %v1900 = vpow.pop %v1899
    %v1901 = vmul.f32 %v1630, 1.442695
    %v1902 = vpow.pop %v1901
    %v1903 = vmul.f32 %v1631, 1.442695
    %v1904 = vpow.pop %v1903
    %v1905 = vmul.f32 %v1632, 1.442695
    %v1906 = vpow.pop %v1905
    %v1907 = vmul.f32 %v1633, 1.442695
    %v1908 = vpow.pop %v1907
    %v1909 = vmul.f32 %v1634, 1.442695
    %v1910 = vpow.pop %v1909
    %v1911 = vmul.f32 %v1635, 1.442695
    %v1912 = vpow.pop %v1911
    %v1913 = vmul.f32 %v1636, 1.442695
    %v1914 = vpow.pop %v1913
    %v1915 = vmul.f32 %v1637, 1.442695
    %v1916 = vpow.pop %v1915
    %v1917 = vmul.f32 %v1638, 1.442695
    %v1918 = vpow.pop %v1917
    %v1919 = vmul.f32 %v1639, 1.442695
    %v1920 = vpow.pop %v1919
    %v1921 = vmul.f32 %v1640, 1.442695
    %v1922 = vpow.pop %v1921
    %v1923 = vmul.f32 %v1641, 1.442695
    %v1924 = vpow.pop %v1923
    %v1925 = vmul.f32 %v1642, 1.442695
    %v1926 = vpow.pop %v1925
    %v1927 = vmul.f32 %v1643, 1.442695
    %v1928 = vpow.pop %v1927
    %v1929 = vmul.f32 %v1644, 1.442695
    %v1930 = vpow.pop %v1929
    %v1931 = vmul.f32 %v1645, 1.442695
    %v1932 = vpow.pop %v1931
    %v1933 = vmul.f32 %v1646, 1.442695
    %v1934 = vpow.pop %v1933
    %v1935 = vmul.f32 %v1647, 1.442695
    %v1936 = vpow.pop %v1935
    %v1937 = vmul.f32 %v1648, 1.442695
    %v1938 = vpow.pop %v1937
    %v1939 = vmul.f32 %v1649, 1.442695
    %v1940 = vpow.pop %v1939
    %v1941 = vmul.f32 %v1650, 1.442695
    %v1942 = vpow.pop %v1941
    %v1943 = vmul.f32 %v1651, 1.442695
    %v1944 = vpow.pop %v1943
    %v1945 = vmul.f32 %v1652, 1.442695
    %v1946 = vpow.pop %v1945
    %v1947 = vmul.f32 %v1653, 1.442695
    %v1948 = vpow.pop %v1947
    %v1949 = vmul.f32 %v1654, 1.442695
    %v1950 = vpow.pop %v1949
    %v1951 = vmul.f32 %v1655, 1.442695
    %v1952 = vpow.pop %v1951
    %v1953 = vmul.f32 %v1656, 1.442695
    %v1954 = vpow.pop %v1953
    %v1955 = vmul.f32 %v1657, 1.442695
    %v1956 = vpow.pop %v1955
    %v1957 = vmul.f32 %v1658, 1.442695
    %v1958 = vpow.pop %v1957
    %v1959 = vmul.f32 %v1659, 1.442695
    %v1960 = vpow.pop %v1959
    %v1961 = vmul.f32 %v1660, 1.442695
    %v1962 = vpow.pop %v1961
    %v1963 = vmul.f32 %v1661, 1.442695
    %v1964 = vpow.pop %v1963
    %v1965 = vmul.f32 %v1662, 1.442695
    %v1966 = vpow.pop %v1965
    %v1967 = vmul.f32 %v1663, 1.442695
    %v1968 = vpow.pop %v1967
    %v1969 = vmul.f32 %v1664, 1.442695
    %v1970 = vpow.pop %v1969
    %v1971 = vmul.f32 %v1665, 1.442695
    %v1972 = vpow.pop %v1971
    %v1973 = vmul.f32 %v1666, 1.442695
    %v1974 = vpow.pop %v1973
    %v1975 = vmul.f32 %v1667, 1.442695
    %v1976 = vpow.pop %v1975
    %v1977 = vmul.f32 %v1668, 1.442695
    %v1978 = vpow.pop %v1977
    %v1979 = vmul.f32 %v1669, 1.442695
    %v1980 = vpow.pop %v1979
    %v1981 = vmul.f32 %v1670, 1.442695
    %v1982 = vpow.pop %v1981
    %v1983 = vmul.f32 %v1671, 1.442695
    %v1984 = vpow.pop %v1983
    %v1985 = vmul.f32 %v1672, 1.442695
    %v1986 = vpow.pop %v1985
    %v1987 = vmul.f32 %v1673, 1.442695
    %v1988 = vpow.pop %v1987
    %v1989 = vmul.f32 %v1674, 1.442695
    %v1990 = vpow.pop %v1989
    %v1991 = vmul.f32 %v1675, 1.442695
    %v1992 = vpow.pop %v1991
    %v1993 = vmul.f32 %v1676, 1.442695
    %v1994 = vpow.pop %v1993
    %v1995 = vmul.f32 %v1677, 1.442695
    %v1996 = vpow.pop %v1995
    %v1997 = vmul.f32 %v1678, 1.442695
    %v1998 = vpow.pop %v1997
    %v1999 = vmul.f32 %v1679, 1.442695
    %v2000 = vpow.pop %v1999
    %v2001 = vmul.f32 %v1680, 1.442695
    %v2002 = vpow.pop %v2001
    %v2003 = vmul.f32 %v1681, 1.442695
    %v2004 = vpow.pop %v2003
    %v2005 = vmul.f32 %v1682, 1.442695
    %v2006 = vpow.pop %v2005
    %v2007 = vmul.f32 %v1683, 1.442695
    %v2008 = vpow.pop %v2007
    %v2009 = vmul.f32 %v1684, 1.442695
    %v2010 = vpow.pop %v2009
    %v2011 = vmul.f32 %v1685, 1.442695
    %v2012 = vpow.pop %v2011
    %v2013 = vmul.f32 %v1686, 1.442695
    %v2014 = vpow.pop %v2013
    %v2015 = vmul.f32 %v1687, 1.442695
    %v2016 = vpow.pop %v2015
    %v2017 = vmul.f32 %v1688, 1.442695
    %v2018 = vpow.pop %v2017
    %v2019 = vmul.f32 %v1689, 1.442695
    %v2020 = vpow.pop %v2019
    %v2021 = vmul.f32 %v1690, 1.442695
    %v2022 = vpow.pop %v2021
    %v2023 = vmul.f32 %v1691, 1.442695
    %v2024 = vpow.pop %v2023
    %v2025 = vmul.f32 %v1692, 1.442695
    %v2026 = vpow.pop %v2025
    %v2027 = vmul.f32 %v1693, 1.442695
    %v2028 = vpow.pop %v2027
    %v2029 = vmul.f32 %v1694, 1.442695
    %v2030 = vpow.pop %v2029
    %v2031 = vmul.f32 %v1695, 1.442695
    %v2032 = vpow.pop %v2031
    %v2033 = vmul.f32 %v1696, 1.442695
    %v2034 = vpow.pop %v2033
    %v2035 = vmul.f32 %v1697, 1.442695
    %v2036 = vpow.pop %v2035
    %v2037 = vmul.f32 %v1698, 1.442695
    %v2038 = vpow.pop %v2037
    %v2039 = vmul.f32 %v1699, 1.442695
    %v2040 = vpow.pop %v2039
    %v2041 = vmul.f32 %v1700, 1.442695
    %v2042 = vpow.pop %v2041
    %v2043 = vmul.f32 %v1701, 1.442695
    %v2044 = vpow.pop %v2043
    %v2045 = vmul.f32 %v1702, 1.442695
    %v2046 = vpow.pop %v2045
    %v2047 = vmul.f32 %v1703, 1.442695
    %v2048 = vpow.pop %v2047
    %v2049 = vmul.f32 %v1704, 1.442695
    %v2050 = vpow.pop %v2049
    %v2051 = vmul.f32 %v1705, 1.442695
    %v2052 = vpow.pop %v2051
    %v2053 = vmul.f32 %v1706, 1.442695
    %v2054 = vpow.pop %v2053
    %v2055 = vmul.f32 %v1707, 1.442695
    %v2056 = vpow.pop %v2055
    %v2057 = vmul.f32 %v1708, 1.442695
    %v2058 = vpow.pop %v2057
    %v2059 = vmul.f32 %v1709, 1.442695
    %v2060 = vpow.pop %v2059
    %v2061 = vmul.f32 %v1710, 1.442695
    %v2062 = vpow.pop %v2061
    %v2063 = vmul.f32 %v1711, 1.442695
    %v2064 = vpow.pop %v2063
    %v2065 = vmul.f32 %v1712, 1.442695
    %v2066 = vpow.pop %v2065
    %v2067 = vmul.f32 %v1713, 1.442695
    %v2068 = vpow.pop %v2067
    %v2069 = vmul.f32 %v1714, 1.442695
    %v2070 = vpow.pop %v2069
    %v2071 = vmul.f32 %v1715, 1.442695
    %v2072 = vpow.pop %v2071
    %v2073 = vmul.f32 %v1716, 1.442695
    %v2074 = vpow.pop %v2073
    %v2075 = vmul.f32 %v1717, 1.442695
    %v2076 = vpow.pop %v2075
    %v2077 = vmul.f32 %v1718, 1.442695
    %v2078 = vpow.pop %v2077
    %v2079 = vmul.f32 %v1719, 1.442695
    %v2080 = vpow.pop %v2079
    %v2081 = vmul.f32 %v1720, 1.442695
    %v2082 = vpow.pop %v2081
    %v2083 = vmul.f32 %v1721, 1.442695
    %v2084 = vpow.pop %v2083
    %v2085 = vmul.f32 %v1722, 1.442695
    %v2086 = vpow.pop %v2085
    %v2087 = vmul.f32 %v1723, 1.442695
    %v2088 = vpow.pop %v2087
    %v2089 = vmul.f32 %v1724, 1.442695
    %v2090 = vpow.pop %v2089
    %v2091 = vmul.f32 %v1725, 1.442695
    %v2092 = vpow.pop %v2091
    %v2093 = vmul.f32 %v1726, 1.442695
    %v2094 = vpow.pop %v2093
    %v2095 = vmul.f32 %v1727, 1.442695
    %v2096 = vpow.pop %v2095
    %v2097 = vmul.f32 %v1728, 1.442695
    %v2098 = vpow.pop %v2097
    %v2099 = vmul.f32 %v1729, 1.442695
    %v2100 = vpow.pop %v2099
    %v2101 = vmul.f32 %v1730, 1.442695
    %v2102 = vpow.pop %v2101
    %v2103 = vmul.f32 %v1731, 1.442695
    %v2104 = vpow.pop %v2103
    %v2105 = vmul.f32 %v1732, 1.442695
    %v2106 = vpow.pop %v2105
    %v2107 = vmul.f32 %v1733, 1.442695
    %v2108 = vpow.pop %v2107
    %v2109 = vmul.f32 %v1734, 1.442695
    %v2110 = vpow.pop %v2109
    %v2111 = vmul.f32 %v1735, 1.442695
    %v2112 = vpow.pop %v2111
    %v2113 = vmul.f32 %v1736, 1.442695
    %v2114 = vpow.pop %v2113
    %v2115 = vmul.f32 %v1737, 1.442695
    %v2116 = vpow.pop %v2115
    %v2117 = vmul.f32 %v1738, 1.442695
    %v2118 = vpow.pop %v2117
    %v2119 = vmul.f32 %v1739, 1.442695
    %v2120 = vpow.pop %v2119
    %v2121 = vmul.f32 %v1740, 1.442695
    %v2122 = vpow.pop %v2121
    %v2123 = vmul.f32 %v1741, 1.442695
    %v2124 = vpow.pop %v2123
    %v2125 = vmul.f32 %v1742, 1.442695
    %v2126 = vpow.pop %v2125
    %v2127 = vmul.f32 %v1743, 1.442695
    %v2128 = vpow.pop %v2127
    %v2129 = vmul.f32 %v1744, 1.442695
    %v2130 = vpow.pop %v2129
    %v2131 = vmul.f32 %v1745, 1.442695
    %v2132 = vpow.pop %v2131
    %v2133 = vmul.f32 %v1746, 1.442695
    %v2134 = vpow.pop %v2133
    %v2135 = vmul.f32 %v1747, 1.442695
    %v2136 = vpow.pop %v2135
    %v2137 = vmul.f32 %v1748, 1.442695
    %v2138 = vpow.pop %v2137
    %v2139 = vmul.f32 %v1749, 1.442695
    %v2140 = vpow.pop %v2139
    %v2141 = vmul.f32 %v1750, 1.442695
    %v2142 = vpow.pop %v2141
    %v2143 = vmul.f32 %v1751, 1.442695
    %v2144 = vpow.pop %v2143
    %v2145 = vmul.f32 %v1752, 1.442695
    %v2146 = vpow.pop %v2145
    %v2147 = vmul.f32 %v1753, 1.442695
    %v2148 = vpow.pop %v2147
    %v2149 = vmul.f32 %v1754, 1.442695
    %v2150 = vpow.pop %v2149
    %v2151 = vmul.f32 %v1755, 1.442695
    %v2152 = vpow.pop %v2151
    %v2153 = vmul.f32 %v1756, 1.442695
    %v2154 = vpow.pop %v2153
    %v2155 = vmul.f32 %v1757, 1.442695
    %v2156 = vpow.pop %v2155
    %v2157 = vmul.f32 %v1758, 1.442695
    %v2158 = vpow.pop %v2157
    %v2159 = vmul.f32 %v1759, 1.442695
    %v2160 = vpow.pop %v2159
    %v2161 = vmul.f32 %v1760, 1.442695
    %v2162 = vpow.pop %v2161
    %v2163 = vmul.f32 %v1761, 1.442695
    %v2164 = vpow.pop %v2163
    %v2165 = vmul.f32 %v1762, 1.442695
    %v2166 = vpow.pop %v2165
    %v2167 = vmul.f32 %v1763, 1.442695
    %v2168 = vpow.pop %v2167
    %v2169 = vmul.f32 %v1764, 1.442695
    %v2170 = vpow.pop %v2169
    %v2171 = vmul.f32 %v1765, 1.442695
    %v2172 = vpow.pop %v2171
    %v2173 = vmul.f32 %v1766, 1.442695
    %v2174 = vpow.pop %v2173
    %v2175 = vmul.f32 %v1767, 1.442695
    %v2176 = vpow.pop %v2175
    %v2177 = vmul.f32 %v1768, 1.442695
    %v2178 = vpow.pop %v2177
    %v2179 = vmul.f32 %v1769, 1.442695
    %v2180 = vpow.pop %v2179
    %v2181 = vmul.f32 %v1770, 1.442695
    %v2182 = vpow.pop %v2181
    %v2183 = vmul.f32 %v1771, 1.442695
    %v2184 = vpow.pop %v2183
    %v2185 = vmul.f32 %v1772, 1.442695
    %v2186 = vpow.pop %v2185
    %v2187 = vmul.f32 %v1773, 1.442695
    %v2188 = vpow.pop %v2187
    %v2189 = vmul.f32 %v1774, 1.442695
    %v2190 = vpow.pop %v2189
    %v2191 = vmul.f32 %v1775, 1.442695
    %v2192 = vpow.pop %v2191
    %v2193 = vmul.f32 %v1776, 1.442695
    %v2194 = vpow.pop %v2193
    %v2195 = vmul.f32 %v1777, 1.442695
    %v2196 = vpow.pop %v2195
    %v2197 = vmul.f32 %v1778, 1.442695
    %v2198 = vpow.pop %v2197
    %v2199 = vmul.f32 %v1779, 1.442695
    %v2200 = vpow.pop %v2199
    %v2201 = vmul.f32 %v1780, 1.442695
    %v2202 = vpow.pop %v2201
    %v2203 = vmul.f32 %v1781, 1.442695
    %v2204 = vpow.pop %v2203
    %v2205 = vmul.f32 %v1782, 1.442695
    %v2206 = vpow.pop %v2205
    %v2207 = vmul.f32 %v1783, 1.442695
    %v2208 = vpow.pop %v2207
    %v2209 = vmul.f32 %v1784, 1.442695
    %v2210 = vpow.pop %v2209
    %v2211 = vmul.f32 %v1785, 1.442695
    %v2212 = vpow.pop %v2211
    %v2213 = vmul.f32 %v1786, 1.442695
    %v2214 = vpow.pop %v2213
    %v2215 = vmul.f32 %v1787, 1.442695
    %v2216 = vpow.pop %v2215
    %v2217 = vmul.f32 %v1788, 1.442695
    %v2218 = vpow.pop %v2217
    %v2219 = vmul.f32 %v1789, 1.442695
    %v2220 = vpow.pop %v2219
    %v2221 = vmul.f32 %v1790, 1.442695
    %v2222 = vpow.pop %v2221
    %v2223 = vmul.f32 %v1791, 1.442695
    %v2224 = vpow.pop %v2223
    %v2225 = vmul.f32 %v1792, 1.442695
    %v2226 = vpow.pop %v2225
    %v2227 = vmul.f32 %v1793, 1.442695
    %v2228 = vpow.pop %v2227
    %v2229 = vmul.f32 %v1794, 1.442695
    %v2230 = vpow.pop %v2229
    %v2231 = vmul.f32 %v1795, 1.442695
    %v2232 = vpow.pop %v2231
    %v2233 = vmul.f32 %v1796, 1.442695
    %v2234 = vpow.pop %v2233
    %v2235 = vmul.f32 %v1797, 1.442695
    %v2236 = vpow.pop %v2235
    %v2237 = vmul.f32 %v1798, 1.442695
    %v2238 = vpow.pop %v2237
    %v2239 = vmul.f32 %v1799, 1.442695
    %v2240 = vpow.pop %v2239
    %v2241 = vmul.f32 %v1800, 1.442695
    %v2242 = vpow.pop %v2241
    %v2243 = vmul.f32 %v1801, 1.442695
    %v2244 = vpow.pop %v2243
    %v2245 = vmul.f32 %v1802, 1.442695
    %v2246 = vpow.pop %v2245
    %v2247 = vmul.f32 %v1803, 1.442695
    %v2248 = vpow.pop %v2247
    %v2249 = vmul.f32 %v1804, 1.442695
    %v2250 = vpow.pop %v2249
    %v2251 = vmul.f32 %v1805, 1.442695
    %v2252 = vpow.pop %v2251
    %v2253 = vmul.f32 %v1806, 1.442695
    %v2254 = vpow.pop %v2253
    %v2255 = vmul.f32 %v1807, 1.442695
    %v2256 = vpow.pop %v2255
    %v2257 = vmul.f32 %v1808, 1.442695
    %v2258 = vpow.pop %v2257
    %v2259 = vmul.f32 %v1809, 1.442695
    %v2260 = vpow.pop %v2259
    %v2261 = vmul.f32 %v1810, 1.442695
    %v2262 = vpow.pop %v2261
    %v2263 = vmul.f32 %v1811, 1.442695
    %v2264 = vpow.pop %v2263
    %v2265 = vmul.f32 %v1812, 1.442695
    %v2266 = vpow.pop %v2265
    %v2267 = vmul.f32 %v1813, 1.442695
    %v2268 = vpow.pop %v2267
    %v2269 = vmul.f32 %v1814, 1.442695
    %v2270 = vpow.pop %v2269
    %v2271 = vmul.f32 %v1815, 1.442695
    %v2272 = vpow.pop %v2271
    %v2273 = vmul.f32 %v1816, 1.442695
    %v2274 = vpow.pop %v2273
    %v2275 = vmul.f32 %v1817, 1.442695
    %v2276 = vpow.pop %v2275
    %v2277 = vmul.f32 %v1818, 1.442695
    %v2278 = vpow.pop %v2277
    %v2279 = vmul.f32 %v1819, 1.442695
    %v2280 = vpow.pop %v2279
    %v2281 = vmul.f32 %v1820, 1.442695
    %v2282 = vpow.pop %v2281
    %v2283 = vmul.f32 %v1821, 1.442695
    %v2284 = vpow.pop %v2283
    %v2285 = vmul.f32 %v1822, 1.442695
    %v2286 = vpow.pop %v2285
    %v2287 = vmul.f32 %v1823, 1.442695
    %v2288 = vpow.pop %v2287
    %v2289 = vmul.f32 %v1824, 1.442695
    %v2290 = vpow.pop %v2289
    %v2291 = vmul.f32 %v1825, 1.442695
    %v2292 = vpow.pop %v2291
    %v2293 = vmul.f32 %v1826, 1.442695
    %v2294 = vpow.pop %v2293
    %v2295 = vmul.f32 %v1827, 1.442695
    %v2296 = vpow.pop %v2295
    %v2297 = vmul.f32 %v1828, 1.442695
    %v2298 = vpow.pop %v2297
    %v2299 = vmul.f32 %v1829, 1.442695
    %v2300 = vpow.pop %v2299
    %v2301 = vmul.f32 %v1830, 1.442695
    %v2302 = vpow.pop %v2301
    %v2303 = vmul.f32 %v1831, 1.442695
    %v2304 = vpow.pop %v2303
    %v2305 = vmul.f32 %v1832, 1.442695
    %v2306 = vpow.pop %v2305
    %v2307 = vmul.f32 %v1833, 1.442695
    %v2308 = vpow.pop %v2307
    %v2309 = vmul.f32 %v1834, 1.442695
    %v2310 = vpow.pop %v2309
    %v2311 = vmul.f32 %v1835, 1.442695
    %v2312 = vpow.pop %v2311
    %v2313 = vmul.f32 %v1836, 1.442695
    %v2314 = vpow.pop %v2313
    %v2315 = vmul.f32 %v1837, 1.442695
    %v2316 = vpow.pop %v2315
    %v2317 = vmul.f32 %v1838, 1.442695
    %v2318 = vpow.pop %v2317
    %v2319 = vmul.f32 %v1839, 1.442695
    %v2320 = vpow.pop %v2319
    %v2321 = vmul.f32 %v1840, 1.442695
    %v2322 = vpow.pop %v2321
    %v2323 = vmul.f32 %v1841, 1.442695
    %v2324 = vpow.pop %v2323
    %v2325 = vmul.f32 %v1842, 1.442695
    %v2326 = vpow.pop %v2325
    %v2327 = vmul.f32 %v1843, 1.442695
    %v2328 = vpow.pop %v2327
    %v2329 = vmul.f32 %v1844, 1.442695
    %v2330 = vpow.pop %v2329
    %v2331 = vmul.f32 %v1845, 1.442695
    %v2332 = vpow.pop %v2331
    %v2333 = vmul.f32 %v1846, 1.442695
    %v2334 = vpow.pop %v2333
    %v2335 = vmul.f32 %v1847, 1.442695
    %v2336 = vpow.pop %v2335
    %v2337 = vmul.f32 %v1848, 1.442695
    %v2338 = vpow.pop %v2337
    %v2339 = vmul.f32 %v1849, 1.442695
    %v2340 = vpow.pop %v2339
    %v2341 = vmul.f32 %v1850, 1.442695
    %v2342 = vpow.pop %v2341
    %v2343 = vmul.f32 %v1851, 1.442695
    %v2344 = vpow.pop %v2343
    %v2345 = vmul.f32 %v1852, 1.442695
    %v2346 = vpow.pop %v2345
    %v2347 = vmul.f32 %v1853, 1.442695
    %v2348 = vpow.pop %v2347
    %v2349 = vmul.f32 %v1854, 1.442695
    %v2350 = vpow.pop %v2349
    %v2351 = vmul.f32 %v1855, 1.442695
    %v2352 = vpow.pop %v2351
    %v2353 = vmul.f32 %v1856, 1.442695
    %v2354 = vpow.pop %v2353
    %v2355 = vmul.f32 %v1857, 1.442695
    %v2356 = vpow.pop %v2355
    %v2357 = vmul.f32 %v1858, 1.442695
    %v2358 = vpow.pop %v2357
    %v2359 = vmul.f32 %v1859, 1.442695
    %v2360 = vpow.pop %v2359
    %v2361 = vmul.f32 %v1860, 1.442695
    %v2362 = vpow.pop %v2361
    %v2363 = vmul.f32 %v1861, 1.442695
    %v2364 = vpow.pop %v2363
    %v2365 = vmul.f32 %v1862, 1.442695
    %v2366 = vpow.pop %v2365
    %v2367 = vmul.f32 %v1863, 1.442695
    %v2368 = vpow.pop %v2367
    %v2369 = vmul.f32 %v1864, 1.442695
    %v2370 = vpow.pop %v2369
    %v2371 = vmul.f32 %v1865, 1.442695
    %v2372 = vpow.pop %v2371
    %v2373 = vmul.f32 %v1866, 1.442695
    %v2374 = vpow.pop %v2373
    %v2375 = vmul.f32 %v1867, 1.442695
    %v2376 = vpow.pop %v2375
    %v2377 = vmul.f32 %v1868, 1.442695
    %v2378 = vpow.pop %v2377
    %v2379 = vmul.f32 %v1869, 1.442695
    %v2380 = vpow.pop %v2379
    %v2381 = vmul.f32 %v1870, 1.442695
    %v2382 = vpow.pop %v2381
    %v2383 = vmul.f32 %v1103, %v1872
    %v2384 = vmul.f32 %v1104, %v1874
    %v2385 = vmul.f32 %v1105, %v1876
    %v2386 = vmul.f32 %v1106, %v1878
    %v2387 = vmul.f32 %v1107, %v1880
    %v2388 = vmul.f32 %v1108, %v1882
    %v2389 = vmul.f32 %v1109, %v1884
    %v2390 = vmul.f32 %v1110, %v1886
    %v2391 = vmul.f32 %v1111, %v1888
    %v2392 = vmul.f32 %v1112, %v1890
    %v2393 = vmul.f32 %v1113, %v1892
    %v2394 = vmul.f32 %v1114, %v1894
    %v2395 = vmul.f32 %v1115, %v1896
    %v2396 = vmul.f32 %v1116, %v1898
    %v2397 = vmul.f32 %v1117, %v1900
    %v2398 = vmul.f32 %v1118, %v1902
    %v2399 = vmul.f32 %v1119, %v1904
    %v2400 = vmul.f32 %v1120, %v1906
    %v2401 = vmul.f32 %v1121, %v1908
    %v2402 = vmul.f32 %v1122, %v1910
    %v2403 = vmul.f32 %v1123, %v1912
    %v2404 = vmul.f32 %v1124, %v1914
    %v2405 = vmul.f32 %v1125, %v1916
    %v2406 = vmul.f32 %v1126, %v1918
    %v2407 = vmul.f32 %v1127, %v1920
    %v2408 = vmul.f32 %v1128, %v1922
    %v2409 = vmul.f32 %v1129, %v1924
    %v2410 = vmul.f32 %v1130, %v1926
    %v2411 = vmul.f32 %v1131, %v1928
    %v2412 = vmul.f32 %v1132, %v1930
    %v2413 = vmul.f32 %v1133, %v1932
    %v2414 = vmul.f32 %v1134, %v1934
    %v2415 = vmul.f32 %v1135, %v1936
    %v2416 = vmul.f32 %v1136, %v1938
    %v2417 = vmul.f32 %v1137, %v1940
    %v2418 = vmul.f32 %v1138, %v1942
    %v2419 = vmul.f32 %v1139, %v1944
    %v2420 = vmul.f32 %v1140, %v1946
    %v2421 = vmul.f32 %v1141, %v1948
    %v2422 = vmul.f32 %v1142, %v1950
    %v2423 = vmul.f32 %v1143, %v1952
    %v2424 = vmul.f32 %v1144, %v1954
    %v2425 = vmul.f32 %v1145, %v1956
    %v2426 = vmul.f32 %v1146, %v1958
    %v2427 = vmul.f32 %v1147, %v1960
    %v2428 = vmul.f32 %v1148, %v1962
    %v2429 = vmul.f32 %v1149, %v1964
    %v2430 = vmul.f32 %v1150, %v1966
    %v2431 = vmul.f32 %v1151, %v1968
    %v2432 = vmul.f32 %v1152, %v1970
    %v2433 = vmul.f32 %v1153, %v1972
    %v2434 = vmul.f32 %v1154, %v1974
    %v2435 = vmul.f32 %v1155, %v1976
    %v2436 = vmul.f32 %v1156, %v1978
    %v2437 = vmul.f32 %v1157, %v1980
    %v2438 = vmul.f32 %v1158, %v1982
    %v2439 = vmul.f32 %v1159, %v1984
    %v2440 = vmul.f32 %v1160, %v1986
    %v2441 = vmul.f32 %v1161, %v1988
    %v2442 = vmul.f32 %v1162, %v1990
    %v2443 = vmul.f32 %v1163, %v1992
    %v2444 = vmul.f32 %v1164, %v1994
    %v2445 = vmul.f32 %v1165, %v1996
    %v2446 = vmul.f32 %v1166, %v1998
    %v2447 = vmul.f32 %v1167, %v2000
    %v2448 = vmul.f32 %v1168, %v2002
    %v2449 = vmul.f32 %v1169, %v2004
    %v2450 = vmul.f32 %v1170, %v2006
    %v2451 = vmul.f32 %v1171, %v2008
    %v2452 = vmul.f32 %v1172, %v2010
    %v2453 = vmul.f32 %v1173, %v2012
    %v2454 = vmul.f32 %v1174, %v2014
    %v2455 = vmul.f32 %v1175, %v2016
    %v2456 = vmul.f32 %v1176, %v2018
    %v2457 = vmul.f32 %v1177, %v2020
    %v2458 = vmul.f32 %v1178, %v2022
    %v2459 = vmul.f32 %v1179, %v2024
    %v2460 = vmul.f32 %v1180, %v2026
    %v2461 = vmul.f32 %v1181, %v2028
    %v2462 = vmul.f32 %v1182, %v2030
    %v2463 = vmul.f32 %v1183, %v2032
    %v2464 = vmul.f32 %v1184, %v2034
    %v2465 = vmul.f32 %v1185, %v2036
    %v2466 = vmul.f32 %v1186, %v2038
    %v2467 = vmul.f32 %v1187, %v2040
    %v2468 = vmul.f32 %v1188, %v2042
    %v2469 = vmul.f32 %v1189, %v2044
    %v2470 = vmul.f32 %v1190, %v2046
    %v2471 = vmul.f32 %v1191, %v2048
    %v2472 = vmul.f32 %v1192, %v2050
    %v2473 = vmul.f32 %v1193, %v2052
    %v2474 = vmul.f32 %v1194, %v2054
    %v2475 = vmul.f32 %v1195, %v2056
    %v2476 = vmul.f32 %v1196, %v2058
    %v2477 = vmul.f32 %v1197, %v2060
    %v2478 = vmul.f32 %v1198, %v2062
    %v2479 = vmul.f32 %v1199, %v2064
    %v2480 = vmul.f32 %v1200, %v2066
    %v2481 = vmul.f32 %v1201, %v2068
    %v2482 = vmul.f32 %v1202, %v2070
    %v2483 = vmul.f32 %v1203, %v2072
    %v2484 = vmul.f32 %v1204, %v2074
    %v2485 = vmul.f32 %v1205, %v2076
    %v2486 = vmul.f32 %v1206, %v2078
    %v2487 = vmul.f32 %v1207, %v2080
    %v2488 = vmul.f32 %v1208, %v2082
    %v2489 = vmul.f32 %v1209, %v2084
    %v2490 = vmul.f32 %v1210, %v2086
    %v2491 = vmul.f32 %v1211, %v2088
    %v2492 = vmul.f32 %v1212, %v2090
    %v2493 = vmul.f32 %v1213, %v2092
    %v2494 = vmul.f32 %v1214, %v2094
    %v2495 = vmul.f32 %v1215, %v2096
    %v2496 = vmul.f32 %v1216, %v2098
    %v2497 = vmul.f32 %v1217, %v2100
    %v2498 = vmul.f32 %v1218, %v2102
    %v2499 = vmul.f32 %v1219, %v2104
    %v2500 = vmul.f32 %v1220, %v2106
    %v2501 = vmul.f32 %v1221, %v2108
    %v2502 = vmul.f32 %v1222, %v2110
    %v2503 = vmul.f32 %v1223, %v2112
    %v2504 = vmul.f32 %v1224, %v2114
    %v2505 = vmul.f32 %v1225, %v2116
    %v2506 = vmul.f32 %v1226, %v2118
    %v2507 = vmul.f32 %v1227, %v2120
    %v2508 = vmul.f32 %v1228, %v2122
    %v2509 = vmul.f32 %v1229, %v2124
    %v2510 = vmul.f32 %v1230, %v2126
    %v2511 = vmul.f32 %v1231, %v2128
    %v2512 = vmul.f32 %v1232, %v2130
    %v2513 = vmul.f32 %v1233, %v2132
    %v2514 = vmul.f32 %v1234, %v2134
    %v2515 = vmul.f32 %v1235, %v2136
    %v2516 = vmul.f32 %v1236, %v2138
    %v2517 = vmul.f32 %v1237, %v2140
    %v2518 = vmul.f32 %v1238, %v2142
    %v2519 = vmul.f32 %v1239, %v2144
    %v2520 = vmul.f32 %v1240, %v2146
    %v2521 = vmul.f32 %v1241, %v2148
    %v2522 = vmul.f32 %v1242, %v2150
    %v2523 = vmul.f32 %v1243, %v2152
    %v2524 = vmul.f32 %v1244, %v2154
    %v2525 = vmul.f32 %v1245, %v2156
    %v2526 = vmul.f32 %v1246, %v2158
    %v2527 = vmul.f32 %v1247, %v2160
    %v2528 = vmul.f32 %v1248, %v2162
    %v2529 = vmul.f32 %v1249, %v2164
    %v2530 = vmul.f32 %v1250, %v2166
    %v2531 = vmul.f32 %v1251, %v2168
    %v2532 = vmul.f32 %v1252, %v2170
    %v2533 = vmul.f32 %v1253, %v2172
    %v2534 = vmul.f32 %v1254, %v2174
    %v2535 = vmul.f32 %v1255, %v2176
    %v2536 = vmul.f32 %v1256, %v2178
    %v2537 = vmul.f32 %v1257, %v2180
    %v2538 = vmul.f32 %v1258, %v2182
    %v2539 = vmul.f32 %v1259, %v2184
    %v2540 = vmul.f32 %v1260, %v2186
    %v2541 = vmul.f32 %v1261, %v2188
    %v2542 = vmul.f32 %v1262, %v2190
    %v2543 = vmul.f32 %v1263, %v2192
    %v2544 = vmul.f32 %v1264, %v2194
    %v2545 = vmul.f32 %v1265, %v2196
    %v2546 = vmul.f32 %v1266, %v2198
    %v2547 = vmul.f32 %v1267, %v2200
    %v2548 = vmul.f32 %v1268, %v2202
    %v2549 = vmul.f32 %v1269, %v2204
    %v2550 = vmul.f32 %v1270, %v2206
    %v2551 = vmul.f32 %v1271, %v2208
    %v2552 = vmul.f32 %v1272, %v2210
    %v2553 = vmul.f32 %v1273, %v2212
    %v2554 = vmul.f32 %v1274, %v2214
    %v2555 = vmul.f32 %v1275, %v2216
    %v2556 = vmul.f32 %v1276, %v2218
    %v2557 = vmul.f32 %v1277, %v2220
    %v2558 = vmul.f32 %v1278, %v2222
    %v2559 = vmul.f32 %v1279, %v2224
    %v2560 = vmul.f32 %v1280, %v2226
    %v2561 = vmul.f32 %v1281, %v2228
    %v2562 = vmul.f32 %v1282, %v2230
    %v2563 = vmul.f32 %v1283, %v2232
    %v2564 = vmul.f32 %v1284, %v2234
    %v2565 = vmul.f32 %v1285, %v2236
    %v2566 = vmul.f32 %v1286, %v2238
    %v2567 = vmul.f32 %v1287, %v2240
    %v2568 = vmul.f32 %v1288, %v2242
    %v2569 = vmul.f32 %v1289, %v2244
    %v2570 = vmul.f32 %v1290, %v2246
    %v2571 = vmul.f32 %v1291, %v2248
    %v2572 = vmul.f32 %v1292, %v2250
    %v2573 = vmul.f32 %v1293, %v2252
    %v2574 = vmul.f32 %v1294, %v2254
    %v2575 = vmul.f32 %v1295, %v2256
    %v2576 = vmul.f32 %v1296, %v2258
    %v2577 = vmul.f32 %v1297, %v2260
    %v2578 = vmul.f32 %v1298, %v2262
    %v2579 = vmul.f32 %v1299, %v2264
    %v2580 = vmul.f32 %v1300, %v2266
    %v2581 = vmul.f32 %v1301, %v2268
    %v2582 = vmul.f32 %v1302, %v2270
    %v2583 = vmul.f32 %v1303, %v2272
    %v2584 = vmul.f32 %v1304, %v2274
    %v2585 = vmul.f32 %v1305, %v2276
    %v2586 = vmul.f32 %v1306, %v2278
    %v2587 = vmul.f32 %v1307, %v2280
    %v2588 = vmul.f32 %v1308, %v2282
    %v2589 = vmul.f32 %v1309, %v2284
    %v2590 = vmul.f32 %v1310, %v2286
    %v2591 = vmul.f32 %v1311, %v2288
    %v2592 = vmul.f32 %v1312, %v2290
    %v2593 = vmul.f32 %v1313, %v2292
    %v2594 = vmul.f32 %v1314, %v2294
    %v2595 = vmul.f32 %v1315, %v2296
    %v2596 = vmul.f32 %v1316, %v2298
    %v2597 = vmul.f32 %v1317, %v2300
    %v2598 = vmul.f32 %v1318, %v2302
    %v2599 = vmul.f32 %v1319, %v2304
    %v2600 = vmul.f32 %v1320, %v2306
    %v2601 = vmul.f32 %v1321, %v2308
    %v2602 = vmul.f32 %v1322, %v2310
    %v2603 = vmul.f32 %v1323, %v2312
    %v2604 = vmul.f32 %v1324, %v2314
    %v2605 = vmul.f32 %v1325, %v2316
    %v2606 = vmul.f32 %v1326, %v2318
    %v2607 = vmul.f32 %v1327, %v2320
    %v2608 = vmul.f32 %v1328, %v2322
    %v2609 = vmul.f32 %v1329, %v2324
    %v2610 = vmul.f32 %v1330, %v2326
    %v2611 = vmul.f32 %v1331, %v2328
    %v2612 = vmul.f32 %v1332, %v2330
    %v2613 = vmul.f32 %v1333, %v2332
    %v2614 = vmul.f32 %v1334, %v2334
    %v2615 = vmul.f32 %v1335, %v2336
    %v2616 = vmul.f32 %v1336, %v2338
    %v2617 = vmul.f32 %v1337, %v2340
    %v2618 = vmul.f32 %v1338, %v2342
    %v2619 = vmul.f32 %v1339, %v2344
    %v2620 = vmul.f32 %v1340, %v2346
    %v2621 = vmul.f32 %v1341, %v2348
    %v2622 = vmul.f32 %v1342, %v2350
    %v2623 = vmul.f32 %v1343, %v2352
    %v2624 = vmul.f32 %v1344, %v2354
    %v2625 = vmul.f32 %v1345, %v2356
    %v2626 = vmul.f32 %v1346, %v2358
    %v2627 = vmul.f32 %v1347, %v2360
    %v2628 = vmul.f32 %v1348, %v2362
    %v2629 = vmul.f32 %v1349, %v2364
    %v2630 = vmul.f32 %v1350, %v2366
    %v2631 = vmul.f32 %v1351, %v2368
    %v2632 = vmul.f32 %v1352, %v2370
    %v2633 = vmul.f32 %v1353, %v2372
    %v2634 = vmul.f32 %v1354, %v2374
    %v2635 = vmul.f32 %v1355, %v2376
    %v2636 = vmul.f32 %v1356, %v2378
    %v2637 = vmul.f32 %v1357, %v2380
    %v2638 = vmul.f32 %v1358, %v2382
    %v2639 = vadd.f32 %v2383, %v335
    %v2640 = vadd.f32 %v2384, %v336
    %v2641 = vadd.f32 %v2385, %v337
    %v2642 = vadd.f32 %v2386, %v338
    %v2643 = vadd.f32 %v2387, %v339
    %v2644 = vadd.f32 %v2388, %v340
    %v2645 = vadd.f32 %v2389, %v341
    %v2646 = vadd.f32 %v2390, %v342
    %v2647 = vadd.f32 %v2391, %v343
    %v2648 = vadd.f32 %v2392, %v344
    %v2649 = vadd.f32 %v2393, %v345
    %v2650 = vadd.f32 %v2394, %v346
    %v2651 = vadd.f32 %v2395, %v347
    %v2652 = vadd.f32 %v2396, %v348
    %v2653 = vadd.f32 %v2397, %v349
    %v2654 = vadd.f32 %v2398, %v350
    %v2655 = vadd.f32 %v2399, %v351
    %v2656 = vadd.f32 %v2400, %v352
    %v2657 = vadd.f32 %v2401, %v353
    %v2658 = vadd.f32 %v2402, %v354
    %v2659 = vadd.f32 %v2403, %v355
    %v2660 = vadd.f32 %v2404, %v356
    %v2661 = vadd.f32 %v2405, %v357
    %v2662 = vadd.f32 %v2406, %v358
    %v2663 = vadd.f32 %v2407, %v359
    %v2664 = vadd.f32 %v2408, %v360
    %v2665 = vadd.f32 %v2409, %v361
    %v2666 = vadd.f32 %v2410, %v362
    %v2667 = vadd.f32 %v2411, %v363
    %v2668 = vadd.f32 %v2412, %v364
    %v2669 = vadd.f32 %v2413, %v365
    %v2670 = vadd.f32 %v2414, %v366
    %v2671 = vadd.f32 %v2415, %v367
    %v2672 = vadd.f32 %v2416, %v368
    %v2673 = vadd.f32 %v2417, %v369
    %v2674 = vadd.f32 %v2418, %v370
    %v2675 = vadd.f32 %v2419, %v371
    %v2676 = vadd.f32 %v2420, %v372
    %v2677 = vadd.f32 %v2421, %v373
    %v2678 = vadd.f32 %v2422, %v374
    %v2679 = vadd.f32 %v2423, %v375
    %v2680 = vadd.f32 %v2424, %v376
    %v2681 = vadd.f32 %v2425, %v377
    %v2682 = vadd.f32 %v2426, %v378
    %v2683 = vadd.f32 %v2427, %v379
    %v2684 = vadd.f32 %v2428, %v380
    %v2685 = vadd.f32 %v2429, %v381
    %v2686 = vadd.f32 %v2430, %v382
    %v2687 = vadd.f32 %v2431, %v383
    %v2688 = vadd.f32 %v2432, %v384
    %v2689 = vadd.f32 %v2433, %v385
    %v2690 = vadd.f32 %v2434, %v386
    %v2691 = vadd.f32 %v2435, %v387
    %v2692 = vadd.f32 %v2436, %v388
    %v2693 = vadd.f32 %v2437, %v389
    %v2694 = vadd.f32 %v2438, %v390
    %v2695 = vadd.f32 %v2439, %v391
    %v2696 = vadd.f32 %v2440, %v392
    %v2697 = vadd.f32 %v2441, %v393
    %v2698 = vadd.f32 %v2442, %v394
    %v2699 = vadd.f32 %v2443, %v395
    %v2700 = vadd.f32 %v2444, %v396
    %v2701 = vadd.f32 %v2445, %v397
    %v2702 = vadd.f32 %v2446, %v398
    %v2703 = vadd.f32 %v2447, %v399
    %v2704 = vadd.f32 %v2448, %v400
    %v2705 = vadd.f32 %v2449, %v401
    %v2706 = vadd.f32 %v2450, %v402
    %v2707 = vadd.f32 %v2451, %v403
    %v2708 = vadd.f32 %v2452, %v404
    %v2709 = vadd.f32 %v2453, %v405
    %v2710 = vadd.f32 %v2454, %v406
    %v2711 = vadd.f32 %v2455, %v407
    %v2712 = vadd.f32 %v2456, %v408
    %v2713 = vadd.f32 %v2457, %v409
    %v2714 = vadd.f32 %v2458, %v410
    %v2715 = vadd.f32 %v2459, %v411
    %v2716 = vadd.f32 %v2460, %v412
    %v2717 = vadd.f32 %v2461, %v413
    %v2718 = vadd.f32 %v2462, %v414
    %v2719 = vadd.f32 %v2463, %v415
    %v2720 = vadd.f32 %v2464, %v416
    %v2721 = vadd.f32 %v2465, %v417
    %v2722 = vadd.f32 %v2466, %v418
    %v2723 = vadd.f32 %v2467, %v419
    %v2724 = vadd.f32 %v2468, %v420
    %v2725 = vadd.f32 %v2469, %v421
    %v2726 = vadd.f32 %v2470, %v422
    %v2727 = vadd.f32 %v2471, %v423
    %v2728 = vadd.f32 %v2472, %v424
    %v2729 = vadd.f32 %v2473, %v425
    %v2730 = vadd.f32 %v2474, %v426
    %v2731 = vadd.f32 %v2475, %v427
    %v2732 = vadd.f32 %v2476, %v428
    %v2733 = vadd.f32 %v2477, %v429
    %v2734 = vadd.f32 %v2478, %v430
    %v2735 = vadd.f32 %v2479, %v431
    %v2736 = vadd.f32 %v2480, %v432
    %v2737 = vadd.f32 %v2481, %v433
    %v2738 = vadd.f32 %v2482, %v434
    %v2739 = vadd.f32 %v2483, %v435
    %v2740 = vadd.f32 %v2484, %v436
    %v2741 = vadd.f32 %v2485, %v437
    %v2742 = vadd.f32 %v2486, %v438
    %v2743 = vadd.f32 %v2487, %v439
    %v2744 = vadd.f32 %v2488, %v440
    %v2745 = vadd.f32 %v2489, %v441
    %v2746 = vadd.f32 %v2490, %v442
    %v2747 = vadd.f32 %v2491, %v443
    %v2748 = vadd.f32 %v2492, %v444
    %v2749 = vadd.f32 %v2493, %v445
    %v2750 = vadd.f32 %v2494, %v446
    %v2751 = vadd.f32 %v2495, %v447
    %v2752 = vadd.f32 %v2496, %v448
    %v2753 = vadd.f32 %v2497, %v449
    %v2754 = vadd.f32 %v2498, %v450
    %v2755 = vadd.f32 %v2499, %v451
    %v2756 = vadd.f32 %v2500, %v452
    %v2757 = vadd.f32 %v2501, %v453
    %v2758 = vadd.f32 %v2502, %v454
    %v2759 = vadd.f32 %v2503, %v455
    %v2760 = vadd.f32 %v2504, %v456
    %v2761 = vadd.f32 %v2505, %v457
    %v2762 = vadd.f32 %v2506, %v458
    %v2763 = vadd.f32 %v2507, %v459
    %v2764 = vadd.f32 %v2508, %v460
    %v2765 = vadd.f32 %v2509, %v461
    %v2766 = vadd.f32 %v2510, %v462
    %v2767 = vadd.f32 %v2511, %v463
    %v2768 = vadd.f32 %v2512, %v464
    %v2769 = vadd.f32 %v2513, %v465
    %v2770 = vadd.f32 %v2514, %v466
    %v2771 = vadd.f32 %v2515, %v467
    %v2772 = vadd.f32 %v2516, %v468
    %v2773 = vadd.f32 %v2517, %v469
    %v2774 = vadd.f32 %v2518, %v470
    %v2775 = vadd.f32 %v2519, %v471
    %v2776 = vadd.f32 %v2520, %v472
    %v2777 = vadd.f32 %v2521, %v473
    %v2778 = vadd.f32 %v2522, %v474
    %v2779 = vadd.f32 %v2523, %v475
    %v2780 = vadd.f32 %v2524, %v476
    %v2781 = vadd.f32 %v2525, %v477
    %v2782 = vadd.f32 %v2526, %v478
    %v2783 = vadd.f32 %v2527, %v479
    %v2784 = vadd.f32 %v2528, %v480
    %v2785 = vadd.f32 %v2529, %v481
    %v2786 = vadd.f32 %v2530, %v482
    %v2787 = vadd.f32 %v2531, %v483
    %v2788 = vadd.f32 %v2532, %v484
    %v2789 = vadd.f32 %v2533, %v485
    %v2790 = vadd.f32 %v2534, %v486
    %v2791 = vadd.f32 %v2535, %v487
    %v2792 = vadd.f32 %v2536, %v488
    %v2793 = vadd.f32 %v2537, %v489
    %v2794 = vadd.f32 %v2538, %v490
    %v2795 = vadd.f32 %v2539, %v491
    %v2796 = vadd.f32 %v2540, %v492
    %v2797 = vadd.f32 %v2541, %v493
    %v2798 = vadd.f32 %v2542, %v494
    %v2799 = vadd.f32 %v2543, %v495
    %v2800 = vadd.f32 %v2544, %v496
    %v2801 = vadd.f32 %v2545, %v497
    %v2802 = vadd.f32 %v2546, %v498
    %v2803 = vadd.f32 %v2547, %v499
    %v2804 = vadd.f32 %v2548, %v500
    %v2805 = vadd.f32 %v2549, %v501
    %v2806 = vadd.f32 %v2550, %v502
    %v2807 = vadd.f32 %v2551, %v503
    %v2808 = vadd.f32 %v2552, %v504
    %v2809 = vadd.f32 %v2553, %v505
    %v2810 = vadd.f32 %v2554, %v506
    %v2811 = vadd.f32 %v2555, %v507
    %v2812 = vadd.f32 %v2556, %v508
    %v2813 = vadd.f32 %v2557, %v509
    %v2814 = vadd.f32 %v2558, %v510
    %v2815 = vadd.f32 %v2559, %v511
    %v2816 = vadd.f32 %v2560, %v512
    %v2817 = vadd.f32 %v2561, %v513
    %v2818 = vadd.f32 %v2562, %v514
    %v2819 = vadd.f32 %v2563, %v515
    %v2820 = vadd.f32 %v2564, %v516
    %v2821 = vadd.f32 %v2565, %v517
    %v2822 = vadd.f32 %v2566, %v518
    %v2823 = vadd.f32 %v2567, %v519
    %v2824 = vadd.f32 %v2568, %v520
    %v2825 = vadd.f32 %v2569, %v521
    %v2826 = vadd.f32 %v2570, %v522
    %v2827 = vadd.f32 %v2571, %v523
    %v2828 = vadd.f32 %v2572, %v524
    %v2829 = vadd.f32 %v2573, %v525
    %v2830 = vadd.f32 %v2574, %v526
    %v2831 = vadd.f32 %v2575, %v527
    %v2832 = vadd.f32 %v2576, %v528
    %v2833 = vadd.f32 %v2577, %v529
    %v2834 = vadd.f32 %v2578, %v530
    %v2835 = vadd.f32 %v2579, %v531
    %v2836 = vadd.f32 %v2580, %v532
    %v2837 = vadd.f32 %v2581, %v533
    %v2838 = vadd.f32 %v2582, %v534
    %v2839 = vadd.f32 %v2583, %v535
    %v2840 = vadd.f32 %v2584, %v536
    %v2841 = vadd.f32 %v2585, %v537
    %v2842 = vadd.f32 %v2586, %v538
    %v2843 = vadd.f32 %v2587, %v539
    %v2844 = vadd.f32 %v2588, %v540
    %v2845 = vadd.f32 %v2589, %v541
    %v2846 = vadd.f32 %v2590, %v542
    %v2847 = vadd.f32 %v2591, %v543
    %v2848 = vadd.f32 %v2592, %v544
    %v2849 = vadd.f32 %v2593, %v545
    %v2850 = vadd.f32 %v2594, %v546
    %v2851 = vadd.f32 %v2595, %v547
    %v2852 = vadd.f32 %v2596, %v548
    %v2853 = vadd.f32 %v2597, %v549
    %v2854 = vadd.f32 %v2598, %v550
    %v2855 = vadd.f32 %v2599, %v551
    %v2856 = vadd.f32 %v2600, %v552
    %v2857 = vadd.f32 %v2601, %v553
    %v2858 = vadd.f32 %v2602, %v554
    %v2859 = vadd.f32 %v2603, %v555
    %v2860 = vadd.f32 %v2604, %v556
    %v2861 = vadd.f32 %v2605, %v557
    %v2862 = vadd.f32 %v2606, %v558
    %v2863 = vadd.f32 %v2607, %v559
    %v2864 = vadd.f32 %v2608, %v560
    %v2865 = vadd.f32 %v2609, %v561
    %v2866 = vadd.f32 %v2610, %v562
    %v2867 = vadd.f32 %v2611, %v563
    %v2868 = vadd.f32 %v2612, %v564
    %v2869 = vadd.f32 %v2613, %v565
    %v2870 = vadd.f32 %v2614, %v566
    %v2871 = vadd.f32 %v2615, %v567
    %v2872 = vadd.f32 %v2616, %v568
    %v2873 = vadd.f32 %v2617, %v569
    %v2874 = vadd.f32 %v2618, %v570
    %v2875 = vadd.f32 %v2619, %v571
    %v2876 = vadd.f32 %v2620, %v572
    %v2877 = vadd.f32 %v2621, %v573
    %v2878 = vadd.f32 %v2622, %v574
    %v2879 = vadd.f32 %v2623, %v575
    %v2880 = vadd.f32 %v2624, %v576
    %v2881 = vadd.f32 %v2625, %v577
    %v2882 = vadd.f32 %v2626, %v578
    %v2883 = vadd.f32 %v2627, %v579
    %v2884 = vadd.f32 %v2628, %v580
    %v2885 = vadd.f32 %v2629, %v581
    %v2886 = vadd.f32 %v2630, %v582
    %v2887 = vadd.f32 %v2631, %v583
    %v2888 = vadd.f32 %v2632, %v584
    %v2889 = vadd.f32 %v2633, %v585
    %v2890 = vadd.f32 %v2634, %v586
    %v2891 = vadd.f32 %v2635, %v587
    %v2892 = vadd.f32 %v2636, %v588
    %v2893 = vadd.f32 %v2637, %v589
    %v2894 = vadd.f32 %v2638, %v590
    %v2895 = vadd.f32 %v2639, %v2640
    %v2896 = vadd.f32 %v2895, %v2641
    %v2897 = vadd.f32 %v2896, %v2642
    %v2898 = vadd.f32 %v2897, %v2643
    %v2899 = vadd.f32 %v2898, %v2644
    %v2900 = vadd.f32 %v2899, %v2645
    %v2901 = vadd.f32 %v2900, %v2646
    %v2902 = vadd.f32 %v2901, %v2647
    %v2903 = vadd.f32 %v2902, %v2648
    %v2904 = vadd.f32 %v2903, %v2649
    %v2905 = vadd.f32 %v2904, %v2650
    %v2906 = vadd.f32 %v2905, %v2651
    %v2907 = vadd.f32 %v2906, %v2652
    %v2908 = vadd.f32 %v2907, %v2653
    %v2909 = vadd.f32 %v2908, %v2654
    %v2910 = vadd.f32 %v2909, %v2655
    %v2911 = vadd.f32 %v2910, %v2656
    %v2912 = vadd.f32 %v2911, %v2657
    %v2913 = vadd.f32 %v2912, %v2658
    %v2914 = vadd.f32 %v2913, %v2659
    %v2915 = vadd.f32 %v2914, %v2660
    %v2916 = vadd.f32 %v2915, %v2661
    %v2917 = vadd.f32 %v2916, %v2662
    %v2918 = vadd.f32 %v2917, %v2663
    %v2919 = vadd.f32 %v2918, %v2664
    %v2920 = vadd.f32 %v2919, %v2665
    %v2921 = vadd.f32 %v2920, %v2666
    %v2922 = vadd.f32 %v2921, %v2667
    %v2923 = vadd.f32 %v2922, %v2668
    %v2924 = vadd.f32 %v2923, %v2669
    %v2925 = vadd.f32 %v2924, %v2670
    %v2926 = vadd.f32 %v2925, %v2671
    %v2927 = vadd.f32 %v2926, %v2672
    %v2928 = vadd.f32 %v2927, %v2673
    %v2929 = vadd.f32 %v2928, %v2674
    %v2930 = vadd.f32 %v2929, %v2675
    %v2931 = vadd.f32 %v2930, %v2676
    %v2932 = vadd.f32 %v2931, %v2677
    %v2933 = vadd.f32 %v2932, %v2678
    %v2934 = vadd.f32 %v2933, %v2679
    %v2935 = vadd.f32 %v2934, %v2680
    %v2936 = vadd.f32 %v2935, %v2681
    %v2937 = vadd.f32 %v2936, %v2682
    %v2938 = vadd.f32 %v2937, %v2683
    %v2939 = vadd.f32 %v2938, %v2684
    %v2940 = vadd.f32 %v2939, %v2685
    %v2941 = vadd.f32 %v2940, %v2686
    %v2942 = vadd.f32 %v2941, %v2687
    %v2943 = vadd.f32 %v2942, %v2688
    %v2944 = vadd.f32 %v2943, %v2689
    %v2945 = vadd.f32 %v2944, %v2690
    %v2946 = vadd.f32 %v2945, %v2691
    %v2947 = vadd.f32 %v2946, %v2692
    %v2948 = vadd.f32 %v2947, %v2693
    %v2949 = vadd.f32 %v2948, %v2694
    %v2950 = vadd.f32 %v2949, %v2695
    %v2951 = vadd.f32 %v2950, %v2696
    %v2952 = vadd.f32 %v2951, %v2697
    %v2953 = vadd.f32 %v2952, %v2698
    %v2954 = vadd.f32 %v2953, %v2699
    %v2955 = vadd.f32 %v2954, %v2700
    %v2956 = vadd.f32 %v2955, %v2701
    %v2957 = vadd.f32 %v2956, %v2702
    %v2958 = vadd.f32 %v2957, %v2703
    %v2959 = vadd.f32 %v2958, %v2704
    %v2960 = vadd.f32 %v2959, %v2705
    %v2961 = vadd.f32 %v2960, %v2706
    %v2962 = vadd.f32 %v2961, %v2707
    %v2963 = vadd.f32 %v2962, %v2708
    %v2964 = vadd.f32 %v2963, %v2709
    %v2965 = vadd.f32 %v2964, %v2710
    %v2966 = vadd.f32 %v2965, %v2711
    %v2967 = vadd.f32 %v2966, %v2712
    %v2968 = vadd.f32 %v2967, %v2713
    %v2969 = vadd.f32 %v2968, %v2714
    %v2970 = vadd.f32 %v2969, %v2715
    %v2971 = vadd.f32 %v2970, %v2716
    %v2972 = vadd.f32 %v2971, %v2717
    %v2973 = vadd.f32 %v2972, %v2718
    %v2974 = vadd.f32 %v2973, %v2719
    %v2975 = vadd.f32 %v2974, %v2720
    %v2976 = vadd.f32 %v2975, %v2721
    %v2977 = vadd.f32 %v2976, %v2722
    %v2978 = vadd.f32 %v2977, %v2723
    %v2979 = vadd.f32 %v2978, %v2724
    %v2980 = vadd.f32 %v2979, %v2725
    %v2981 = vadd.f32 %v2980, %v2726
    %v2982 = vadd.f32 %v2981, %v2727
    %v2983 = vadd.f32 %v2982, %v2728
    %v2984 = vadd.f32 %v2983, %v2729
    %v2985 = vadd.f32 %v2984, %v2730
    %v2986 = vadd.f32 %v2985, %v2731
    %v2987 = vadd.f32 %v2986, %v2732
    %v2988 = vadd.f32 %v2987, %v2733
    %v2989 = vadd.f32 %v2988, %v2734
    %v2990 = vadd.f32 %v2989, %v2735
    %v2991 = vadd.f32 %v2990, %v2736
    %v2992 = vadd.f32 %v2991, %v2737
    %v2993 = vadd.f32 %v2992, %v2738
    %v2994 = vadd.f32 %v2993, %v2739
    %v2995 = vadd.f32 %v2994, %v2740
    %v2996 = vadd.f32 %v2995, %v2741
    %v2997 = vadd.f32 %v2996, %v2742
    %v2998 = vadd.f32 %v2997, %v2743
    %v2999 = vadd.f32 %v2998, %v2744
    %v3000 = vadd.f32 %v2999, %v2745
    %v3001 = vadd.f32 %v3000, %v2746
    %v3002 = vadd.f32 %v3001, %v2747
    %v3003 = vadd.f32 %v3002, %v2748
    %v3004 = vadd.f32 %v3003, %v2749
    %v3005 = vadd.f32 %v3004, %v2750
    %v3006 = vadd.f32 %v3005, %v2751
    %v3007 = vadd.f32 %v3006, %v2752
    %v3008 = vadd.f32 %v3007, %v2753
    %v3009 = vadd.f32 %v3008, %v2754
    %v3010 = vadd.f32 %v3009, %v2755
    %v3011 = vadd.f32 %v3010, %v2756
    %v3012 = vadd.f32 %v3011, %v2757
    %v3013 = vadd.f32 %v3012, %v2758
    %v3014 = vadd.f32 %v3013, %v2759
    %v3015 = vadd.f32 %v3014, %v2760
    %v3016 = vadd.f32 %v3015, %v2761
    %v3017 = vadd.f32 %v3016, %v2762
    %v3018 = vadd.f32 %v3017, %v2763
    %v3019 = vadd.f32 %v3018, %v2764
    %v3020 = vadd.f32 %v3019, %v2765
    %v3021 = vadd.f32 %v3020, %v2766
    %v3022 = vadd.f32 %v3021, %v2767
    %v3023 = vadd.f32 %v3022, %v2768
    %v3024 = vadd.f32 %v3023, %v2769
    %v3025 = vadd.f32 %v3024, %v2770
    %v3026 = vadd.f32 %v3025, %v2771
    %v3027 = vadd.f32 %v3026, %v2772
    %v3028 = vadd.f32 %v3027, %v2773
    %v3029 = vadd.f32 %v3028, %v2774
    %v3030 = vadd.f32 %v3029, %v2775
    %v3031 = vadd.f32 %v3030, %v2776
    %v3032 = vadd.f32 %v3031, %v2777
    %v3033 = vadd.f32 %v3032, %v2778
    %v3034 = vadd.f32 %v3033, %v2779
    %v3035 = vadd.f32 %v3034, %v2780
    %v3036 = vadd.f32 %v3035, %v2781
    %v3037 = vadd.f32 %v3036, %v2782
    %v3038 = vadd.f32 %v3037, %v2783
    %v3039 = vadd.f32 %v3038, %v2784
    %v3040 = vadd.f32 %v3039, %v2785
    %v3041 = vadd.f32 %v3040, %v2786
    %v3042 = vadd.f32 %v3041, %v2787
    %v3043 = vadd.f32 %v3042, %v2788
    %v3044 = vadd.f32 %v3043, %v2789
    %v3045 = vadd.f32 %v3044, %v2790
    %v3046 = vadd.f32 %v3045, %v2791
    %v3047 = vadd.f32 %v3046, %v2792
    %v3048 = vadd.f32 %v3047, %v2793
    %v3049 = vadd.f32 %v3048, %v2794
    %v3050 = vadd.f32 %v3049, %v2795
    %v3051 = vadd.f32 %v3050, %v2796
    %v3052 = vadd.f32 %v3051, %v2797
    %v3053 = vadd.f32 %v3052, %v2798
    %v3054 = vadd.f32 %v3053, %v2799
    %v3055 = vadd.f32 %v3054, %v2800
    %v3056 = vadd.f32 %v3055, %v2801
    %v3057 = vadd.f32 %v3056, %v2802
    %v3058 = vadd.f32 %v3057, %v2803
    %v3059 = vadd.f32 %v3058, %v2804
    %v3060 = vadd.f32 %v3059, %v2805
    %v3061 = vadd.f32 %v3060, %v2806
    %v3062 = vadd.f32 %v3061, %v2807
    %v3063 = vadd.f32 %v3062, %v2808
    %v3064 = vadd.f32 %v3063, %v2809
    %v3065 = vadd.f32 %v3064, %v2810
    %v3066 = vadd.f32 %v3065, %v2811
    %v3067 = vadd.f32 %v3066, %v2812
    %v3068 = vadd.f32 %v3067, %v2813
    %v3069 = vadd.f32 %v3068, %v2814
    %v3070 = vadd.f32 %v3069, %v2815
    %v3071 = vadd.f32 %v3070, %v2816
    %v3072 = vadd.f32 %v3071, %v2817
    %v3073 = vadd.f32 %v3072, %v2818
    %v3074 = vadd.f32 %v3073, %v2819
    %v3075 = vadd.f32 %v3074, %v2820
    %v3076 = vadd.f32 %v3075, %v2821
    %v3077 = vadd.f32 %v3076, %v2822
    %v3078 = vadd.f32 %v3077, %v2823
    %v3079 = vadd.f32 %v3078, %v2824
    %v3080 = vadd.f32 %v3079, %v2825
    %v3081 = vadd.f32 %v3080, %v2826
    %v3082 = vadd.f32 %v3081, %v2827
    %v3083 = vadd.f32 %v3082, %v2828
    %v3084 = vadd.f32 %v3083, %v2829
    %v3085 = vadd.f32 %v3084, %v2830
    %v3086 = vadd.f32 %v3085, %v2831
    %v3087 = vadd.f32 %v3086, %v2832
    %v3088 = vadd.f32 %v3087, %v2833
    %v3089 = vadd.f32 %v3088, %v2834
    %v3090 = vadd.f32 %v3089, %v2835
    %v3091 = vadd.f32 %v3090, %v2836
    %v3092 = vadd.f32 %v3091, %v2837
    %v3093 = vadd.f32 %v3092, %v2838
    %v3094 = vadd.f32 %v3093, %v2839
    %v3095 = vadd.f32 %v3094, %v2840
    %v3096 = vadd.f32 %v3095, %v2841
    %v3097 = vadd.f32 %v3096, %v2842
    %v3098 = vadd.f32 %v3097, %v2843
    %v3099 = vadd.f32 %v3098, %v2844
    %v3100 = vadd.f32 %v3099, %v2845
    %v3101 = vadd.f32 %v3100, %v2846
    %v3102 = vadd.f32 %v3101, %v2847
    %v3103 = vadd.f32 %v3102, %v2848
    %v3104 = vadd.f32 %v3103, %v2849
    %v3105 = vadd.f32 %v3104, %v2850
    %v3106 = vadd.f32 %v3105, %v2851
    %v3107 = vadd.f32 %v3106, %v2852
    %v3108 = vadd.f32 %v3107, %v2853
    %v3109 = vadd.f32 %v3108, %v2854
    %v3110 = vadd.f32 %v3109, %v2855
    %v3111 = vadd.f32 %v3110, %v2856
    %v3112 = vadd.f32 %v3111, %v2857
    %v3113 = vadd.f32 %v3112, %v2858
    %v3114 = vadd.f32 %v3113, %v2859
    %v3115 = vadd.f32 %v3114, %v2860
    %v3116 = vadd.f32 %v3115, %v2861
    %v3117 = vadd.f32 %v3116, %v2862
    %v3118 = vadd.f32 %v3117, %v2863
    %v3119 = vadd.f32 %v3118, %v2864
    %v3120 = vadd.f32 %v3119, %v2865
    %v3121 = vadd.f32 %v3120, %v2866
    %v3122 = vadd.f32 %v3121, %v2867
    %v3123 = vadd.f32 %v3122, %v2868
    %v3124 = vadd.f32 %v3123, %v2869
    %v3125 = vadd.f32 %v3124, %v2870
    %v3126 = vadd.f32 %v3125, %v2871
    %v3127 = vadd.f32 %v3126, %v2872
    %v3128 = vadd.f32 %v3127, %v2873
    %v3129 = vadd.f32 %v3128, %v2874
    %v3130 = vadd.f32 %v3129, %v2875
    %v3131 = vadd.f32 %v3130, %v2876
    %v3132 = vadd.f32 %v3131, %v2877
    %v3133 = vadd.f32 %v3132, %v2878
    %v3134 = vadd.f32 %v3133, %v2879
    %v3135 = vadd.f32 %v3134, %v2880
    %v3136 = vadd.f32 %v3135, %v2881
    %v3137 = vadd.f32 %v3136, %v2882
    %v3138 = vadd.f32 %v3137, %v2883
    %v3139 = vadd.f32 %v3138, %v2884
    %v3140 = vadd.f32 %v3139, %v2885
    %v3141 = vadd.f32 %v3140, %v2886
    %v3142 = vadd.f32 %v3141, %v2887
    %v3143 = vadd.f32 %v3142, %v2888
    %v3144 = vadd.f32 %v3143, %v2889
    %v3145 = vadd.f32 %v3144, %v2890
    %v3146 = vadd.f32 %v3145, %v2891
    %v3147 = vadd.f32 %v3146, %v2892
    %v3148 = vadd.f32 %v3147, %v2893
    %v3149 = vadd.f32 %v3148, %v2894
    %v3150 = vld [vmem:[#allocation8] sm:$0xff]
    %v3151 = vadd.f32 %v3150, %v3149
    %3152 = vst [vmem:[#allocation8] sm:$0xff] %v3151
    // Predicated region
    $region30: #{tpu_custom_call.1} parent=1 // pred_check
      _
    $region31: #{tpu_custom_call.1} parent=1 // pred_check_branch
      %3154 = sbr.rel (0) target = $region33
    $region32: #{tpu_custom_call.1} parent=1 // pred_region
      %s3156 = ssub.s32 128, 128
      %3157 = vsyncadd [#allocation4], %s3156
      %s3159 = sshll.u32 [#allocation8], 4
      %s3160 = int_to_ptr.vmem [resolvable:$true] %s3159
      %3162 = dma.vmem_to_hbm [thread:$0]  %s3160, 128, %s3, [#allocation4]
    $region33: #{tpu_custom_call.1} parent=1 // pred_fallthru
      _
    // Predicated region
    $region34: #{tpu_custom_call.1} parent=1 // pred_check
      _
    $region35: #{tpu_custom_call.1} parent=1 // pred_check_branch
      %3164 = sbr.rel (0) target = $region37
    $region36: #{tpu_custom_call.1} parent=1 // pred_region
      %3165 = dma.done [#allocation4], 128
    $region37: #{tpu_custom_call.1} parent=1 // pred_fallthru
      _
    %3166 = vsyncpa [#allocation3], 1
    %3167 = vsyncpa [#allocation6], 1
    %3168 = vsyncpa [#allocation4], 1

</llo_original>
